<compile_context>
chip_gen: v7x
topology: tpu7x:2x2x1
jax: 0.10.0
libtpu: 0.0.40
codegen_flags: <defaults>
</compile_context>

<pallas_src>
import functools

import numpy as np
import jax
import jax.numpy as jnp
from jax.experimental import pallas as pl
from jax.experimental.pallas import tpu as pltpu

VMEM = pl.BlockSpec(memory_space=pltpu.MemorySpace.VMEM)
BN_EPS = 1e-5

# Row layout of the packed per-lane parameter array `vecs` (f32, (14, 192)):
#  0: conv1 bias (112)   1: conv2 bias (192)   2-5: conv3..6 bias (96)
#  6,7: bn1 gamma/beta   8,9: bn2 gamma/beta   10,11: bn3 gamma/beta
# 12: fc1 bias (64)     13: fc2 bias (2)


# ------------------------------- fused kernel -------------------------------

def _deepnet_kernel(xcol_ref, w1_ref, w2_ref, w36_ref, sel_ref, wfc1_ref,
                    wfc2_ref, vecs_ref, out_ref,
                    a1_ref, a2_ref, ba_ref, bb_ref, *, n):
  """Whole DeepNet forward for a batch of n images, fully VMEM-resident."""
  f32 = jnp.float32
  bf16 = jnp.bfloat16

  def vec(row, width):
    # One packed per-lane parameter row (conv bias / bn gamma,beta / fc bias).
    return vecs_ref[row:row + 1, :width]                  # (1, width) f32

  def pad_rows(v):
    # Wrap the 6 valid spatial rows with the zero padding ring rows so the
    # whole (8n, 96) slab is written with one aligned, row/lane-dense store.
    z = jnp.zeros((n, 96), f32)
    return jnp.concatenate([z, v, z], axis=0)

  def batchnorm(x, gamma_row, beta_row):
    # Training-mode BatchNorm (batch statistics, biased variance), f32 math.
    # TODO(synk): running_mean/running_var are not tracked (eval mode absent).
    inv_count = 1.0 / (36.0 * n)

    def chan_sum(v):                                      # (6n,96) -> (1,16)
      s = jnp.sum(v, axis=0, keepdims=True)               # (1, 96)
      t = s[:, 0:16]
      for w in range(1, 6):
        t = t + s[:, w * 16:(w + 1) * 16]
      return t

    mean = jnp.tile(chan_sum(x) * inv_count, (1, 6))      # (1, 96)
    cen = x - mean
    var = jnp.tile(chan_sum(cen * cen) * inv_count, (1, 6))
    inv = jax.lax.rsqrt(var + BN_EPS)
    return cen * (inv * vec(gamma_row, 96)) + vec(beta_row, 96)

  # ---- conv1 (2->8, pad=1) + ReLU: single im2col matmul, K = 84.
  c1 = jnp.dot(xcol_ref[...], w1_ref[...], preferred_element_type=f32)
  a1_ref[...] = jnp.maximum(c1 + vec(0, 112), 0.0).astype(bf16)

  # ---- conv2 (8->16, valid) + ReLU: 3 dy-fused block matmuls, K = 112.
  acc = vec(1, 192)
  for dy in range(3):
    acc = acc + jnp.dot(a1_ref[pl.ds(dy * n, 12 * n), :], w2_ref[dy],
                        preferred_element_type=f32)
  a2_ref[...] = jnp.maximum(acc, 0.0).astype(bf16)

  # ---- 2x2 / stride-2 max pool: vertical max over row pairs, horizontal max
  # via two exact 0/1 lane-selection matmuls (no masked scatter stores).
  pooled = []
  for hp in range(6):
    vmax = jnp.maximum(a2_ref[pl.ds((2 * hp) * n, n), :],
                       a2_ref[pl.ds((2 * hp + 1) * n, n), :])   # (n, 192)
    even = jnp.dot(vmax, sel_ref[0], preferred_element_type=f32)
    odd = jnp.dot(vmax, sel_ref[1], preferred_element_type=f32)
    pooled.append(jnp.maximum(even, odd))                       # (n, 96)
  pooled = jnp.concatenate(pooled, axis=0)                      # (6n, 96) f32

  # ---- bn1 (after pool), written to ping-pong slab A with its zero ring rows.
  ba_ref[...] = pad_rows(batchnorm(pooled, 6, 7)).astype(bf16)

  # ---- conv3..conv6 (pad=1, 16->16) + ReLU (+bn2/bn3): 3 K=96 dots each.
  # Horizontal zero padding is implicit in the block-tridiagonal weights;
  # vertical padding is carried by the zero ring rows of the slabs.
  def conv6x6(src_ref, dst_ref, idx, bn_rows=None):
    acc = vec(2 + idx, 96)
    for dy in range(3):
      acc = acc + jnp.dot(src_ref[pl.ds(dy * n, 6 * n), :],
                          w36_ref[3 * idx + dy], preferred_element_type=f32)
    out = jnp.maximum(acc, 0.0)
    if bn_rows is not None:
      out = batchnorm(out, bn_rows[0], bn_rows[1])
    dst_ref[...] = pad_rows(out).astype(bf16)

  conv6x6(ba_ref, bb_ref, 0)                      # conv3 + relu
  conv6x6(bb_ref, ba_ref, 1, bn_rows=(8, 9))      # conv4 + relu + bn2
  conv6x6(ba_ref, bb_ref, 2)                      # conv5 + relu
  conv6x6(bb_ref, ba_ref, 3, bn_rows=(10, 11))    # conv6 + relu + bn3

  # ---- fc1 (576->64) as 6 K=96 dots (one per spatial row) + ReLU, then fc2.
  acc = vec(12, 64)
  for h in range(6):
    acc = acc + jnp.dot(ba_ref[pl.ds((1 + h) * n, n), :], wfc1_ref[h],
                        preferred_element_type=f32)
  hidden = jnp.maximum(acc, 0.0)                              # (n, 64)
  out_ref[...] = (jnp.dot(hidden.astype(bf16), wfc2_ref[...],
                          preferred_element_type=f32) + vec(13, 2))


# --------------------------- wrapper-side layout -----------------------------

def _sel_matrix(win, wout, offset):
  """sel[dx, w_in, w_out] = 1 iff w_in == w_out + dx - offset (in range)."""
  s = np.zeros((3, win, wout), np.float32)
  for dx in range(3):
    for wo in range(wout):
      wi = wo + dx - offset
      if 0 <= wi < win:
        s[dx, wi, wo] = 1.0
  return s


def _block_weights(sel, w_hwio):
  """(3, Win*Ci, Wout*Co) block-tridiagonal matrices, one per dy."""
  b = jnp.einsum('xio,yxcf->yicof', jnp.asarray(sel), w_hwio)
  dy, wi, ci, wo, co = b.shape
  return b.reshape(dy, wi * ci, wo * co)


def _pool_selectors():
  """0/1 lane-selection matrices (2, 192, 96) for the horizontal 2x max."""
  se = np.zeros((192, 96), np.float32)
  so = np.zeros((192, 96), np.float32)
  for wp in range(6):
    for c in range(16):
      se[(2 * wp) * 16 + c, wp * 16 + c] = 1.0
      so[(2 * wp + 1) * 16 + c, wp * 16 + c] = 1.0
  return np.stack([se, so])


def deepnet_forward(params, x_nchw):
  n = x_nchw.shape[0]
  f32, bf16 = jnp.float32, jnp.bfloat16

  # Input: NCHW -> rows = h*n + img, lanes = w*2 + c, zero rows for vertical
  # padding, then a dy-im2col so conv1 is a single K=84 matmul.
  x = jnp.transpose(x_nchw, (2, 0, 3, 1)).astype(f32).reshape(14 * n, 28)
  x = jnp.pad(x, ((n, n), (0, 0)))                               # (16n, 28)
  xcol = jnp.concatenate([x[0:14 * n], x[n:15 * n], x[2 * n:16 * n]],
                         axis=1).astype(bf16)                    # (14n, 84)

  # Block-structured conv weights (built outside the kernel, tiny).
  w1 = _block_weights(_sel_matrix(14, 14, 1),
                      params["conv1"][0]).reshape(84, 112)        # im2col'd dy
  w2 = _block_weights(_sel_matrix(14, 12, 0), params["conv2"][0])  # (3,112,192)
  w36 = jnp.concatenate(
      [_block_weights(_sel_matrix(6, 6, 1), params[f"conv{i}"][0])
       for i in (3, 4, 5, 6)], axis=0)                             # (12,96,96)
  sel = jnp.asarray(_pool_selectors())                             # (2,192,96)

  # fc1 rows are in torch NCHW-flatten order (c*36 + h*6 + w); permute them to
  # (h, w*16 + c) so the kernel consumes the x-on-lanes activation directly.
  wf1, bf1 = params["fc1"]
  wf1 = jnp.transpose(wf1.reshape(16, 6, 6, 64), (1, 2, 0, 3)).reshape(6, 96, 64)
  wf2, bf2 = params["fc2"]

  # Pack all tiny per-channel vectors into one lane-padded f32 array.
  def lane_vec(v, reps, width=192):
    t = jnp.tile(v, reps)
    return jnp.pad(t, (0, width - t.shape[0]))

  vecs = jnp.stack([
      lane_vec(params["conv1"][1], 14),
      lane_vec(params["conv2"][1], 12),
      lane_vec(params["conv3"][1], 6),
      lane_vec(params["conv4"][1], 6),
      lane_vec(params["conv5"][1], 6),
      lane_vec(params["conv6"][1], 6),
      lane_vec(params["bn1"][0], 6), lane_vec(params["bn1"][1], 6),
      lane_vec(params["bn2"][0], 6), lane_vec(params["bn2"][1], 6),
      lane_vec(params["bn3"][0], 6), lane_vec(params["bn3"][1], 6),
      lane_vec(bf1, 1),
      lane_vec(bf2, 1),
  ]).astype(f32)                                                   # (14, 192)

  args = [xcol, w1.astype(bf16), w2.astype(bf16), w36.astype(bf16),
          sel.astype(bf16), wf1.astype(bf16), wf2.astype(bf16), vecs]

  scratch = [
      pltpu.VMEM((14 * n, 112), bf16),   # conv1 output (14x14, 8 ch)
      pltpu.VMEM((12 * n, 192), bf16),   # conv2 output (12x12, 16 ch)
      pltpu.VMEM((8 * n, 96), bf16),     # ping-pong slab A (6x6 + ring rows)
      pltpu.VMEM((8 * n, 96), bf16),     # ping-pong slab B
  ]

  return pl.pallas_call(
      functools.partial(_deepnet_kernel, n=n),
      out_shape=jax.ShapeDtypeStruct((n, 2), jnp.float32),
      in_specs=[VMEM] * len(args),
      out_specs=VMEM,
      scratch_shapes=scratch,
  )(*args)


# --------------------------------- params ------------------------------------

def init_params(key):
  """Deterministic PyTorch-style uniform(-1/sqrt(fan_in), 1/sqrt(fan_in)) init."""
  def conv_init(k, cin, cout, ksize=3):
    k1, k2 = jax.random.split(k)
    bound = 1.0 / jnp.sqrt(cin * ksize * ksize)
    w = jax.random.uniform(k1, (ksize, ksize, cin, cout), jnp.float32, -bound, bound)
    b = jax.random.uniform(k2, (cout,), jnp.float32, -bound, bound)
    return w, b

  def fc_init(k, fin, fout):
    k1, k2 = jax.random.split(k)
    bound = 1.0 / jnp.sqrt(fin)
    w = jax.random.uniform(k1, (fin, fout), jnp.float32, -bound, bound)
    b = jax.random.uniform(k2, (fout,), jnp.float32, -bound, bound)
    return w, b

  keys = jax.random.split(key, 8)
  params = {
      "conv1": conv_init(keys[0], 2, 8),
      "conv2": conv_init(keys[1], 8, 16),
      "conv3": conv_init(keys[2], 16, 16),
      "conv4": conv_init(keys[3], 16, 16),
      "conv5": conv_init(keys[4], 16, 16),
      "conv6": conv_init(keys[5], 16, 16),
      "fc1": fc_init(keys[6], 16 * 6 * 6, 64),   # rows in torch NCHW-flatten order
      "fc2": fc_init(keys[7], 64, 2),
  }
  for i in (1, 2, 3):
    params[f"bn{i}"] = (jnp.ones((16,), jnp.float32), jnp.zeros((16,), jnp.float32))
  return params


# ----------------------------------- main -------------------------------------

if __name__ == "__main__":
  key = jax.random.PRNGKey(0)
  pkey, xkey = jax.random.split(key)
  params = init_params(pkey)

  # fc1 = 16*6*6 implies a 14x14, 2-channel NCHW input.
  x = jax.random.normal(xkey, (2, 2, 14, 14), dtype=jnp.float32)

  logits = jax.jit(deepnet_forward)(params, x)
  logits = jax.block_until_ready(logits)
  assert logits.shape == (2, 2) and logits.dtype == jnp.float32
  print("KERNEL_OK")
</pallas_src>

<mosaic_0001>
module attributes {stable_mosaic.version = 11 : i64} {
  func.func @_deepnet_kernel(%arg0: memref<28x84xbf16, #tpu.memory_space<vmem>>, %arg1: memref<84x112xbf16, #tpu.memory_space<vmem>>, %arg2: memref<3x112x192xbf16, #tpu.memory_space<vmem>>, %arg3: memref<12x96x96xbf16, #tpu.memory_space<vmem>>, %arg4: memref<2x192x96xbf16, #tpu.memory_space<vmem>>, %arg5: memref<6x96x64xbf16, #tpu.memory_space<vmem>>, %arg6: memref<64x2xbf16, #tpu.memory_space<vmem>>, %arg7: memref<14x192xf32, #tpu.memory_space<vmem>>, %arg8: memref<2x2xf32, #tpu.memory_space<vmem>>, %arg9: memref<28x112xbf16, #tpu.memory_space<vmem>>, %arg10: memref<24x192xbf16, #tpu.memory_space<vmem>>, %arg11: memref<16x96xbf16, #tpu.memory_space<vmem>>, %arg12: memref<16x96xbf16, #tpu.memory_space<vmem>>) attributes {dimension_semantics = [], scalar_prefetch = 0 : i64, scratch_operands = 4 : i64, tpu.core_type = #tpu.core_type<tc>} {
    %c0 = arith.constant 0 : index
    %c0_0 = arith.constant 0 : index
    %0 = vector.load %arg0[%c0, %c0_0] : memref<28x84xbf16, #tpu.memory_space<vmem>>, vector<28x84xbf16>
    %c0_1 = arith.constant 0 : index
    %c0_2 = arith.constant 0 : index
    %1 = vector.load %arg1[%c0_1, %c0_2] : memref<84x112xbf16, #tpu.memory_space<vmem>>, vector<84x112xbf16>
    %cst = arith.constant dense<0.000000e+00> : vector<28x112xf32>
    %2 = tpu.matmul %0, %1, %cst {dimension_numbers = #tpu.dot_dimension_numbers<[1], [0], [0], [1], [0, 0, 1, 1], [], []>} : vector<28x84xbf16>, vector<84x112xbf16>, vector<28x112xf32> -> vector<28x112xf32>
    %c0_3 = arith.constant 0 : index
    %c0_4 = arith.constant 0 : index
    %3 = vector.load %arg7[%c0_3, %c0_4] : memref<14x192xf32, #tpu.memory_space<vmem>>, vector<1x112xf32>
    %4 = vector.broadcast %3 : vector<1x112xf32> to vector<28x112xf32>
    %5 = arith.addf %2, %4 : vector<28x112xf32>
    %cst_5 = arith.constant 0.000000e+00 : f32
    %6 = vector.broadcast %cst_5 : f32 to vector<28x112xf32>
    %7 = arith.maximumf %5, %6 : vector<28x112xf32>
    %8 = arith.truncf %7 : vector<28x112xf32> to vector<28x112xbf16>
    %c0_6 = arith.constant 0 : index
    %c0_7 = arith.constant 0 : index
    %9 = vector.load %arg9[%c0_6, %c0_7] : memref<28x112xbf16, #tpu.memory_space<vmem>>, vector<28x112xbf16>
    tpu.vector_store %arg9[%c0_6, %c0_7], %8 {strides = array<i32>} : memref<28x112xbf16, #tpu.memory_space<vmem>>, vector<28x112xbf16>,
    %c1 = arith.constant 1 : index
    %c0_8 = arith.constant 0 : index
    %10 = vector.load %arg7[%c1, %c0_8] : memref<14x192xf32, #tpu.memory_space<vmem>>, vector<1x192xf32>
    %c0_9 = arith.constant 0 : index
    %c0_10 = arith.constant 0 : index
    %11 = vector.load %arg9[%c0_9, %c0_10] : memref<28x112xbf16, #tpu.memory_space<vmem>>, vector<24x112xbf16>
    %c0_11 = arith.constant 0 : index
    %c0_12 = arith.constant 0 : index
    %c0_13 = arith.constant 0 : index
    %12 = vector.load %arg2[%c0_11, %c0_12, %c0_13] : memref<3x112x192xbf16, #tpu.memory_space<vmem>>, vector<1x112x192xbf16>
    %13 = vector.shape_cast %12 : vector<1x112x192xbf16> to vector<112x192xbf16>
    %cst_14 = arith.constant dense<0.000000e+00> : vector<24x192xf32>
    %14 = tpu.matmul %11, %13, %cst_14 {dimension_numbers = #tpu.dot_dimension_numbers<[1], [0], [0], [1], [0, 0, 1, 1], [], []>} : vector<24x112xbf16>, vector<112x192xbf16>, vector<24x192xf32> -> vector<24x192xf32>
    %15 = vector.broadcast %10 : vector<1x192xf32> to vector<24x192xf32>
    %16 = arith.addf %15, %14 : vector<24x192xf32>
    %c2 = arith.constant 2 : index
    %c0_15 = arith.constant 0 : index
    %17 = vector.load %arg9[%c2, %c0_15] : memref<28x112xbf16, #tpu.memory_space<vmem>>, vector<24x112xbf16>
    %c1_16 = arith.constant 1 : index
    %c0_17 = arith.constant 0 : index
    %c0_18 = arith.constant 0 : index
    %18 = vector.load %arg2[%c1_16, %c0_17, %c0_18] : memref<3x112x192xbf16, #tpu.memory_space<vmem>>, vector<1x112x192xbf16>
    %19 = vector.shape_cast %18 : vector<1x112x192xbf16> to vector<112x192xbf16>
    %cst_19 = arith.constant dense<0.000000e+00> : vector<24x192xf32>
    %20 = tpu.matmul %17, %19, %cst_19 {dimension_numbers = #tpu.dot_dimension_numbers<[1], [0], [0], [1], [0, 0, 1, 1], [], []>} : vector<24x112xbf16>, vector<112x192xbf16>, vector<24x192xf32> -> vector<24x192xf32>
    %21 = arith.addf %16, %20 : vector<24x192xf32>
    %c4 = arith.constant 4 : index
    %c0_20 = arith.constant 0 : index
    %22 = vector.load %arg9[%c4, %c0_20] : memref<28x112xbf16, #tpu.memory_space<vmem>>, vector<24x112xbf16>
    %c2_21 = arith.constant 2 : index
    %c0_22 = arith.constant 0 : index
    %c0_23 = arith.constant 0 : index
    %23 = vector.load %arg2[%c2_21, %c0_22, %c0_23] : memref<3x112x192xbf16, #tpu.memory_space<vmem>>, vector<1x112x192xbf16>
    %24 = vector.shape_cast %23 : vector<1x112x192xbf16> to vector<112x192xbf16>
    %cst_24 = arith.constant dense<0.000000e+00> : vector<24x192xf32>
    %25 = tpu.matmul %22, %24, %cst_24 {dimension_numbers = #tpu.dot_dimension_numbers<[1], [0], [0], [1], [0, 0, 1, 1], [], []>} : vector<24x112xbf16>, vector<112x192xbf16>, vector<24x192xf32> -> vector<24x192xf32>
    %26 = arith.addf %21, %25 : vector<24x192xf32>
    %cst_25 = arith.constant 0.000000e+00 : f32
    %27 = vector.broadcast %cst_25 : f32 to vector<24x192xf32>
    %28 = arith.maximumf %26, %27 : vector<24x192xf32>
    %29 = arith.truncf %28 : vector<24x192xf32> to vector<24x192xbf16>
    %c0_26 = arith.constant 0 : index
    %c0_27 = arith.constant 0 : index
    %30 = vector.load %arg10[%c0_26, %c0_27] : memref<24x192xbf16, #tpu.memory_space<vmem>>, vector<24x192xbf16>
    tpu.vector_store %arg10[%c0_26, %c0_27], %29 {strides = array<i32>} : memref<24x192xbf16, #tpu.memory_space<vmem>>, vector<24x192xbf16>,
    %c0_28 = arith.constant 0 : index
    %c0_29 = arith.constant 0 : index
    %31 = vector.load %arg10[%c0_28, %c0_29] : memref<24x192xbf16, #tpu.memory_space<vmem>>, vector<2x192xbf16>
    %c2_30 = arith.constant 2 : index
    %c0_31 = arith.constant 0 : index
    %32 = vector.load %arg10[%c2_30, %c0_31] : memref<24x192xbf16, #tpu.memory_space<vmem>>, vector<2x192xbf16>
    %33 = arith.maximumf %31, %32 : vector<2x192xbf16>
    %c0_32 = arith.constant 0 : index
    %c0_33 = arith.constant 0 : index
    %c0_34 = arith.constant 0 : index
    %34 = vector.load %arg4[%c0_32, %c0_33, %c0_34] : memref<2x192x96xbf16, #tpu.memory_space<vmem>>, vector<1x192x96xbf16>
    %35 = vector.shape_cast %34 : vector<1x192x96xbf16> to vector<192x96xbf16>
    %cst_35 = arith.constant dense<0.000000e+00> : vector<2x96xf32>
    %36 = tpu.matmul %33, %35, %cst_35 {dimension_numbers = #tpu.dot_dimension_numbers<[1], [0], [0], [1], [0, 0, 1, 1], [], []>} : vector<2x192xbf16>, vector<192x96xbf16>, vector<2x96xf32> -> vector<2x96xf32>
    %c1_36 = arith.constant 1 : index
    %c0_37 = arith.constant 0 : index
    %c0_38 = arith.constant 0 : index
    %37 = vector.load %arg4[%c1_36, %c0_37, %c0_38] : memref<2x192x96xbf16, #tpu.memory_space<vmem>>, vector<1x192x96xbf16>
    %38 = vector.shape_cast %37 : vector<1x192x96xbf16> to vector<192x96xbf16>
    %cst_39 = arith.constant dense<0.000000e+00> : vector<2x96xf32>
    %39 = tpu.matmul %33, %38, %cst_39 {dimension_numbers = #tpu.dot_dimension_numbers<[1], [0], [0], [1], [0, 0, 1, 1], [], []>} : vector<2x192xbf16>, vector<192x96xbf16>, vector<2x96xf32> -> vector<2x96xf32>
    %40 = arith.maximumf %36, %39 : vector<2x96xf32>
    %c4_40 = arith.constant 4 : index
    %c0_41 = arith.constant 0 : index
    %41 = vector.load %arg10[%c4_40, %c0_41] : memref<24x192xbf16, #tpu.memory_space<vmem>>, vector<2x192xbf16>
    %c6 = arith.constant 6 : index
    %c0_42 = arith.constant 0 : index
    %42 = vector.load %arg10[%c6, %c0_42] : memref<24x192xbf16, #tpu.memory_space<vmem>>, vector<2x192xbf16>
    %43 = arith.maximumf %41, %42 : vector<2x192xbf16>
    %c0_43 = arith.constant 0 : index
    %c0_44 = arith.constant 0 : index
    %c0_45 = arith.constant 0 : index
    %44 = vector.load %arg4[%c0_43, %c0_44, %c0_45] : memref<2x192x96xbf16, #tpu.memory_space<vmem>>, vector<1x192x96xbf16>
    %45 = vector.shape_cast %44 : vector<1x192x96xbf16> to vector<192x96xbf16>
    %cst_46 = arith.constant dense<0.000000e+00> : vector<2x96xf32>
    %46 = tpu.matmul %43, %45, %cst_46 {dimension_numbers = #tpu.dot_dimension_numbers<[1], [0], [0], [1], [0, 0, 1, 1], [], []>} : vector<2x192xbf16>, vector<192x96xbf16>, vector<2x96xf32> -> vector<2x96xf32>
    %c1_47 = arith.constant 1 : index
    %c0_48 = arith.constant 0 : index
    %c0_49 = arith.constant 0 : index
    %47 = vector.load %arg4[%c1_47, %c0_48, %c0_49] : memref<2x192x96xbf16, #tpu.memory_space<vmem>>, vector<1x192x96xbf16>
    %48 = vector.shape_cast %47 : vector<1x192x96xbf16> to vector<192x96xbf16>
    %cst_50 = arith.constant dense<0.000000e+00> : vector<2x96xf32>
    %49 = tpu.matmul %43, %48, %cst_50 {dimension_numbers = #tpu.dot_dimension_numbers<[1], [0], [0], [1], [0, 0, 1, 1], [], []>} : vector<2x192xbf16>, vector<192x96xbf16>, vector<2x96xf32> -> vector<2x96xf32>
    %50 = arith.maximumf %46, %49 : vector<2x96xf32>
    %c8 = arith.constant 8 : index
    %c0_51 = arith.constant 0 : index
    %51 = vector.load %arg10[%c8, %c0_51] : memref<24x192xbf16, #tpu.memory_space<vmem>>, vector<2x192xbf16>
    %c10 = arith.constant 10 : index
    %c0_52 = arith.constant 0 : index
    %52 = vector.load %arg10[%c10, %c0_52] : memref<24x192xbf16, #tpu.memory_space<vmem>>, vector<2x192xbf16>
    %53 = arith.maximumf %51, %52 : vector<2x192xbf16>
    %c0_53 = arith.constant 0 : index
    %c0_54 = arith.constant 0 : index
    %c0_55 = arith.constant 0 : index
    %54 = vector.load %arg4[%c0_53, %c0_54, %c0_55] : memref<2x192x96xbf16, #tpu.memory_space<vmem>>, vector<1x192x96xbf16>
    %55 = vector.shape_cast %54 : vector<1x192x96xbf16> to vector<192x96xbf16>
    %cst_56 = arith.constant dense<0.000000e+00> : vector<2x96xf32>
    %56 = tpu.matmul %53, %55, %cst_56 {dimension_numbers = #tpu.dot_dimension_numbers<[1], [0], [0], [1], [0, 0, 1, 1], [], []>} : vector<2x192xbf16>, vector<192x96xbf16>, vector<2x96xf32> -> vector<2x96xf32>
    %c1_57 = arith.constant 1 : index
    %c0_58 = arith.constant 0 : index
    %c0_59 = arith.constant 0 : index
    %57 = vector.load %arg4[%c1_57, %c0_58, %c0_59] : memref<2x192x96xbf16, #tpu.memory_space<vmem>>, vector<1x192x96xbf16>
    %58 = vector.shape_cast %57 : vector<1x192x96xbf16> to vector<192x96xbf16>
    %cst_60 = arith.constant dense<0.000000e+00> : vector<2x96xf32>
    %59 = tpu.matmul %53, %58, %cst_60 {dimension_numbers = #tpu.dot_dimension_numbers<[1], [0], [0], [1], [0, 0, 1, 1], [], []>} : vector<2x192xbf16>, vector<192x96xbf16>, vector<2x96xf32> -> vector<2x96xf32>
    %60 = arith.maximumf %56, %59 : vector<2x96xf32>
    %c12 = arith.constant 12 : index
    %c0_61 = arith.constant 0 : index
    %61 = vector.load %arg10[%c12, %c0_61] : memref<24x192xbf16, #tpu.memory_space<vmem>>, vector<2x192xbf16>
    %c14 = arith.constant 14 : index
    %c0_62 = arith.constant 0 : index
    %62 = vector.load %arg10[%c14, %c0_62] : memref<24x192xbf16, #tpu.memory_space<vmem>>, vector<2x192xbf16>
    %63 = arith.maximumf %61, %62 : vector<2x192xbf16>
    %c0_63 = arith.constant 0 : index
    %c0_64 = arith.constant 0 : index
    %c0_65 = arith.constant 0 : index
    %64 = vector.load %arg4[%c0_63, %c0_64, %c0_65] : memref<2x192x96xbf16, #tpu.memory_space<vmem>>, vector<1x192x96xbf16>
    %65 = vector.shape_cast %64 : vector<1x192x96xbf16> to vector<192x96xbf16>
    %cst_66 = arith.constant dense<0.000000e+00> : vector<2x96xf32>
    %66 = tpu.matmul %63, %65, %cst_66 {dimension_numbers = #tpu.dot_dimension_numbers<[1], [0], [0], [1], [0, 0, 1, 1], [], []>} : vector<2x192xbf16>, vector<192x96xbf16>, vector<2x96xf32> -> vector<2x96xf32>
    %c1_67 = arith.constant 1 : index
    %c0_68 = arith.constant 0 : index
    %c0_69 = arith.constant 0 : index
    %67 = vector.load %arg4[%c1_67, %c0_68, %c0_69] : memref<2x192x96xbf16, #tpu.memory_space<vmem>>, vector<1x192x96xbf16>
    %68 = vector.shape_cast %67 : vector<1x192x96xbf16> to vector<192x96xbf16>
    %cst_70 = arith.constant dense<0.000000e+00> : vector<2x96xf32>
    %69 = tpu.matmul %63, %68, %cst_70 {dimension_numbers = #tpu.dot_dimension_numbers<[1], [0], [0], [1], [0, 0, 1, 1], [], []>} : vector<2x192xbf16>, vector<192x96xbf16>, vector<2x96xf32> -> vector<2x96xf32>
    %70 = arith.maximumf %66, %69 : vector<2x96xf32>
    %c16 = arith.constant 16 : index
    %c0_71 = arith.constant 0 : index
    %71 = vector.load %arg10[%c16, %c0_71] : memref<24x192xbf16, #tpu.memory_space<vmem>>, vector<2x192xbf16>
    %c18 = arith.constant 18 : index
    %c0_72 = arith.constant 0 : index
    %72 = vector.load %arg10[%c18, %c0_72] : memref<24x192xbf16, #tpu.memory_space<vmem>>, vector<2x192xbf16>
    %73 = arith.maximumf %71, %72 : vector<2x192xbf16>
    %c0_73 = arith.constant 0 : index
    %c0_74 = arith.constant 0 : index
    %c0_75 = arith.constant 0 : index
    %74 = vector.load %arg4[%c0_73, %c0_74, %c0_75] : memref<2x192x96xbf16, #tpu.memory_space<vmem>>, vector<1x192x96xbf16>
    %75 = vector.shape_cast %74 : vector<1x192x96xbf16> to vector<192x96xbf16>
    %cst_76 = arith.constant dense<0.000000e+00> : vector<2x96xf32>
    %76 = tpu.matmul %73, %75, %cst_76 {dimension_numbers = #tpu.dot_dimension_numbers<[1], [0], [0], [1], [0, 0, 1, 1], [], []>} : vector<2x192xbf16>, vector<192x96xbf16>, vector<2x96xf32> -> vector<2x96xf32>
    %c1_77 = arith.constant 1 : index
    %c0_78 = arith.constant 0 : index
    %c0_79 = arith.constant 0 : index
    %77 = vector.load %arg4[%c1_77, %c0_78, %c0_79] : memref<2x192x96xbf16, #tpu.memory_space<vmem>>, vector<1x192x96xbf16>
    %78 = vector.shape_cast %77 : vector<1x192x96xbf16> to vector<192x96xbf16>
    %cst_80 = arith.constant dense<0.000000e+00> : vector<2x96xf32>
    %79 = tpu.matmul %73, %78, %cst_80 {dimension_numbers = #tpu.dot_dimension_numbers<[1], [0], [0], [1], [0, 0, 1, 1], [], []>} : vector<2x192xbf16>, vector<192x96xbf16>, vector<2x96xf32> -> vector<2x96xf32>
    %80 = arith.maximumf %76, %79 : vector<2x96xf32>
    %c20 = arith.constant 20 : index
    %c0_81 = arith.constant 0 : index
    %81 = vector.load %arg10[%c20, %c0_81] : memref<24x192xbf16, #tpu.memory_space<vmem>>, vector<2x192xbf16>
    %c22 = arith.constant 22 : index
    %c0_82 = arith.constant 0 : index
    %82 = vector.load %arg10[%c22, %c0_82] : memref<24x192xbf16, #tpu.memory_space<vmem>>, vector<2x192xbf16>
    %83 = arith.maximumf %81, %82 : vector<2x192xbf16>
    %c0_83 = arith.constant 0 : index
    %c0_84 = arith.constant 0 : index
    %c0_85 = arith.constant 0 : index
    %84 = vector.load %arg4[%c0_83, %c0_84, %c0_85] : memref<2x192x96xbf16, #tpu.memory_space<vmem>>, vector<1x192x96xbf16>
    %85 = vector.shape_cast %84 : vector<1x192x96xbf16> to vector<192x96xbf16>
    %cst_86 = arith.constant dense<0.000000e+00> : vector<2x96xf32>
    %86 = tpu.matmul %83, %85, %cst_86 {dimension_numbers = #tpu.dot_dimension_numbers<[1], [0], [0], [1], [0, 0, 1, 1], [], []>} : vector<2x192xbf16>, vector<192x96xbf16>, vector<2x96xf32> -> vector<2x96xf32>
    %c1_87 = arith.constant 1 : index
    %c0_88 = arith.constant 0 : index
    %c0_89 = arith.constant 0 : index
    %87 = vector.load %arg4[%c1_87, %c0_88, %c0_89] : memref<2x192x96xbf16, #tpu.memory_space<vmem>>, vector<1x192x96xbf16>
    %88 = vector.shape_cast %87 : vector<1x192x96xbf16> to vector<192x96xbf16>
    %cst_90 = arith.constant dense<0.000000e+00> : vector<2x96xf32>
    %89 = tpu.matmul %83, %88, %cst_90 {dimension_numbers = #tpu.dot_dimension_numbers<[1], [0], [0], [1], [0, 0, 1, 1], [], []>} : vector<2x192xbf16>, vector<192x96xbf16>, vector<2x96xf32> -> vector<2x96xf32>
    %90 = arith.maximumf %86, %89 : vector<2x96xf32>
    %91 = tpu.concatenate %40, %50, %60, %70, %80, %90 in 0 : vector<2x96xf32>, vector<2x96xf32>, vector<2x96xf32>, vector<2x96xf32>, vector<2x96xf32>, vector<2x96xf32> -> vector<12x96xf32>
    %cst_91 = arith.constant dense<0.000000e+00> : vector<96xf32>
    %92 = vector.multi_reduction <add>, %91, %cst_91 [0] : vector<12x96xf32> to vector<96xf32>
    %93 = vector.shape_cast %92 : vector<96xf32> to vector<1x96xf32>
    %94 = vector.extract_strided_slice %93 {offsets = [0, 0], sizes = [1, 16], strides = [1, 1]} : vector<1x96xf32> to vector<1x16xf32>
    %95 = vector.extract_strided_slice %93 {offsets = [0, 16], sizes = [1, 16], strides = [1, 1]} : vector<1x96xf32> to vector<1x16xf32>
    %96 = arith.addf %94, %95 : vector<1x16xf32>
    %97 = vector.extract_strided_slice %93 {offsets = [0, 32], sizes = [1, 16], strides = [1, 1]} : vector<1x96xf32> to vector<1x16xf32>
    %98 = arith.addf %96, %97 : vector<1x16xf32>
    %99 = vector.extract_strided_slice %93 {offsets = [0, 48], sizes = [1, 16], strides = [1, 1]} : vector<1x96xf32> to vector<1x16xf32>
    %100 = arith.addf %98, %99 : vector<1x16xf32>
    %101 = vector.extract_strided_slice %93 {offsets = [0, 64], sizes = [1, 16], strides = [1, 1]} : vector<1x96xf32> to vector<1x16xf32>
    %102 = arith.addf %100, %101 : vector<1x16xf32>
    %103 = vector.extract_strided_slice %93 {offsets = [0, 80], sizes = [1, 16], strides = [1, 1]} : vector<1x96xf32> to vector<1x16xf32>
    %104 = arith.addf %102, %103 : vector<1x16xf32>
    %cst_92 = arith.constant 0.013888889 : f32
    %105 = vector.broadcast %cst_92 : f32 to vector<1x16xf32>
    %106 = arith.mulf %104, %105 : vector<1x16xf32>
    %107 = tpu.concatenate %106, %106, %106, %106, %106, %106 in 1 : vector<1x16xf32>, vector<1x16xf32>, vector<1x16xf32>, vector<1x16xf32>, vector<1x16xf32>, vector<1x16xf32> -> vector<1x96xf32>
    %108 = vector.broadcast %107 : vector<1x96xf32> to vector<12x96xf32>
    %109 = arith.subf %91, %108 : vector<12x96xf32>
    %110 = arith.mulf %109, %109 : vector<12x96xf32>
    %cst_93 = arith.constant dense<0.000000e+00> : vector<96xf32>
    %111 = vector.multi_reduction <add>, %110, %cst_93 [0] : vector<12x96xf32> to vector<96xf32>
    %112 = vector.shape_cast %111 : vector<96xf32> to vector<1x96xf32>
    %113 = vector.extract_strided_slice %112 {offsets = [0, 0], sizes = [1, 16], strides = [1, 1]} : vector<1x96xf32> to vector<1x16xf32>
    %114 = vector.extract_strided_slice %112 {offsets = [0, 16], sizes = [1, 16], strides = [1, 1]} : vector<1x96xf32> to vector<1x16xf32>
    %115 = arith.addf %113, %114 : vector<1x16xf32>
    %116 = vector.extract_strided_slice %112 {offsets = [0, 32], sizes = [1, 16], strides = [1, 1]} : vector<1x96xf32> to vector<1x16xf32>
    %117 = arith.addf %115, %116 : vector<1x16xf32>
    %118 = vector.extract_strided_slice %112 {offsets = [0, 48], sizes = [1, 16], strides = [1, 1]} : vector<1x96xf32> to vector<1x16xf32>
    %119 = arith.addf %117, %118 : vector<1x16xf32>
    %120 = vector.extract_strided_slice %112 {offsets = [0, 64], sizes = [1, 16], strides = [1, 1]} : vector<1x96xf32> to vector<1x16xf32>
    %121 = arith.addf %119, %120 : vector<1x16xf32>
    %122 = vector.extract_strided_slice %112 {offsets = [0, 80], sizes = [1, 16], strides = [1, 1]} : vector<1x96xf32> to vector<1x16xf32>
    %123 = arith.addf %121, %122 : vector<1x16xf32>
    %cst_94 = arith.constant 0.013888889 : f32
    %124 = vector.broadcast %cst_94 : f32 to vector<1x16xf32>
    %125 = arith.mulf %123, %124 : vector<1x16xf32>
    %126 = tpu.concatenate %125, %125, %125, %125, %125, %125 in 1 : vector<1x16xf32>, vector<1x16xf32>, vector<1x16xf32>, vector<1x16xf32>, vector<1x16xf32>, vector<1x16xf32> -> vector<1x96xf32>
    %cst_95 = arith.constant 9.99999974E-6 : f32
    %127 = vector.broadcast %cst_95 : f32 to vector<1x96xf32>
    %128 = arith.addf %126, %127 : vector<1x96xf32>
    %129 = math.rsqrt %128 : vector<1x96xf32>
    %c6_96 = arith.constant 6 : index
    %c0_97 = arith.constant 0 : index
    %130 = vector.load %arg7[%c6_96, %c0_97] : memref<14x192xf32, #tpu.memory_space<vmem>>, vector<1x96xf32>
    %131 = arith.mulf %129, %130 : vector<1x96xf32>
    %132 = vector.broadcast %131 : vector<1x96xf32> to vector<12x96xf32>
    %133 = arith.mulf %109, %132 : vector<12x96xf32>
    %c7 = arith.constant 7 : index
    %c0_98 = arith.constant 0 : index
    %134 = vector.load %arg7[%c7, %c0_98] : memref<14x192xf32, #tpu.memory_space<vmem>>, vector<1x96xf32>
    %135 = vector.broadcast %134 : vector<1x96xf32> to vector<12x96xf32>
    %136 = arith.addf %133, %135 : vector<12x96xf32>
    %cst_99 = arith.constant 0.000000e+00 : f32
    %137 = vector.broadcast %cst_99 : f32 to vector<2x96xf32>
    %138 = tpu.concatenate %137, %136, %137 in 0 : vector<2x96xf32>, vector<12x96xf32>, vector<2x96xf32> -> vector<16x96xf32>
    %139 = arith.truncf %138 : vector<16x96xf32> to vector<16x96xbf16>
    %c0_100 = arith.constant 0 : index
    %c0_101 = arith.constant 0 : index
    %140 = vector.load %arg11[%c0_100, %c0_101] : memref<16x96xbf16, #tpu.memory_space<vmem>>, vector<16x96xbf16>
    tpu.vector_store %arg11[%c0_100, %c0_101], %139 {strides = array<i32>} : memref<16x96xbf16, #tpu.memory_space<vmem>>, vector<16x96xbf16>,
    %c2_102 = arith.constant 2 : index
    %c0_103 = arith.constant 0 : index
    %141 = vector.load %arg7[%c2_102, %c0_103] : memref<14x192xf32, #tpu.memory_space<vmem>>, vector<1x96xf32>
    %c0_104 = arith.constant 0 : index
    %c0_105 = arith.constant 0 : index
    %142 = vector.load %arg11[%c0_104, %c0_105] : memref<16x96xbf16, #tpu.memory_space<vmem>>, vector<12x96xbf16>
    %c0_106 = arith.constant 0 : index
    %c0_107 = arith.constant 0 : index
    %c0_108 = arith.constant 0 : index
    %143 = vector.load %arg3[%c0_106, %c0_107, %c0_108] : memref<12x96x96xbf16, #tpu.memory_space<vmem>>, vector<1x96x96xbf16>
    %144 = vector.shape_cast %143 : vector<1x96x96xbf16> to vector<96x96xbf16>
    %cst_109 = arith.constant dense<0.000000e+00> : vector<12x96xf32>
    %145 = tpu.matmul %142, %144, %cst_109 {dimension_numbers = #tpu.dot_dimension_numbers<[1], [0], [0], [1], [0, 0, 1, 1], [], []>} : vector<12x96xbf16>, vector<96x96xbf16>, vector<12x96xf32> -> vector<12x96xf32>
    %146 = vector.broadcast %141 : vector<1x96xf32> to vector<12x96xf32>
    %147 = arith.addf %146, %145 : vector<12x96xf32>
    %c2_110 = arith.constant 2 : index
    %c0_111 = arith.constant 0 : index
    %148 = vector.load %arg11[%c2_110, %c0_111] : memref<16x96xbf16, #tpu.memory_space<vmem>>, vector<12x96xbf16>
    %c1_112 = arith.constant 1 : index
    %c0_113 = arith.constant 0 : index
    %c0_114 = arith.constant 0 : index
    %149 = vector.load %arg3[%c1_112, %c0_113, %c0_114] : memref<12x96x96xbf16, #tpu.memory_space<vmem>>, vector<1x96x96xbf16>
    %150 = vector.shape_cast %149 : vector<1x96x96xbf16> to vector<96x96xbf16>
    %cst_115 = arith.constant dense<0.000000e+00> : vector<12x96xf32>
    %151 = tpu.matmul %148, %150, %cst_115 {dimension_numbers = #tpu.dot_dimension_numbers<[1], [0], [0], [1], [0, 0, 1, 1], [], []>} : vector<12x96xbf16>, vector<96x96xbf16>, vector<12x96xf32> -> vector<12x96xf32>
    %152 = arith.addf %147, %151 : vector<12x96xf32>
    %c4_116 = arith.constant 4 : index
    %c0_117 = arith.constant 0 : index
    %153 = vector.load %arg11[%c4_116, %c0_117] : memref<16x96xbf16, #tpu.memory_space<vmem>>, vector<12x96xbf16>
    %c2_118 = arith.constant 2 : index
    %c0_119 = arith.constant 0 : index
    %c0_120 = arith.constant 0 : index
    %154 = vector.load %arg3[%c2_118, %c0_119, %c0_120] : memref<12x96x96xbf16, #tpu.memory_space<vmem>>, vector<1x96x96xbf16>
    %155 = vector.shape_cast %154 : vector<1x96x96xbf16> to vector<96x96xbf16>
    %cst_121 = arith.constant dense<0.000000e+00> : vector<12x96xf32>
    %156 = tpu.matmul %153, %155, %cst_121 {dimension_numbers = #tpu.dot_dimension_numbers<[1], [0], [0], [1], [0, 0, 1, 1], [], []>} : vector<12x96xbf16>, vector<96x96xbf16>, vector<12x96xf32> -> vector<12x96xf32>
    %157 = arith.addf %152, %156 : vector<12x96xf32>
    %cst_122 = arith.constant 0.000000e+00 : f32
    %158 = vector.broadcast %cst_122 : f32 to vector<12x96xf32>
    %159 = arith.maximumf %157, %158 : vector<12x96xf32>
    %cst_123 = arith.constant 0.000000e+00 : f32
    %160 = vector.broadcast %cst_123 : f32 to vector<2x96xf32>
    %161 = tpu.concatenate %160, %159, %160 in 0 : vector<2x96xf32>, vector<12x96xf32>, vector<2x96xf32> -> vector<16x96xf32>
    %162 = arith.truncf %161 : vector<16x96xf32> to vector<16x96xbf16>
    %c0_124 = arith.constant 0 : index
    %c0_125 = arith.constant 0 : index
    %163 = vector.load %arg12[%c0_124, %c0_125] : memref<16x96xbf16, #tpu.memory_space<vmem>>, vector<16x96xbf16>
    tpu.vector_store %arg12[%c0_124, %c0_125], %162 {strides = array<i32>} : memref<16x96xbf16, #tpu.memory_space<vmem>>, vector<16x96xbf16>,
    %c3 = arith.constant 3 : index
    %c0_126 = arith.constant 0 : index
    %164 = vector.load %arg7[%c3, %c0_126] : memref<14x192xf32, #tpu.memory_space<vmem>>, vector<1x96xf32>
    %c0_127 = arith.constant 0 : index
    %c0_128 = arith.constant 0 : index
    %165 = vector.load %arg12[%c0_127, %c0_128] : memref<16x96xbf16, #tpu.memory_space<vmem>>, vector<12x96xbf16>
    %c3_129 = arith.constant 3 : index
    %c0_130 = arith.constant 0 : index
    %c0_131 = arith.constant 0 : index
    %166 = vector.load %arg3[%c3_129, %c0_130, %c0_131] : memref<12x96x96xbf16, #tpu.memory_space<vmem>>, vector<1x96x96xbf16>
    %167 = vector.shape_cast %166 : vector<1x96x96xbf16> to vector<96x96xbf16>
    %cst_132 = arith.constant dense<0.000000e+00> : vector<12x96xf32>
    %168 = tpu.matmul %165, %167, %cst_132 {dimension_numbers = #tpu.dot_dimension_numbers<[1], [0], [0], [1], [0, 0, 1, 1], [], []>} : vector<12x96xbf16>, vector<96x96xbf16>, vector<12x96xf32> -> vector<12x96xf32>
    %169 = vector.broadcast %164 : vector<1x96xf32> to vector<12x96xf32>
    %170 = arith.addf %169, %168 : vector<12x96xf32>
    %c2_133 = arith.constant 2 : index
    %c0_134 = arith.constant 0 : index
    %171 = vector.load %arg12[%c2_133, %c0_134] : memref<16x96xbf16, #tpu.memory_space<vmem>>, vector<12x96xbf16>
    %c4_135 = arith.constant 4 : index
    %c0_136 = arith.constant 0 : index
    %c0_137 = arith.constant 0 : index
    %172 = vector.load %arg3[%c4_135, %c0_136, %c0_137] : memref<12x96x96xbf16, #tpu.memory_space<vmem>>, vector<1x96x96xbf16>
    %173 = vector.shape_cast %172 : vector<1x96x96xbf16> to vector<96x96xbf16>
    %cst_138 = arith.constant dense<0.000000e+00> : vector<12x96xf32>
    %174 = tpu.matmul %171, %173, %cst_138 {dimension_numbers = #tpu.dot_dimension_numbers<[1], [0], [0], [1], [0, 0, 1, 1], [], []>} : vector<12x96xbf16>, vector<96x96xbf16>, vector<12x96xf32> -> vector<12x96xf32>
    %175 = arith.addf %170, %174 : vector<12x96xf32>
    %c4_139 = arith.constant 4 : index
    %c0_140 = arith.constant 0 : index
    %176 = vector.load %arg12[%c4_139, %c0_140] : memref<16x96xbf16, #tpu.memory_space<vmem>>, vector<12x96xbf16>
    %c5 = arith.constant 5 : index
    %c0_141 = arith.constant 0 : index
    %c0_142 = arith.constant 0 : index
    %177 = vector.load %arg3[%c5, %c0_141, %c0_142] : memref<12x96x96xbf16, #tpu.memory_space<vmem>>, vector<1x96x96xbf16>
    %178 = vector.shape_cast %177 : vector<1x96x96xbf16> to vector<96x96xbf16>
    %cst_143 = arith.constant dense<0.000000e+00> : vector<12x96xf32>
    %179 = tpu.matmul %176, %178, %cst_143 {dimension_numbers = #tpu.dot_dimension_numbers<[1], [0], [0], [1], [0, 0, 1, 1], [], []>} : vector<12x96xbf16>, vector<96x96xbf16>, vector<12x96xf32> -> vector<12x96xf32>
    %180 = arith.addf %175, %179 : vector<12x96xf32>
    %cst_144 = arith.constant 0.000000e+00 : f32
    %181 = vector.broadcast %cst_144 : f32 to vector<12x96xf32>
    %182 = arith.maximumf %180, %181 : vector<12x96xf32>
    %cst_145 = arith.constant dense<0.000000e+00> : vector<96xf32>
    %183 = vector.multi_reduction <add>, %182, %cst_145 [0] : vector<12x96xf32> to vector<96xf32>
    %184 = vector.shape_cast %183 : vector<96xf32> to vector<1x96xf32>
    %185 = vector.extract_strided_slice %184 {offsets = [0, 0], sizes = [1, 16], strides = [1, 1]} : vector<1x96xf32> to vector<1x16xf32>
    %186 = vector.extract_strided_slice %184 {offsets = [0, 16], sizes = [1, 16], strides = [1, 1]} : vector<1x96xf32> to vector<1x16xf32>
    %187 = arith.addf %185, %186 : vector<1x16xf32>
    %188 = vector.extract_strided_slice %184 {offsets = [0, 32], sizes = [1, 16], strides = [1, 1]} : vector<1x96xf32> to vector<1x16xf32>
    %189 = arith.addf %187, %188 : vector<1x16xf32>
    %190 = vector.extract_strided_slice %184 {offsets = [0, 48], sizes = [1, 16], strides = [1, 1]} : vector<1x96xf32> to vector<1x16xf32>
    %191 = arith.addf %189, %190 : vector<1x16xf32>
    %192 = vector.extract_strided_slice %184 {offsets = [0, 64], sizes = [1, 16], strides = [1, 1]} : vector<1x96xf32> to vector<1x16xf32>
    %193 = arith.addf %191, %192 : vector<1x16xf32>
    %194 = vector.extract_strided_slice %184 {offsets = [0, 80], sizes = [1, 16], strides = [1, 1]} : vector<1x96xf32> to vector<1x16xf32>
    %195 = arith.addf %193, %194 : vector<1x16xf32>
    %cst_146 = arith.constant 0.013888889 : f32
    %196 = vector.broadcast %cst_146 : f32 to vector<1x16xf32>
    %197 = arith.mulf %195, %196 : vector<1x16xf32>
    %198 = tpu.concatenate %197, %197, %197, %197, %197, %197 in 1 : vector<1x16xf32>, vector<1x16xf32>, vector<1x16xf32>, vector<1x16xf32>, vector<1x16xf32>, vector<1x16xf32> -> vector<1x96xf32>
    %199 = vector.broadcast %198 : vector<1x96xf32> to vector<12x96xf32>
    %200 = arith.subf %182, %199 : vector<12x96xf32>
    %201 = arith.mulf %200, %200 : vector<12x96xf32>
    %cst_147 = arith.constant dense<0.000000e+00> : vector<96xf32>
    %202 = vector.multi_reduction <add>, %201, %cst_147 [0] : vector<12x96xf32> to vector<96xf32>
    %203 = vector.shape_cast %202 : vector<96xf32> to vector<1x96xf32>
    %204 = vector.extract_strided_slice %203 {offsets = [0, 0], sizes = [1, 16], strides = [1, 1]} : vector<1x96xf32> to vector<1x16xf32>
    %205 = vector.extract_strided_slice %203 {offsets = [0, 16], sizes = [1, 16], strides = [1, 1]} : vector<1x96xf32> to vector<1x16xf32>
    %206 = arith.addf %204, %205 : vector<1x16xf32>
    %207 = vector.extract_strided_slice %203 {offsets = [0, 32], sizes = [1, 16], strides = [1, 1]} : vector<1x96xf32> to vector<1x16xf32>
    %208 = arith.addf %206, %207 : vector<1x16xf32>
    %209 = vector.extract_strided_slice %203 {offsets = [0, 48], sizes = [1, 16], strides = [1, 1]} : vector<1x96xf32> to vector<1x16xf32>
    %210 = arith.addf %208, %209 : vector<1x16xf32>
    %211 = vector.extract_strided_slice %203 {offsets = [0, 64], sizes = [1, 16], strides = [1, 1]} : vector<1x96xf32> to vector<1x16xf32>
    %212 = arith.addf %210, %211 : vector<1x16xf32>
    %213 = vector.extract_strided_slice %203 {offsets = [0, 80], sizes = [1, 16], strides = [1, 1]} : vector<1x96xf32> to vector<1x16xf32>
    %214 = arith.addf %212, %213 : vector<1x16xf32>
    %cst_148 = arith.constant 0.013888889 : f32
    %215 = vector.broadcast %cst_148 : f32 to vector<1x16xf32>
    %216 = arith.mulf %214, %215 : vector<1x16xf32>
    %217 = tpu.concatenate %216, %216, %216, %216, %216, %216 in 1 : vector<1x16xf32>, vector<1x16xf32>, vector<1x16xf32>, vector<1x16xf32>, vector<1x16xf32>, vector<1x16xf32> -> vector<1x96xf32>
    %cst_149 = arith.constant 9.99999974E-6 : f32
    %218 = vector.broadcast %cst_149 : f32 to vector<1x96xf32>
    %219 = arith.addf %217, %218 : vector<1x96xf32>
    %220 = math.rsqrt %219 : vector<1x96xf32>
    %c8_150 = arith.constant 8 : index
    %c0_151 = arith.constant 0 : index
    %221 = vector.load %arg7[%c8_150, %c0_151] : memref<14x192xf32, #tpu.memory_space<vmem>>, vector<1x96xf32>
    %222 = arith.mulf %220, %221 : vector<1x96xf32>
    %223 = vector.broadcast %222 : vector<1x96xf32> to vector<12x96xf32>
    %224 = arith.mulf %200, %223 : vector<12x96xf32>
    %c9 = arith.constant 9 : index
    %c0_152 = arith.constant 0 : index
    %225 = vector.load %arg7[%c9, %c0_152] : memref<14x192xf32, #tpu.memory_space<vmem>>, vector<1x96xf32>
    %226 = vector.broadcast %225 : vector<1x96xf32> to vector<12x96xf32>
    %227 = arith.addf %224, %226 : vector<12x96xf32>
    %cst_153 = arith.constant 0.000000e+00 : f32
    %228 = vector.broadcast %cst_153 : f32 to vector<2x96xf32>
    %229 = tpu.concatenate %228, %227, %228 in 0 : vector<2x96xf32>, vector<12x96xf32>, vector<2x96xf32> -> vector<16x96xf32>
    %230 = arith.truncf %229 : vector<16x96xf32> to vector<16x96xbf16>
    %c0_154 = arith.constant 0 : index
    %c0_155 = arith.constant 0 : index
    %231 = vector.load %arg11[%c0_154, %c0_155] : memref<16x96xbf16, #tpu.memory_space<vmem>>, vector<16x96xbf16>
    tpu.vector_store %arg11[%c0_154, %c0_155], %230 {strides = array<i32>} : memref<16x96xbf16, #tpu.memory_space<vmem>>, vector<16x96xbf16>,
    %c4_156 = arith.constant 4 : index
    %c0_157 = arith.constant 0 : index
    %232 = vector.load %arg7[%c4_156, %c0_157] : memref<14x192xf32, #tpu.memory_space<vmem>>, vector<1x96xf32>
    %c0_158 = arith.constant 0 : index
    %c0_159 = arith.constant 0 : index
    %233 = vector.load %arg11[%c0_158, %c0_159] : memref<16x96xbf16, #tpu.memory_space<vmem>>, vector<12x96xbf16>
    %c6_160 = arith.constant 6 : index
    %c0_161 = arith.constant 0 : index
    %c0_162 = arith.constant 0 : index
    %234 = vector.load %arg3[%c6_160, %c0_161, %c0_162] : memref<12x96x96xbf16, #tpu.memory_space<vmem>>, vector<1x96x96xbf16>
    %235 = vector.shape_cast %234 : vector<1x96x96xbf16> to vector<96x96xbf16>
    %cst_163 = arith.constant dense<0.000000e+00> : vector<12x96xf32>
    %236 = tpu.matmul %233, %235, %cst_163 {dimension_numbers = #tpu.dot_dimension_numbers<[1], [0], [0], [1], [0, 0, 1, 1], [], []>} : vector<12x96xbf16>, vector<96x96xbf16>, vector<12x96xf32> -> vector<12x96xf32>
    %237 = vector.broadcast %232 : vector<1x96xf32> to vector<12x96xf32>
    %238 = arith.addf %237, %236 : vector<12x96xf32>
    %c2_164 = arith.constant 2 : index
    %c0_165 = arith.constant 0 : index
    %239 = vector.load %arg11[%c2_164, %c0_165] : memref<16x96xbf16, #tpu.memory_space<vmem>>, vector<12x96xbf16>
    %c7_166 = arith.constant 7 : index
    %c0_167 = arith.constant 0 : index
    %c0_168 = arith.constant 0 : index
    %240 = vector.load %arg3[%c7_166, %c0_167, %c0_168] : memref<12x96x96xbf16, #tpu.memory_space<vmem>>, vector<1x96x96xbf16>
    %241 = vector.shape_cast %240 : vector<1x96x96xbf16> to vector<96x96xbf16>
    %cst_169 = arith.constant dense<0.000000e+00> : vector<12x96xf32>
    %242 = tpu.matmul %239, %241, %cst_169 {dimension_numbers = #tpu.dot_dimension_numbers<[1], [0], [0], [1], [0, 0, 1, 1], [], []>} : vector<12x96xbf16>, vector<96x96xbf16>, vector<12x96xf32> -> vector<12x96xf32>
    %243 = arith.addf %238, %242 : vector<12x96xf32>
    %c4_170 = arith.constant 4 : index
    %c0_171 = arith.constant 0 : index
    %244 = vector.load %arg11[%c4_170, %c0_171] : memref<16x96xbf16, #tpu.memory_space<vmem>>, vector<12x96xbf16>
    %c8_172 = arith.constant 8 : index
    %c0_173 = arith.constant 0 : index
    %c0_174 = arith.constant 0 : index
    %245 = vector.load %arg3[%c8_172, %c0_173, %c0_174] : memref<12x96x96xbf16, #tpu.memory_space<vmem>>, vector<1x96x96xbf16>
    %246 = vector.shape_cast %245 : vector<1x96x96xbf16> to vector<96x96xbf16>
    %cst_175 = arith.constant dense<0.000000e+00> : vector<12x96xf32>
    %247 = tpu.matmul %244, %246, %cst_175 {dimension_numbers = #tpu.dot_dimension_numbers<[1], [0], [0], [1], [0, 0, 1, 1], [], []>} : vector<12x96xbf16>, vector<96x96xbf16>, vector<12x96xf32> -> vector<12x96xf32>
    %248 = arith.addf %243, %247 : vector<12x96xf32>
    %cst_176 = arith.constant 0.000000e+00 : f32
    %249 = vector.broadcast %cst_176 : f32 to vector<12x96xf32>
    %250 = arith.maximumf %248, %249 : vector<12x96xf32>
    %cst_177 = arith.constant 0.000000e+00 : f32
    %251 = vector.broadcast %cst_177 : f32 to vector<2x96xf32>
    %252 = tpu.concatenate %251, %250, %251 in 0 : vector<2x96xf32>, vector<12x96xf32>, vector<2x96xf32> -> vector<16x96xf32>
    %253 = arith.truncf %252 : vector<16x96xf32> to vector<16x96xbf16>
    %c0_178 = arith.constant 0 : index
    %c0_179 = arith.constant 0 : index
    %254 = vector.load %arg12[%c0_178, %c0_179] : memref<16x96xbf16, #tpu.memory_space<vmem>>, vector<16x96xbf16>
    tpu.vector_store %arg12[%c0_178, %c0_179], %253 {strides = array<i32>} : memref<16x96xbf16, #tpu.memory_space<vmem>>, vector<16x96xbf16>,
    %c5_180 = arith.constant 5 : index
    %c0_181 = arith.constant 0 : index
    %255 = vector.load %arg7[%c5_180, %c0_181] : memref<14x192xf32, #tpu.memory_space<vmem>>, vector<1x96xf32>
    %c0_182 = arith.constant 0 : index
    %c0_183 = arith.constant 0 : index
    %256 = vector.load %arg12[%c0_182, %c0_183] : memref<16x96xbf16, #tpu.memory_space<vmem>>, vector<12x96xbf16>
    %c9_184 = arith.constant 9 : index
    %c0_185 = arith.constant 0 : index
    %c0_186 = arith.constant 0 : index
    %257 = vector.load %arg3[%c9_184, %c0_185, %c0_186] : memref<12x96x96xbf16, #tpu.memory_space<vmem>>, vector<1x96x96xbf16>
    %258 = vector.shape_cast %257 : vector<1x96x96xbf16> to vector<96x96xbf16>
    %cst_187 = arith.constant dense<0.000000e+00> : vector<12x96xf32>
    %259 = tpu.matmul %256, %258, %cst_187 {dimension_numbers = #tpu.dot_dimension_numbers<[1], [0], [0], [1], [0, 0, 1, 1], [], []>} : vector<12x96xbf16>, vector<96x96xbf16>, vector<12x96xf32> -> vector<12x96xf32>
    %260 = vector.broadcast %255 : vector<1x96xf32> to vector<12x96xf32>
    %261 = arith.addf %260, %259 : vector<12x96xf32>
    %c2_188 = arith.constant 2 : index
    %c0_189 = arith.constant 0 : index
    %262 = vector.load %arg12[%c2_188, %c0_189] : memref<16x96xbf16, #tpu.memory_space<vmem>>, vector<12x96xbf16>
    %c10_190 = arith.constant 10 : index
    %c0_191 = arith.constant 0 : index
    %c0_192 = arith.constant 0 : index
    %263 = vector.load %arg3[%c10_190, %c0_191, %c0_192] : memref<12x96x96xbf16, #tpu.memory_space<vmem>>, vector<1x96x96xbf16>
    %264 = vector.shape_cast %263 : vector<1x96x96xbf16> to vector<96x96xbf16>
    %cst_193 = arith.constant dense<0.000000e+00> : vector<12x96xf32>
    %265 = tpu.matmul %262, %264, %cst_193 {dimension_numbers = #tpu.dot_dimension_numbers<[1], [0], [0], [1], [0, 0, 1, 1], [], []>} : vector<12x96xbf16>, vector<96x96xbf16>, vector<12x96xf32> -> vector<12x96xf32>
    %266 = arith.addf %261, %265 : vector<12x96xf32>
    %c4_194 = arith.constant 4 : index
    %c0_195 = arith.constant 0 : index
    %267 = vector.load %arg12[%c4_194, %c0_195] : memref<16x96xbf16, #tpu.memory_space<vmem>>, vector<12x96xbf16>
    %c11 = arith.constant 11 : index
    %c0_196 = arith.constant 0 : index
    %c0_197 = arith.constant 0 : index
    %268 = vector.load %arg3[%c11, %c0_196, %c0_197] : memref<12x96x96xbf16, #tpu.memory_space<vmem>>, vector<1x96x96xbf16>
    %269 = vector.shape_cast %268 : vector<1x96x96xbf16> to vector<96x96xbf16>
    %cst_198 = arith.constant dense<0.000000e+00> : vector<12x96xf32>
    %270 = tpu.matmul %267, %269, %cst_198 {dimension_numbers = #tpu.dot_dimension_numbers<[1], [0], [0], [1], [0, 0, 1, 1], [], []>} : vector<12x96xbf16>, vector<96x96xbf16>, vector<12x96xf32> -> vector<12x96xf32>
    %271 = arith.addf %266, %270 : vector<12x96xf32>
    %cst_199 = arith.constant 0.000000e+00 : f32
    %272 = vector.broadcast %cst_199 : f32 to vector<12x96xf32>
    %273 = arith.maximumf %271, %272 : vector<12x96xf32>
    %cst_200 = arith.constant dense<0.000000e+00> : vector<96xf32>
    %274 = vector.multi_reduction <add>, %273, %cst_200 [0] : vector<12x96xf32> to vector<96xf32>
    %275 = vector.shape_cast %274 : vector<96xf32> to vector<1x96xf32>
    %276 = vector.extract_strided_slice %275 {offsets = [0, 0], sizes = [1, 16], strides = [1, 1]} : vector<1x96xf32> to vector<1x16xf32>
    %277 = vector.extract_strided_slice %275 {offsets = [0, 16], sizes = [1, 16], strides = [1, 1]} : vector<1x96xf32> to vector<1x16xf32>
    %278 = arith.addf %276, %277 : vector<1x16xf32>
    %279 = vector.extract_strided_slice %275 {offsets = [0, 32], sizes = [1, 16], strides = [1, 1]} : vector<1x96xf32> to vector<1x16xf32>
    %280 = arith.addf %278, %279 : vector<1x16xf32>
    %281 = vector.extract_strided_slice %275 {offsets = [0, 48], sizes = [1, 16], strides = [1, 1]} : vector<1x96xf32> to vector<1x16xf32>
    %282 = arith.addf %280, %281 : vector<1x16xf32>
    %283 = vector.extract_strided_slice %275 {offsets = [0, 64], sizes = [1, 16], strides = [1, 1]} : vector<1x96xf32> to vector<1x16xf32>
    %284 = arith.addf %282, %283 : vector<1x16xf32>
    %285 = vector.extract_strided_slice %275 {offsets = [0, 80], sizes = [1, 16], strides = [1, 1]} : vector<1x96xf32> to vector<1x16xf32>
    %286 = arith.addf %284, %285 : vector<1x16xf32>
    %cst_201 = arith.constant 0.013888889 : f32
    %287 = vector.broadcast %cst_201 : f32 to vector<1x16xf32>
    %288 = arith.mulf %286, %287 : vector<1x16xf32>
    %289 = tpu.concatenate %288, %288, %288, %288, %288, %288 in 1 : vector<1x16xf32>, vector<1x16xf32>, vector<1x16xf32>, vector<1x16xf32>, vector<1x16xf32>, vector<1x16xf32> -> vector<1x96xf32>
    %290 = vector.broadcast %289 : vector<1x96xf32> to vector<12x96xf32>
    %291 = arith.subf %273, %290 : vector<12x96xf32>
    %292 = arith.mulf %291, %291 : vector<12x96xf32>
    %cst_202 = arith.constant dense<0.000000e+00> : vector<96xf32>
    %293 = vector.multi_reduction <add>, %292, %cst_202 [0] : vector<12x96xf32> to vector<96xf32>
    %294 = vector.shape_cast %293 : vector<96xf32> to vector<1x96xf32>
    %295 = vector.extract_strided_slice %294 {offsets = [0, 0], sizes = [1, 16], strides = [1, 1]} : vector<1x96xf32> to vector<1x16xf32>
    %296 = vector.extract_strided_slice %294 {offsets = [0, 16], sizes = [1, 16], strides = [1, 1]} : vector<1x96xf32> to vector<1x16xf32>
    %297 = arith.addf %295, %296 : vector<1x16xf32>
    %298 = vector.extract_strided_slice %294 {offsets = [0, 32], sizes = [1, 16], strides = [1, 1]} : vector<1x96xf32> to vector<1x16xf32>
    %299 = arith.addf %297, %298 : vector<1x16xf32>
    %300 = vector.extract_strided_slice %294 {offsets = [0, 48], sizes = [1, 16], strides = [1, 1]} : vector<1x96xf32> to vector<1x16xf32>
    %301 = arith.addf %299, %300 : vector<1x16xf32>
    %302 = vector.extract_strided_slice %294 {offsets = [0, 64], sizes = [1, 16], strides = [1, 1]} : vector<1x96xf32> to vector<1x16xf32>
    %303 = arith.addf %301, %302 : vector<1x16xf32>
    %304 = vector.extract_strided_slice %294 {offsets = [0, 80], sizes = [1, 16], strides = [1, 1]} : vector<1x96xf32> to vector<1x16xf32>
    %305 = arith.addf %303, %304 : vector<1x16xf32>
    %cst_203 = arith.constant 0.013888889 : f32
    %306 = vector.broadcast %cst_203 : f32 to vector<1x16xf32>
    %307 = arith.mulf %305, %306 : vector<1x16xf32>
    %308 = tpu.concatenate %307, %307, %307, %307, %307, %307 in 1 : vector<1x16xf32>, vector<1x16xf32>, vector<1x16xf32>, vector<1x16xf32>, vector<1x16xf32>, vector<1x16xf32> -> vector<1x96xf32>
    %cst_204 = arith.constant 9.99999974E-6 : f32
    %309 = vector.broadcast %cst_204 : f32 to vector<1x96xf32>
    %310 = arith.addf %308, %309 : vector<1x96xf32>
    %311 = math.rsqrt %310 : vector<1x96xf32>
    %c10_205 = arith.constant 10 : index
    %c0_206 = arith.constant 0 : index
    %312 = vector.load %arg7[%c10_205, %c0_206] : memref<14x192xf32, #tpu.memory_space<vmem>>, vector<1x96xf32>
    %313 = arith.mulf %311, %312 : vector<1x96xf32>
    %314 = vector.broadcast %313 : vector<1x96xf32> to vector<12x96xf32>
    %315 = arith.mulf %291, %314 : vector<12x96xf32>
    %c11_207 = arith.constant 11 : index
    %c0_208 = arith.constant 0 : index
    %316 = vector.load %arg7[%c11_207, %c0_208] : memref<14x192xf32, #tpu.memory_space<vmem>>, vector<1x96xf32>
    %317 = vector.broadcast %316 : vector<1x96xf32> to vector<12x96xf32>
    %318 = arith.addf %315, %317 : vector<12x96xf32>
    %cst_209 = arith.constant 0.000000e+00 : f32
    %319 = vector.broadcast %cst_209 : f32 to vector<2x96xf32>
    %320 = tpu.concatenate %319, %318, %319 in 0 : vector<2x96xf32>, vector<12x96xf32>, vector<2x96xf32> -> vector<16x96xf32>
    %321 = arith.truncf %320 : vector<16x96xf32> to vector<16x96xbf16>
    %c0_210 = arith.constant 0 : index
    %c0_211 = arith.constant 0 : index
    %322 = vector.load %arg11[%c0_210, %c0_211] : memref<16x96xbf16, #tpu.memory_space<vmem>>, vector<16x96xbf16>
    tpu.vector_store %arg11[%c0_210, %c0_211], %321 {strides = array<i32>} : memref<16x96xbf16, #tpu.memory_space<vmem>>, vector<16x96xbf16>,
    %c12_212 = arith.constant 12 : index
    %c0_213 = arith.constant 0 : index
    %323 = vector.load %arg7[%c12_212, %c0_213] : memref<14x192xf32, #tpu.memory_space<vmem>>, vector<1x64xf32>
    %c2_214 = arith.constant 2 : index
    %c0_215 = arith.constant 0 : index
    %324 = vector.load %arg11[%c2_214, %c0_215] : memref<16x96xbf16, #tpu.memory_space<vmem>>, vector<2x96xbf16>
    %c0_216 = arith.constant 0 : index
    %c0_217 = arith.constant 0 : index
    %c0_218 = arith.constant 0 : index
    %325 = vector.load %arg5[%c0_216, %c0_217, %c0_218] : memref<6x96x64xbf16, #tpu.memory_space<vmem>>, vector<1x96x64xbf16>
    %326 = vector.shape_cast %325 : vector<1x96x64xbf16> to vector<96x64xbf16>
    %cst_219 = arith.constant dense<0.000000e+00> : vector<2x64xf32>
    %327 = tpu.matmul %324, %326, %cst_219 {dimension_numbers = #tpu.dot_dimension_numbers<[1], [0], [0], [1], [0, 0, 1, 1], [], []>} : vector<2x96xbf16>, vector<96x64xbf16>, vector<2x64xf32> -> vector<2x64xf32>
    %328 = vector.broadcast %323 : vector<1x64xf32> to vector<2x64xf32>
    %329 = arith.addf %328, %327 : vector<2x64xf32>
    %c4_220 = arith.constant 4 : index
    %c0_221 = arith.constant 0 : index
    %330 = vector.load %arg11[%c4_220, %c0_221] : memref<16x96xbf16, #tpu.memory_space<vmem>>, vector<2x96xbf16>
    %c1_222 = arith.constant 1 : index
    %c0_223 = arith.constant 0 : index
    %c0_224 = arith.constant 0 : index
    %331 = vector.load %arg5[%c1_222, %c0_223, %c0_224] : memref<6x96x64xbf16, #tpu.memory_space<vmem>>, vector<1x96x64xbf16>
    %332 = vector.shape_cast %331 : vector<1x96x64xbf16> to vector<96x64xbf16>
    %cst_225 = arith.constant dense<0.000000e+00> : vector<2x64xf32>
    %333 = tpu.matmul %330, %332, %cst_225 {dimension_numbers = #tpu.dot_dimension_numbers<[1], [0], [0], [1], [0, 0, 1, 1], [], []>} : vector<2x96xbf16>, vector<96x64xbf16>, vector<2x64xf32> -> vector<2x64xf32>
    %334 = arith.addf %329, %333 : vector<2x64xf32>
    %c6_226 = arith.constant 6 : index
    %c0_227 = arith.constant 0 : index
    %335 = vector.load %arg11[%c6_226, %c0_227] : memref<16x96xbf16, #tpu.memory_space<vmem>>, vector<2x96xbf16>
    %c2_228 = arith.constant 2 : index
    %c0_229 = arith.constant 0 : index
    %c0_230 = arith.constant 0 : index
    %336 = vector.load %arg5[%c2_228, %c0_229, %c0_230] : memref<6x96x64xbf16, #tpu.memory_space<vmem>>, vector<1x96x64xbf16>
    %337 = vector.shape_cast %336 : vector<1x96x64xbf16> to vector<96x64xbf16>
    %cst_231 = arith.constant dense<0.000000e+00> : vector<2x64xf32>
    %338 = tpu.matmul %335, %337, %cst_231 {dimension_numbers = #tpu.dot_dimension_numbers<[1], [0], [0], [1], [0, 0, 1, 1], [], []>} : vector<2x96xbf16>, vector<96x64xbf16>, vector<2x64xf32> -> vector<2x64xf32>
    %339 = arith.addf %334, %338 : vector<2x64xf32>
    %c8_232 = arith.constant 8 : index
    %c0_233 = arith.constant 0 : index
    %340 = vector.load %arg11[%c8_232, %c0_233] : memref<16x96xbf16, #tpu.memory_space<vmem>>, vector<2x96xbf16>
    %c3_234 = arith.constant 3 : index
    %c0_235 = arith.constant 0 : index
    %c0_236 = arith.constant 0 : index
    %341 = vector.load %arg5[%c3_234, %c0_235, %c0_236] : memref<6x96x64xbf16, #tpu.memory_space<vmem>>, vector<1x96x64xbf16>
    %342 = vector.shape_cast %341 : vector<1x96x64xbf16> to vector<96x64xbf16>
    %cst_237 = arith.constant dense<0.000000e+00> : vector<2x64xf32>
    %343 = tpu.matmul %340, %342, %cst_237 {dimension_numbers = #tpu.dot_dimension_numbers<[1], [0], [0], [1], [0, 0, 1, 1], [], []>} : vector<2x96xbf16>, vector<96x64xbf16>, vector<2x64xf32> -> vector<2x64xf32>
    %344 = arith.addf %339, %343 : vector<2x64xf32>
    %c10_238 = arith.constant 10 : index
    %c0_239 = arith.constant 0 : index
    %345 = vector.load %arg11[%c10_238, %c0_239] : memref<16x96xbf16, #tpu.memory_space<vmem>>, vector<2x96xbf16>
    %c4_240 = arith.constant 4 : index
    %c0_241 = arith.constant 0 : index
    %c0_242 = arith.constant 0 : index
    %346 = vector.load %arg5[%c4_240, %c0_241, %c0_242] : memref<6x96x64xbf16, #tpu.memory_space<vmem>>, vector<1x96x64xbf16>
    %347 = vector.shape_cast %346 : vector<1x96x64xbf16> to vector<96x64xbf16>
    %cst_243 = arith.constant dense<0.000000e+00> : vector<2x64xf32>
    %348 = tpu.matmul %345, %347, %cst_243 {dimension_numbers = #tpu.dot_dimension_numbers<[1], [0], [0], [1], [0, 0, 1, 1], [], []>} : vector<2x96xbf16>, vector<96x64xbf16>, vector<2x64xf32> -> vector<2x64xf32>
    %349 = arith.addf %344, %348 : vector<2x64xf32>
    %c12_244 = arith.constant 12 : index
    %c0_245 = arith.constant 0 : index
    %350 = vector.load %arg11[%c12_244, %c0_245] : memref<16x96xbf16, #tpu.memory_space<vmem>>, vector<2x96xbf16>
    %c5_246 = arith.constant 5 : index
    %c0_247 = arith.constant 0 : index
    %c0_248 = arith.constant 0 : index
    %351 = vector.load %arg5[%c5_246, %c0_247, %c0_248] : memref<6x96x64xbf16, #tpu.memory_space<vmem>>, vector<1x96x64xbf16>
    %352 = vector.shape_cast %351 : vector<1x96x64xbf16> to vector<96x64xbf16>
    %cst_249 = arith.constant dense<0.000000e+00> : vector<2x64xf32>
    %353 = tpu.matmul %350, %352, %cst_249 {dimension_numbers = #tpu.dot_dimension_numbers<[1], [0], [0], [1], [0, 0, 1, 1], [], []>} : vector<2x96xbf16>, vector<96x64xbf16>, vector<2x64xf32> -> vector<2x64xf32>
    %354 = arith.addf %349, %353 : vector<2x64xf32>
    %cst_250 = arith.constant 0.000000e+00 : f32
    %355 = vector.broadcast %cst_250 : f32 to vector<2x64xf32>
    %356 = arith.maximumf %354, %355 : vector<2x64xf32>
    %357 = arith.truncf %356 : vector<2x64xf32> to vector<2x64xbf16>
    %c0_251 = arith.constant 0 : index
    %c0_252 = arith.constant 0 : index
    %358 = vector.load %arg6[%c0_251, %c0_252] : memref<64x2xbf16, #tpu.memory_space<vmem>>, vector<64x2xbf16>
    %cst_253 = arith.constant dense<0.000000e+00> : vector<2x2xf32>
    %359 = tpu.matmul %357, %358, %cst_253 {dimension_numbers = #tpu.dot_dimension_numbers<[1], [0], [0], [1], [0, 0, 1, 1], [], []>} : vector<2x64xbf16>, vector<64x2xbf16>, vector<2x2xf32> -> vector<2x2xf32>
    %c13 = arith.constant 13 : index
    %c0_254 = arith.constant 0 : index
    %360 = vector.load %arg7[%c13, %c0_254] : memref<14x192xf32, #tpu.memory_space<vmem>>, vector<1x2xf32>
    %361 = vector.broadcast %360 : vector<1x2xf32> to vector<2x2xf32>
    %362 = arith.addf %359, %361 : vector<2x2xf32>
    %c0_255 = arith.constant 0 : index
    %c0_256 = arith.constant 0 : index
    %363 = vector.load %arg8[%c0_255, %c0_256] : memref<2x2xf32, #tpu.memory_space<vmem>>, vector<2x2xf32>
    tpu.vector_store %arg8[%c0_255, %c0_256], %362 {strides = array<i32>} : memref<2x2xf32, #tpu.memory_space<vmem>>, vector<2x2xf32>,
    return
  }
}

</mosaic_0001>

<llo_original>
// kernel: tile.63
$region0: #{tile.63}
  #allocation0 [shape = 's32[1]{0}', space=sflag, size = 0x4, scoped, tag = 'scoped memory for tile.63']
  %s0 = inlined_call_operand.vmem [shape: f32[8], index: 0, kind: input, shape index: {}]
  %s1 = inlined_call_operand.vmem [shape: f32[14,8], index: 1, kind: output, shape index: {}]
  // Predicated region
  $region2: #{tile.63} parent=0 // pred_check
    _
  $region3: #{tile.63} parent=0 // pred_check_branch
    %3 = sbr.rel (0) target = $region5
  $region4: #{tile.63} parent=0 // pred_region
    _
  $region5: #{tile.63} parent=0 // pred_fallthru
    _
  %v4 = vld [vmem:[%s0] ss:$0 sm:$0xff]
  %5 = vst [vmem:[%s1] sm:$0xff] %v4
  %s6 = scalar_lea.vmem %s1, 8
  %7 = vst [vmem:[%s6] sm:$0xff] %v4

// kernel: tile.64
$region0: #{tile.64}
  %s0 = inlined_call_operand.vmem [shape: f32[14,8], index: 0, kind: input, shape index: {}]
  %s1 = inlined_call_operand.vmem [shape: f32[112], index: 1, kind: output, shape index: {}]
  $region1: #{tile.64} parent=0
    #allocation0 [shape = 'u8[4096]{0}', space=vmem, size = 0x1000, scoped, tag = 'scoped mem for output reshape']
    %v2 = vld [vmem:[%s0] sm:$0x1]
    %vm3 = vcmask 64512
    %4 = vst.msk [vmem:[#allocation0] sm:$0x1] %vm3, %v2
    %s5 = scalar_lea.vmem %s0, 13
    %v6 = vld [vmem:[%s5] sm:$0x1]
    %7 = vrot.lane.b32.xlu0 %v6, 104
    %v8 = vpop.permute.xlu0 %7
    %vm9 = vcmask 917312
    %10 = vst.msk [vmem:[#allocation0] sm:$0x1] %vm9, %v8
    %s11 = scalar_lea.vmem %s0, 12
    %v12 = vld [vmem:[%s11] sm:$0x1]
    %13 = vrot.lane.b32.xlu0 %v12, 96
    %v14 = vpop.permute.xlu0 %13
    %vm15 = vcmask 851712
    %16 = vst.msk [vmem:[#allocation0] sm:$0x1] %vm15, %v14
    %s17 = scalar_lea.vmem %s0, 11
    %v18 = vld [vmem:[%s17] sm:$0x1]
    %19 = vrot.lane.b32.xlu0 %v18, 88
    %v20 = vpop.permute.xlu0 %19
    %vm21 = vcmask 786112
    %22 = vst.msk [vmem:[#allocation0] sm:$0x1] %vm21, %v20
    %s23 = scalar_lea.vmem %s0, 10
    %v24 = vld [vmem:[%s23] sm:$0x1]
    %25 = vrot.lane.b32.xlu0 %v24, 80
    %v26 = vpop.permute.xlu0 %25
    %vm27 = vcmask 720512
    %28 = vst.msk [vmem:[#allocation0] sm:$0x1] %vm27, %v26
    %s29 = scalar_lea.vmem %s0, 9
    %v30 = vld [vmem:[%s29] sm:$0x1]
    %31 = vrot.lane.b32.xlu0 %v30, 72
    %v32 = vpop.permute.xlu0 %31
    %vm33 = vcmask 654912
    %34 = vst.msk [vmem:[#allocation0] sm:$0x1] %vm33, %v32
    %s35 = scalar_lea.vmem %s0, 8
    %v36 = vld [vmem:[%s35] sm:$0x1]
    %37 = vrot.lane.b32.xlu0 %v36, 64
    %v38 = vpop.permute.xlu0 %37
    %vm39 = vcmask 589312
    %40 = vst.msk [vmem:[#allocation0] sm:$0x1] %vm39, %v38
    %s41 = scalar_lea.vmem %s0, 7
    %v42 = vld [vmem:[%s41] sm:$0x1]
    %43 = vrot.lane.b32.xlu0 %v42, 56
    %v44 = vpop.permute.xlu0 %43
    %vm45 = vcmask 523712
    %46 = vst.msk [vmem:[#allocation0] sm:$0x1] %vm45, %v44
    %s47 = scalar_lea.vmem %s0, 6
    %v48 = vld [vmem:[%s47] sm:$0x1]
    %49 = vrot.lane.b32.xlu0 %v48, 48
    %v50 = vpop.permute.xlu0 %49
    %vm51 = vcmask 458112
    %52 = vst.msk [vmem:[#allocation0] sm:$0x1] %vm51, %v50
    %s53 = scalar_lea.vmem %s0, 5
    %v54 = vld [vmem:[%s53] sm:$0x1]
    %55 = vrot.lane.b32.xlu0 %v54, 40
    %v56 = vpop.permute.xlu0 %55
    %vm57 = vcmask 392512
    %58 = vst.msk [vmem:[#allocation0] sm:$0x1] %vm57, %v56
    %s59 = scalar_lea.vmem %s0, 4
    %v60 = vld [vmem:[%s59] sm:$0x1]
    %61 = vrot.lane.b32.xlu0 %v60, 32
    %v62 = vpop.permute.xlu0 %61
    %vm63 = vcmask 326912
    %64 = vst.msk [vmem:[#allocation0] sm:$0x1] %vm63, %v62
    %s65 = scalar_lea.vmem %s0, 3
    %v66 = vld [vmem:[%s65] sm:$0x1]
    %67 = vrot.lane.b32.xlu0 %v66, 24
    %v68 = vpop.permute.xlu0 %67
    %vm69 = vcmask 261312
    %70 = vst.msk [vmem:[#allocation0] sm:$0x1] %vm69, %v68
    %s71 = scalar_lea.vmem %s0, 2
    %v72 = vld [vmem:[%s71] sm:$0x1]
    %73 = vrot.lane.b32.xlu0 %v72, 16
    %v74 = vpop.permute.xlu0 %73
    %vm75 = vcmask 195712
    %76 = vst.msk [vmem:[#allocation0] sm:$0x1] %vm75, %v74
    %s77 = scalar_lea.vmem %s0, 1
    %v78 = vld [vmem:[%s77] sm:$0x1]
    %79 = vrot.lane.b32.xlu0 %v78, 8
    %v80 = vpop.permute.xlu0 %79
    %vm81 = vcmask 130112
    %82 = vst.msk [vmem:[#allocation0] sm:$0x1] %vm81, %v80
    %s84 = sshllo.u32 0, 1
    %v86 = vld [vmem:[#allocation0] sm:%s84]
    %s87 = sshllo.u32 0, 1
    %88 = vst [vmem:[%s1] sm:%s87] %v86

// kernel: tile.68
$region0: #{tile.68}
  #allocation0 [shape = 's32[1]{0}', space=sflag, size = 0x4, scoped, tag = 'scoped memory for tile.68']
  %s0 = inlined_call_operand.vmem [shape: f32[16], index: 0, kind: input, shape index: {}]
  %s1 = inlined_call_operand.vmem [shape: f32[12,16], index: 1, kind: output, shape index: {}]
  // Predicated region
  $region2: #{tile.68} parent=0 // pred_check
    _
  $region3: #{tile.68} parent=0 // pred_check_branch
    %3 = sbr.rel (0) target = $region5
  $region4: #{tile.68} parent=0 // pred_region
    _
  $region5: #{tile.68} parent=0 // pred_fallthru
    _
  %v4 = vld [vmem:[%s0] ss:$0 sm:$0xff]
  %5 = vst [vmem:[%s1] sm:$0xff] %v4
  %s6 = scalar_lea.vmem %s1, 8
  %7 = vst [vmem:[%s6] sm:$0xff] %v4

// kernel: tile.73
$region0: #{tile.73}
  #allocation0 [shape = 's32[1]{0}', space=sflag, size = 0x4, scoped, tag = 'scoped memory for tile.73']
  %s0 = inlined_call_operand.vmem [shape: f32[16], index: 0, kind: input, shape index: {}]
  %s1 = inlined_call_operand.vmem [shape: f32[6,16], index: 1, kind: output, shape index: {}]
  // Predicated region
  $region2: #{tile.73} parent=0 // pred_check
    _
  $region3: #{tile.73} parent=0 // pred_check_branch
    %3 = sbr.rel (0) target = $region5
  $region4: #{tile.73} parent=0 // pred_region
    _
  $region5: #{tile.73} parent=0 // pred_fallthru
    _
  %v4 = vld [vmem:[%s0] ss:$0 sm:$0xff]
  %5 = vst [vmem:[%s1] sm:$0xff] %v4

// kernel: tile.74
$region0: #{tile.74}
  %s0 = inlined_call_operand.vmem [shape: f32[6,16], index: 0, kind: input, shape index: {}]
  %s1 = inlined_call_operand.vmem [shape: f32[96], index: 1, kind: output, shape index: {}]
  $region1: #{tile.74} parent=0
    #allocation0 [shape = 'u8[4096]{0}', space=vmem, size = 0x1000, scoped, tag = 'scoped mem for output reshape']
    %v2 = vld [vmem:[%s0] sm:$0x1]
    %vm3 = vcmask 130048
    %4 = vst.msk [vmem:[#allocation0] sm:$0x1] %vm3, %v2
    %s5 = scalar_lea.vmem %s0, 5
    %v6 = vld [vmem:[%s5] sm:$0x1]
    %7 = vrot.lane.b32.xlu0 %v6, 80
    %v8 = vpop.permute.xlu0 %7
    %vm9 = vcmask 786048
    %10 = vst.msk [vmem:[#allocation0] sm:$0x1] %vm9, %v8
    %s11 = scalar_lea.vmem %s0, 4
    %v12 = vld [vmem:[%s11] sm:$0x1]
    %13 = vrot.lane.b32.xlu0 %v12, 64
    %v14 = vpop.permute.xlu0 %13
    %vm15 = vcmask 654848
    %16 = vst.msk [vmem:[#allocation0] sm:$0x1] %vm15, %v14
    %s17 = scalar_lea.vmem %s0, 3
    %v18 = vld [vmem:[%s17] sm:$0x1]
    %19 = vrot.lane.b32.xlu0 %v18, 48
    %v20 = vpop.permute.xlu0 %19
    %vm21 = vcmask 523648
    %22 = vst.msk [vmem:[#allocation0] sm:$0x1] %vm21, %v20
    %s23 = scalar_lea.vmem %s0, 2
    %v24 = vld [vmem:[%s23] sm:$0x1]
    %25 = vrot.lane.b32.xlu0 %v24, 32
    %v26 = vpop.permute.xlu0 %25
    %vm27 = vcmask 392448
    %28 = vst.msk [vmem:[#allocation0] sm:$0x1] %vm27, %v26
    %s29 = scalar_lea.vmem %s0, 1
    %v30 = vld [vmem:[%s29] sm:$0x1]
    %31 = vrot.lane.b32.xlu0 %v30, 16
    %v32 = vpop.permute.xlu0 %31
    %vm33 = vcmask 261248
    %34 = vst.msk [vmem:[#allocation0] sm:$0x1] %vm33, %v32
    %s36 = sshllo.u32 0, 1
    %v38 = vld [vmem:[#allocation0] sm:%s36]
    %s39 = sshllo.u32 0, 1
    %40 = vst [vmem:[%s1] sm:%s39] %v38

// kernel: deepnet_forward.1
$region0: #{deepnet_forward.1}
  #allocation0 [shape = 'u32[]', space=smem, size = 0x4, offset = 0x4, fixed_abs, tag = 'smem constant byte address 0x4 - core index']
  #allocation1 [shape = 'u32[144,128]{1,0:T(1,128)}', space=vmem, size = 0x12000, scoped, tag = 'internal scratch']
  #allocation2 [shape = 'bf16[28,112]{1,0:T(8,128)(2,1)}', space=vmem, size = 0x2000, scoped, tag = 'scratch operand']
  #allocation3 [shape = 'bf16[24,192]{1,0:T(8,128)(2,1)}', space=vmem, size = 0x3000, scoped, tag = 'scratch operand']
  #allocation4 [shape = 'bf16[16,96]{1,0:T(16,128)(2,1)}', space=vmem, size = 0x1000, scoped, tag = 'scratch operand']
  #allocation5 [shape = 'bf16[16,96]{1,0:T(16,128)(2,1)}', space=vmem, size = 0x1000, scoped, tag = 'scratch operand']
  %s0 = inlined_call_operand.vmem [shape: bf16[28,84], index: 0, kind: input, shape index: {}]
  %s1 = inlined_call_operand.vmem [shape: bf16[84,112], index: 1, kind: input, shape index: {}]
  %s2 = inlined_call_operand.vmem [shape: bf16[3,112,192], index: 2, kind: input, shape index: {}]
  %s3 = inlined_call_operand.vmem [shape: bf16[12,96,96], index: 3, kind: input, shape index: {}]
  %s4 = inlined_call_operand.vmem [shape: bf16[2,192,96], index: 4, kind: input, shape index: {}]
  %s5 = inlined_call_operand.vmem [shape: bf16[6,96,64], index: 5, kind: input, shape index: {}]
  %s6 = inlined_call_operand.vmem [shape: bf16[64,2], index: 6, kind: input, shape index: {}]
  %s7 = inlined_call_operand.vmem [shape: f32[14,192], index: 7, kind: input, shape index: {}]
  %s8 = inlined_call_operand.hbm [shape: f32[2,2], index: 8, kind: output, shape index: {}]
  %s9 = sld [smem:[#allocation0]]
  $region42: #{deepnet_forward.1} parent=0
    _
  %s11 = ssub.s32 1, %s9
  %s12 = scalar_select 0, %s11, %s9
  $region1: #{deepnet_forward.1} parent=0
    #allocation6 [shape = 'u8[1024]{0}', space=vmem, size = 0x400, scoped, tag = 'output window, operand 0, single buffered']
    #allocation7 [shape = 's32[1]{0}', space=sflag, size = 0x4, scoped, tag = 'scoped memory for deepnet_forward.1']
    %13 = vsyncpa [#allocation7], 0
    // Predicated region
    $region2: #{deepnet_forward.1} parent=1 // pred_check
      _
    $region3: #{deepnet_forward.1} parent=1 // pred_check_branch
      %15 = sbr.rel (0) target = $region5
    $region4: #{deepnet_forward.1} parent=1 // pred_region
      _
    $region5: #{deepnet_forward.1} parent=1 // pred_fallthru
      _
    // Predicated region
    $region6: #{deepnet_forward.1} parent=1 // pred_check
      _
    $region7: #{deepnet_forward.1} parent=1 // pred_check_branch
      %17 = sbr.rel (0) target = $region9
    $region8: #{deepnet_forward.1} parent=1 // pred_region
      _
    $region9: #{deepnet_forward.1} parent=1 // pred_fallthru
      _
    // Predicated region
    $region10: #{deepnet_forward.1} parent=1 // pred_check
      _
    $region11: #{deepnet_forward.1} parent=1 // pred_check_branch
      %19 = sbr.rel (0) target = $region13
    $region12: #{deepnet_forward.1} parent=1 // pred_region
      _
    $region13: #{deepnet_forward.1} parent=1 // pred_fallthru
      _
    // Predicated region
    $region14: #{deepnet_forward.1} parent=1 // pred_check
      _
    $region15: #{deepnet_forward.1} parent=1 // pred_check_branch
      %21 = sbr.rel (0) target = $region17
    $region16: #{deepnet_forward.1} parent=1 // pred_region
      _
    $region17: #{deepnet_forward.1} parent=1 // pred_fallthru
      _
    // Predicated region
    $region18: #{deepnet_forward.1} parent=1 // pred_check
      _
    $region19: #{deepnet_forward.1} parent=1 // pred_check_branch
      %23 = sbr.rel (0) target = $region21
    $region20: #{deepnet_forward.1} parent=1 // pred_region
      _
    $region21: #{deepnet_forward.1} parent=1 // pred_fallthru
      _
    // Predicated region
    $region22: #{deepnet_forward.1} parent=1 // pred_check
      _
    $region23: #{deepnet_forward.1} parent=1 // pred_check_branch
      %25 = sbr.rel (0) target = $region25
    $region24: #{deepnet_forward.1} parent=1 // pred_region
      _
    $region25: #{deepnet_forward.1} parent=1 // pred_fallthru
      _
    // Predicated region
    $region26: #{deepnet_forward.1} parent=1 // pred_check
      _
    $region27: #{deepnet_forward.1} parent=1 // pred_check_branch
      %27 = sbr.rel (0) target = $region29
    $region28: #{deepnet_forward.1} parent=1 // pred_region
      _
    $region29: #{deepnet_forward.1} parent=1 // pred_fallthru
      _
    // Predicated region
    $region30: #{deepnet_forward.1} parent=1 // pred_check
      _
    $region31: #{deepnet_forward.1} parent=1 // pred_check_branch
      %29 = sbr.rel (0) target = $region33
    $region32: #{deepnet_forward.1} parent=1 // pred_region
      _
    $region33: #{deepnet_forward.1} parent=1 // pred_fallthru
      _
    %v31 = vld [vmem:[%s0] sm:$0xf]
    %v32 = vld [vmem:[%s0 + $0x4] sm:$0xf]
    %v33 = vld [vmem:[%s0 + $0x8] sm:$0xf]
    %v34 = vld [vmem:[%s0 + $0xc] sm:$0x3]
    %v35 = vld [vmem:[%s1] sm:$0xf]
    %v36 = vld [vmem:[%s1 + $0x4] sm:$0xf]
    %v37 = vld [vmem:[%s1 + $0x8] sm:$0xf]
    %v38 = vld [vmem:[%s1 + $0xc] sm:$0xf]
    %v39 = vld [vmem:[%s1 + $0x10] sm:$0xf]
    %v40 = vld [vmem:[%s1 + $0x14] sm:$0xf]
    %v41 = vld [vmem:[%s1 + $0x18] sm:$0xf]
    %v42 = vld [vmem:[%s1 + $0x1c] sm:$0xf]
    %v43 = vld [vmem:[%s1 + $0x20] sm:$0xf]
    %v44 = vld [vmem:[%s1 + $0x24] sm:$0xf]
    %v45 = vld [vmem:[%s1 + $0x28] sm:$0x3]
    %v46 = vld [vmem:[%s7] ss:$0 sm:$0xff]
    %v51 = vunpack.c.l.b16 %v31
    %v52 = vunpack.c.l.b16 %v32
    %v53 = vunpack.c.l.b16 %v33
    %v54 = vunpack.c.l.b16 %v34
    %v55 = vpack.c.b16 %v52, %v51
    %v56 = vpack.c.b16 %v54, %v53
    %v68 = vunpack.c.l.b16 %v35
    %v69 = vunpack.c.l.b16 %v36
    %v70 = vunpack.c.l.b16 %v37
    %v71 = vunpack.c.l.b16 %v38
    %v72 = vunpack.c.l.b16 %v39
    %v73 = vunpack.c.l.b16 %v40
    %v74 = vunpack.c.l.b16 %v41
    %v75 = vunpack.c.l.b16 %v42
    %v76 = vunpack.c.l.b16 %v43
    %v77 = vunpack.c.l.b16 %v44
    %v78 = vunpack.c.l.b16 %v45
    %v79 = vpack.c.b16 %v69, %v68
    %v80 = vpack.c.b16 %v71, %v70
    %v81 = vpack.c.b16 %v73, %v72
    %v82 = vpack.c.b16 %v75, %v74
    %v83 = vpack.c.b16 %v77, %v76
    %v84 = vpack.c.b16 %v78, %v78
    %vm90 = vcmask 687104
    %v92 = vsel %vm90, %v55, 0
    %v95 = vsel %vm90, %v56, 0
    %vm97 = vcmask 1041408
    %v99 = vsel %vm97, %v84, 0
    %101 = vmatprep.subr.bf16.mxu0 0
    %102 = vmatpush1.bf16.msra.mxu0 %v79
    %103 = vmatprep.subr.bf16.mxu0 0
    %104 = vmatpush1.bf16.msra.mxu0 %v80
    %105 = vmatprep.subr.bf16.mxu0 0
    %106 = vmatpush1.bf16.msra.mxu0 %v81
    %107 = vmatprep.subr.bf16.mxu0 0
    %108 = vmatpush1.bf16.msra.mxu0 %v82
    %109 = vmatprep.subr.bf16.mxu0 0
    %110 = vmatpush1.bf16.msra.mxu0 %v83
    %111 = vmatprep.subr.bf16.mxu0 0
    %112 = vmatpush1.bf16.msra.mxu0 %v99
    %113 = vmatprep.subr.bf16.mxu0 0
    %114 = vmatpush1.bf16.msra.mxu0 0
    %115 = vmatprep.subr.bf16.mxu0 0
    %116 = vmatpush1.bf16.msra.mxu0 0
    %117 = vmatprep.subr.bf16.mxu0 0
    %118 = vmatpush1.bf16.msra.mxu0 0
    %119 = vmatprep.subr.bf16.mxu0 0
    %120 = vmatpush1.bf16.msra.mxu0 0
    %121 = vmatprep.subr.bf16.mxu0 0
    %122 = vmatpush1.bf16.msra.mxu0 0
    %123 = vmatprep.subr.bf16.mxu0 0
    %124 = vmatpush1.bf16.msra.mxu0 0
    %125 = vmatprep.subr.bf16.mxu0 0
    %126 = vmatpush1.bf16.msra.mxu0 0
    %127 = vmatprep.subr.bf16.mxu0 0
    %128 = vmatpush1.bf16.msra.mxu0 0
    %129 = vmatprep.subr.bf16.mxu0 0
    %130 = vmatpush1.bf16.msra.mxu0 0
    %131 = vmatprep.subr.bf16.mxu0 0
    %132 = vmatpush1.bf16.msra.mxu0 0
    %133 = vmatprep.mubr.bf16.mxu0 0
    %134 = vmatmul.mubr.bf16.gmra.mrb[0].mxu0 %v92
    %v135 = vpop.f32.mrb[0].mxu0
    %v136 = vadd.f32 %v46, %v135
    %v137 = vpop.f32.mrb[0].mxu0
    %v138 = vpop.f32.mrb[0].mxu0
    %v139 = vadd.f32 %v46, %v138
    %v140 = vpop.f32.mrb[0].mxu0
    %141 = vmatprep.mubr.bf16.mxu0 0
    %142 = vmatmul.mubr.bf16.gmra.mrb[0].mxu0 %v95
    %v143 = vpop.f32.mrb[0].mxu0
    %v144 = vadd.f32 %v46, %v143
    %v145 = vpop.f32.mrb[0].mxu0
    %v146 = vpop.f32.mrb[0].mxu0
    %v147 = vadd.f32 %v46, %v146
    %v148 = vpop.f32.mrb[0].mxu0
    %149 = vdwg.mxu0
    %v150 = vmax.f32 %v136, 0.0
    %v151 = vmax.f32 %v139, 0.0
    %v152 = vmax.f32 %v144, 0.0
    %v153 = vmax.f32 %v147, 0.0
    %v154 = vpack.c.bf16 %v151, %v150
    %v155 = vpack.c.bf16 %v153, %v152
    %v158 = vunpack.c.l.b16 %v154
    %v159 = vunpack.c.h.b16 %v154
    %v160 = vunpack.c.l.b16 %v155
    %v161 = vunpack.c.h.b16 %v155
    %v162 = vpack.c.b16 %v158, %v158
    %v163 = vpack.c.b16 %v159, %v159
    %v164 = vpack.c.b16 %v160, %v160
    %v165 = vpack.c.b16 %v161, %v161
    %vm170 = vcmask 912384
    %171 = vst.msk [vmem:[#allocation2] sm:$0xf] %vm170, %v162
    %172 = vst.msk [vmem:[#allocation2 + $0x4] sm:$0xf] %vm170, %v163
    %173 = vst.msk [vmem:[#allocation2 + $0x8] sm:$0xf] %vm170, %v164
    %vm174 = vcmask 910336
    %175 = vst.msk [vmem:[#allocation2 + $0xc] sm:$0x3] %vm174, %v165
    %s176 = scalar_lea.vmem %s7, 1
    %v177 = vld [vmem:[%s176] ss:$8 sm:$0x3]
    %v178 = vld [vmem:[#allocation2] sm:$0xf]
    %v179 = vld [vmem:[#allocation2 + $0x4] sm:$0xf]
    %v180 = vld [vmem:[#allocation2 + $0x8] sm:$0xf]
    %v181 = vld [vmem:[%s2] sm:$0xff]
    %v182 = vld [vmem:[%s2 + $0x8] sm:$0xff]
    %v183 = vld [vmem:[%s2 + $0x10] sm:$0xff]
    %v184 = vld [vmem:[%s2 + $0x18] sm:$0xff]
    %v185 = vld [vmem:[%s2 + $0x20] sm:$0xff]
    %v186 = vld [vmem:[%s2 + $0x28] sm:$0xff]
    %v187 = vld [vmem:[%s2 + $0x30] sm:$0xff]
    %v188 = vld [vmem:[%s2 + $0x38] sm:$0xff]
    %v189 = vld [vmem:[%s2 + $0x40] sm:$0xff]
    %v190 = vld [vmem:[%s2 + $0x48] sm:$0xff]
    %v191 = vld [vmem:[%s2 + $0x50] sm:$0xff]
    %v192 = vld [vmem:[%s2 + $0x58] sm:$0xff]
    %v193 = vld [vmem:[%s2 + $0x60] sm:$0xff]
    %v194 = vld [vmem:[%s2 + $0x68] sm:$0xff]
    %v198 = vunpack.c.l.b16 %v178
    %v199 = vunpack.c.l.b16 %v179
    %v200 = vunpack.c.l.b16 %v180
    %v201 = vpack.c.b16 %v199, %v198
    %v202 = vpack.c.b16 %v200, %v200
    %v217 = vunpack.c.l.b16 %v181
    %v218 = vunpack.c.h.b16 %v181
    %v219 = vunpack.c.l.b16 %v182
    %v220 = vunpack.c.h.b16 %v182
    %v221 = vunpack.c.l.b16 %v183
    %v222 = vunpack.c.h.b16 %v183
    %v223 = vunpack.c.l.b16 %v184
    %v224 = vunpack.c.h.b16 %v184
    %v225 = vunpack.c.l.b16 %v185
    %v226 = vunpack.c.h.b16 %v185
    %v227 = vunpack.c.l.b16 %v186
    %v228 = vunpack.c.h.b16 %v186
    %v229 = vunpack.c.l.b16 %v187
    %v230 = vunpack.c.h.b16 %v187
    %v231 = vunpack.c.l.b16 %v188
    %v232 = vunpack.c.h.b16 %v188
    %v233 = vunpack.c.l.b16 %v189
    %v234 = vunpack.c.h.b16 %v189
    %v235 = vunpack.c.l.b16 %v190
    %v236 = vunpack.c.h.b16 %v190
    %v237 = vunpack.c.l.b16 %v191
    %v238 = vunpack.c.h.b16 %v191
    %v239 = vunpack.c.l.b16 %v192
    %v240 = vunpack.c.h.b16 %v192
    %v241 = vunpack.c.l.b16 %v193
    %v242 = vunpack.c.h.b16 %v193
    %v243 = vunpack.c.l.b16 %v194
    %v244 = vunpack.c.h.b16 %v194
    %v245 = vpack.c.b16 %v219, %v217
    %v246 = vpack.c.b16 %v220, %v218
    %v247 = vpack.c.b16 %v223, %v221
    %v248 = vpack.c.b16 %v224, %v222
    %v249 = vpack.c.b16 %v227, %v225
    %v250 = vpack.c.b16 %v228, %v226
    %v251 = vpack.c.b16 %v231, %v229
    %v252 = vpack.c.b16 %v232, %v230
    %v253 = vpack.c.b16 %v235, %v233
    %v254 = vpack.c.b16 %v236, %v234
    %v255 = vpack.c.b16 %v239, %v237
    %v256 = vpack.c.b16 %v240, %v238
    %v257 = vpack.c.b16 %v243, %v241
    %v258 = vpack.c.b16 %v244, %v242
    %vm273 = vcmask 916480
    %v275 = vsel %vm273, %v201, 0
    %v278 = vsel %vm273, %v202, 0
    %280 = vmatprep.subr.bf16.mxu0 %v246
    %281 = vmatpush1.bf16.msra.mxu0 %v245
    %282 = vmatprep.subr.bf16.mxu0 %v248
    %283 = vmatpush1.bf16.msra.mxu0 %v247
    %284 = vmatprep.subr.bf16.mxu0 %v250
    %285 = vmatpush1.bf16.msra.mxu0 %v249
    %286 = vmatprep.subr.bf16.mxu0 %v252
    %287 = vmatpush1.bf16.msra.mxu0 %v251
    %288 = vmatprep.subr.bf16.mxu0 %v254
    %289 = vmatpush1.bf16.msra.mxu0 %v253
    %290 = vmatprep.subr.bf16.mxu0 %v256
    %291 = vmatpush1.bf16.msra.mxu0 %v255
    %292 = vmatprep.subr.bf16.mxu0 %v258
    %293 = vmatpush1.bf16.msra.mxu0 %v257
    %294 = vmatprep.subr.bf16.mxu0 0
    %295 = vmatpush1.bf16.msra.mxu0 0
    %296 = vmatprep.subr.bf16.mxu0 0
    %297 = vmatpush1.bf16.msra.mxu0 0
    %298 = vmatprep.subr.bf16.mxu0 0
    %299 = vmatpush1.bf16.msra.mxu0 0
    %300 = vmatprep.subr.bf16.mxu0 0
    %301 = vmatpush1.bf16.msra.mxu0 0
    %302 = vmatprep.subr.bf16.mxu0 0
    %303 = vmatpush1.bf16.msra.mxu0 0
    %304 = vmatprep.subr.bf16.mxu0 0
    %305 = vmatpush1.bf16.msra.mxu0 0
    %306 = vmatprep.subr.bf16.mxu0 0
    %307 = vmatpush1.bf16.msra.mxu0 0
    %308 = vmatprep.subr.bf16.mxu0 0
    %309 = vmatpush1.bf16.msra.mxu0 0
    %310 = vmatprep.subr.bf16.mxu0 0
    %311 = vmatpush1.bf16.msra.mxu0 0
    %312 = vmatprep.mubr.bf16.mxu0 0
    %313 = vmatmul.mubr.bf16.gmra.mrb[0].mxu0 %v275
    %v314 = vpop.f32.mrb[0].mxu0
    %v315 = vadd.f32 0.0, %v314
    %v316 = vpop.f32.mrb[0].mxu0
    %v317 = vadd.f32 0.0, %v316
    %v318 = vpop.f32.mrb[0].mxu0
    %v319 = vadd.f32 0.0, %v318
    %v320 = vpop.f32.mrb[0].mxu0
    %v321 = vadd.f32 0.0, %v320
    %322 = vmatprep.mubr.bf16.mxu0 0
    %323 = vmatmul.mubr.bf16.gmra.mrb[0].mxu0 %v278
    %v324 = vpop.f32.mrb[0].mxu0
    %v325 = vadd.f32 0.0, %v324
    %v326 = vpop.f32.mrb[0].mxu0
    %v327 = vadd.f32 0.0, %v326
    %v328 = vpop.f32.mrb[0].mxu0
    %v329 = vpop.f32.mrb[0].mxu0
    %330 = vdwg.mxu0
    %v332 = vlaneseq
    %v333 = vshrl.u32 %v332, 7
    %v334 = vsub.s32 0, %v333
    %v335 = vrot.slane %v177, %v334
    %v336 = vlaneseq
    %v337 = vshrl.u32 %v336, 7
    %v338 = vsub.s32 1, %v337
    %v339 = vrot.slane %v177, %v338
    %v342 = vadd.f32 %v335, %v315
    %v343 = vadd.f32 %v339, %v317
    %v344 = vadd.f32 %v335, %v319
    %v345 = vadd.f32 %v339, %v321
    %v346 = vadd.f32 %v335, %v325
    %v347 = vadd.f32 %v339, %v327
    %v348 = vld [vmem:[#allocation2] sm:$0xe]
    %v349 = vld [vmem:[#allocation2 + $0x4] sm:$0xf]
    %v350 = vld [vmem:[#allocation2 + $0x8] sm:$0xf]
    %v351 = vld [vmem:[#allocation2 + $0xc] sm:$0x1]
    %s352 = scalar_lea.vmem %s2, 112
    %v353 = vld [vmem:[%s352] sm:$0xff]
    %v354 = vld [vmem:[%s352 + $0x8] sm:$0xff]
    %v355 = vld [vmem:[%s352 + $0x10] sm:$0xff]
    %v356 = vld [vmem:[%s352 + $0x18] sm:$0xff]
    %v357 = vld [vmem:[%s352 + $0x20] sm:$0xff]
    %v358 = vld [vmem:[%s352 + $0x28] sm:$0xff]
    %v359 = vld [vmem:[%s352 + $0x30] sm:$0xff]
    %v360 = vld [vmem:[%s352 + $0x38] sm:$0xff]
    %v361 = vld [vmem:[%s352 + $0x40] sm:$0xff]
    %v362 = vld [vmem:[%s352 + $0x48] sm:$0xff]
    %v363 = vld [vmem:[%s352 + $0x50] sm:$0xff]
    %v364 = vld [vmem:[%s352 + $0x58] sm:$0xff]
    %v365 = vld [vmem:[%s352 + $0x60] sm:$0xff]
    %v366 = vld [vmem:[%s352 + $0x68] sm:$0xff]
    %v371 = vunpack.c.l.b16 %v348
    %v372 = vunpack.c.l.b16 %v349
    %v373 = vunpack.c.l.b16 %v350
    %v374 = vunpack.c.l.b16 %v351
    %v375 = vpack.c.b16 %v372, %v371
    %v376 = vpack.c.b16 %v374, %v373
    %vm377 = vcmask 1046528
    %v378 = vrot.slane %v375, 1
    %v379 = vrot.slane %v376, 1
    %v380 = vsel %vm377, %v378, %v379
    %v395 = vunpack.c.l.b16 %v353
    %v396 = vunpack.c.h.b16 %v353
    %v397 = vunpack.c.l.b16 %v354
    %v398 = vunpack.c.h.b16 %v354
    %v399 = vunpack.c.l.b16 %v355
    %v400 = vunpack.c.h.b16 %v355
    %v401 = vunpack.c.l.b16 %v356
    %v402 = vunpack.c.h.b16 %v356
    %v403 = vunpack.c.l.b16 %v357
    %v404 = vunpack.c.h.b16 %v357
    %v405 = vunpack.c.l.b16 %v358
    %v406 = vunpack.c.h.b16 %v358
    %v407 = vunpack.c.l.b16 %v359
    %v408 = vunpack.c.h.b16 %v359
    %v409 = vunpack.c.l.b16 %v360
    %v410 = vunpack.c.h.b16 %v360
    %v411 = vunpack.c.l.b16 %v361
    %v412 = vunpack.c.h.b16 %v361
    %v413 = vunpack.c.l.b16 %v362
    %v414 = vunpack.c.h.b16 %v362
    %v415 = vunpack.c.l.b16 %v363
    %v416 = vunpack.c.h.b16 %v363
    %v417 = vunpack.c.l.b16 %v364
    %v418 = vunpack.c.h.b16 %v364
    %v419 = vunpack.c.l.b16 %v365
    %v420 = vunpack.c.h.b16 %v365
    %v421 = vunpack.c.l.b16 %v366
    %v422 = vunpack.c.h.b16 %v366
    %v423 = vpack.c.b16 %v397, %v395
    %v424 = vpack.c.b16 %v398, %v396
    %v425 = vpack.c.b16 %v401, %v399
    %v426 = vpack.c.b16 %v402, %v400
    %v427 = vpack.c.b16 %v405, %v403
    %v428 = vpack.c.b16 %v406, %v404
    %v429 = vpack.c.b16 %v409, %v407
    %v430 = vpack.c.b16 %v410, %v408
    %v431 = vpack.c.b16 %v413, %v411
    %v432 = vpack.c.b16 %v414, %v412
    %v433 = vpack.c.b16 %v417, %v415
    %v434 = vpack.c.b16 %v418, %v416
    %v435 = vpack.c.b16 %v421, %v419
    %v436 = vpack.c.b16 %v422, %v420
    %v452 = vsel %vm273, %v380, 0
    %v455 = vsel %vm273, %v379, 0
    %457 = vmatprep.subr.bf16.mxu0 %v424
    %458 = vmatpush1.bf16.msra.mxu0 %v423
    %459 = vmatprep.subr.bf16.mxu0 %v426
    %460 = vmatpush1.bf16.msra.mxu0 %v425
    %461 = vmatprep.subr.bf16.mxu0 %v428
    %462 = vmatpush1.bf16.msra.mxu0 %v427
    %463 = vmatprep.subr.bf16.mxu0 %v430
    %464 = vmatpush1.bf16.msra.mxu0 %v429
    %465 = vmatprep.subr.bf16.mxu0 %v432
    %466 = vmatpush1.bf16.msra.mxu0 %v431
    %467 = vmatprep.subr.bf16.mxu0 %v434
    %468 = vmatpush1.bf16.msra.mxu0 %v433
    %469 = vmatprep.subr.bf16.mxu0 %v436
    %470 = vmatpush1.bf16.msra.mxu0 %v435
    %471 = vmatprep.subr.bf16.mxu0 0
    %472 = vmatpush1.bf16.msra.mxu0 0
    %473 = vmatprep.subr.bf16.mxu0 0
    %474 = vmatpush1.bf16.msra.mxu0 0
    %475 = vmatprep.subr.bf16.mxu0 0
    %476 = vmatpush1.bf16.msra.mxu0 0
    %477 = vmatprep.subr.bf16.mxu0 0
    %478 = vmatpush1.bf16.msra.mxu0 0
    %479 = vmatprep.subr.bf16.mxu0 0
    %480 = vmatpush1.bf16.msra.mxu0 0
    %481 = vmatprep.subr.bf16.mxu0 0
    %482 = vmatpush1.bf16.msra.mxu0 0
    %483 = vmatprep.subr.bf16.mxu0 0
    %484 = vmatpush1.bf16.msra.mxu0 0
    %485 = vmatprep.subr.bf16.mxu0 0
    %486 = vmatpush1.bf16.msra.mxu0 0
    %487 = vmatprep.subr.bf16.mxu0 0
    %488 = vmatpush1.bf16.msra.mxu0 0
    %489 = vmatprep.mubr.bf16.mxu0 0
    %490 = vmatmul.mubr.bf16.gmra.mrb[0].mxu0 %v452
    %v491 = vpop.f32.mrb[0].mxu0
    %v492 = vadd.f32 0.0, %v491
    %v493 = vpop.f32.mrb[0].mxu0
    %v494 = vadd.f32 0.0, %v493
    %v495 = vpop.f32.mrb[0].mxu0
    %v496 = vadd.f32 0.0, %v495
    %v497 = vpop.f32.mrb[0].mxu0
    %v498 = vadd.f32 0.0, %v497
    %499 = vmatprep.mubr.bf16.mxu0 0
    %500 = vmatmul.mubr.bf16.gmra.mrb[0].mxu0 %v455
    %v501 = vpop.f32.mrb[0].mxu0
    %v502 = vadd.f32 0.0, %v501
    %v503 = vpop.f32.mrb[0].mxu0
    %v504 = vadd.f32 0.0, %v503
    %v505 = vpop.f32.mrb[0].mxu0
    %v506 = vpop.f32.mrb[0].mxu0
    %507 = vdwg.mxu0
    %v508 = vadd.f32 %v342, %v492
    %v509 = vadd.f32 %v343, %v494
    %v510 = vadd.f32 %v344, %v496
    %v511 = vadd.f32 %v345, %v498
    %v512 = vadd.f32 %v346, %v502
    %v513 = vadd.f32 %v347, %v504
    %v514 = vld [vmem:[#allocation2] sm:$0xc]
    %v515 = vld [vmem:[#allocation2 + $0xc] sm:$0x3]
    %s516 = scalar_lea.vmem %s2, 224
    %v517 = vld [vmem:[%s516] sm:$0xff]
    %v518 = vld [vmem:[%s516 + $0x8] sm:$0xff]
    %v519 = vld [vmem:[%s516 + $0x10] sm:$0xff]
    %v520 = vld [vmem:[%s516 + $0x18] sm:$0xff]
    %v521 = vld [vmem:[%s516 + $0x20] sm:$0xff]
    %v522 = vld [vmem:[%s516 + $0x28] sm:$0xff]
    %v523 = vld [vmem:[%s516 + $0x30] sm:$0xff]
    %v524 = vld [vmem:[%s516 + $0x38] sm:$0xff]
    %v525 = vld [vmem:[%s516 + $0x40] sm:$0xff]
    %v526 = vld [vmem:[%s516 + $0x48] sm:$0xff]
    %v527 = vld [vmem:[%s516 + $0x50] sm:$0xff]
    %v528 = vld [vmem:[%s516 + $0x58] sm:$0xff]
    %v529 = vld [vmem:[%s516 + $0x60] sm:$0xff]
    %v530 = vld [vmem:[%s516 + $0x68] sm:$0xff]
    %v533 = vunpack.c.l.b16 %v514
    %v534 = vunpack.c.l.b16 %v515
    %v535 = vpack.c.b16 %v372, %v533
    %v536 = vpack.c.b16 %v534, %v373
    %vm537 = vcmask 1045504
    %v538 = vrot.slane %v535, 2
    %v539 = vrot.slane %v536, 2
    %v540 = vsel %vm537, %v538, %v539
    %v555 = vunpack.c.l.b16 %v517
    %v556 = vunpack.c.h.b16 %v517
    %v557 = vunpack.c.l.b16 %v518
    %v558 = vunpack.c.h.b16 %v518
    %v559 = vunpack.c.l.b16 %v519
    %v560 = vunpack.c.h.b16 %v519
    %v561 = vunpack.c.l.b16 %v520
    %v562 = vunpack.c.h.b16 %v520
    %v563 = vunpack.c.l.b16 %v521
    %v564 = vunpack.c.h.b16 %v521
    %v565 = vunpack.c.l.b16 %v522
    %v566 = vunpack.c.h.b16 %v522
    %v567 = vunpack.c.l.b16 %v523
    %v568 = vunpack.c.h.b16 %v523
    %v569 = vunpack.c.l.b16 %v524
    %v570 = vunpack.c.h.b16 %v524
    %v571 = vunpack.c.l.b16 %v525
    %v572 = vunpack.c.h.b16 %v525
    %v573 = vunpack.c.l.b16 %v526
    %v574 = vunpack.c.h.b16 %v526
    %v575 = vunpack.c.l.b16 %v527
    %v576 = vunpack.c.h.b16 %v527
    %v577 = vunpack.c.l.b16 %v528
    %v578 = vunpack.c.h.b16 %v528
    %v579 = vunpack.c.l.b16 %v529
    %v580 = vunpack.c.h.b16 %v529
    %v581 = vunpack.c.l.b16 %v530
    %v582 = vunpack.c.h.b16 %v530
    %v583 = vpack.c.b16 %v557, %v555
    %v584 = vpack.c.b16 %v558, %v556
    %v585 = vpack.c.b16 %v561, %v559
    %v586 = vpack.c.b16 %v562, %v560
    %v587 = vpack.c.b16 %v565, %v563
    %v588 = vpack.c.b16 %v566, %v564
    %v589 = vpack.c.b16 %v569, %v567
    %v590 = vpack.c.b16 %v570, %v568
    %v591 = vpack.c.b16 %v573, %v571
    %v592 = vpack.c.b16 %v574, %v572
    %v593 = vpack.c.b16 %v577, %v575
    %v594 = vpack.c.b16 %v578, %v576
    %v595 = vpack.c.b16 %v581, %v579
    %v596 = vpack.c.b16 %v582, %v580
    %v612 = vsel %vm273, %v540, 0
    %v615 = vsel %vm273, %v539, 0
    %617 = vmatprep.subr.bf16.mxu0 %v584
    %618 = vmatpush1.bf16.msra.mxu0 %v583
    %619 = vmatprep.subr.bf16.mxu0 %v586
    %620 = vmatpush1.bf16.msra.mxu0 %v585
    %621 = vmatprep.subr.bf16.mxu0 %v588
    %622 = vmatpush1.bf16.msra.mxu0 %v587
    %623 = vmatprep.subr.bf16.mxu0 %v590
    %624 = vmatpush1.bf16.msra.mxu0 %v589
    %625 = vmatprep.subr.bf16.mxu0 %v592
    %626 = vmatpush1.bf16.msra.mxu0 %v591
    %627 = vmatprep.subr.bf16.mxu0 %v594
    %628 = vmatpush1.bf16.msra.mxu0 %v593
    %629 = vmatprep.subr.bf16.mxu0 %v596
    %630 = vmatpush1.bf16.msra.mxu0 %v595
    %631 = vmatprep.subr.bf16.mxu0 0
    %632 = vmatpush1.bf16.msra.mxu0 0
    %633 = vmatprep.subr.bf16.mxu0 0
    %634 = vmatpush1.bf16.msra.mxu0 0
    %635 = vmatprep.subr.bf16.mxu0 0
    %636 = vmatpush1.bf16.msra.mxu0 0
    %637 = vmatprep.subr.bf16.mxu0 0
    %638 = vmatpush1.bf16.msra.mxu0 0
    %639 = vmatprep.subr.bf16.mxu0 0
    %640 = vmatpush1.bf16.msra.mxu0 0
    %641 = vmatprep.subr.bf16.mxu0 0
    %642 = vmatpush1.bf16.msra.mxu0 0
    %643 = vmatprep.subr.bf16.mxu0 0
    %644 = vmatpush1.bf16.msra.mxu0 0
    %645 = vmatprep.subr.bf16.mxu0 0
    %646 = vmatpush1.bf16.msra.mxu0 0
    %647 = vmatprep.subr.bf16.mxu0 0
    %648 = vmatpush1.bf16.msra.mxu0 0
    %649 = vmatprep.mubr.bf16.mxu0 0
    %650 = vmatmul.mubr.bf16.gmra.mrb[0].mxu0 %v612
    %v651 = vpop.f32.mrb[0].mxu0
    %v652 = vadd.f32 0.0, %v651
    %v653 = vpop.f32.mrb[0].mxu0
    %v654 = vadd.f32 0.0, %v653
    %v655 = vpop.f32.mrb[0].mxu0
    %v656 = vadd.f32 0.0, %v655
    %v657 = vpop.f32.mrb[0].mxu0
    %v658 = vadd.f32 0.0, %v657
    %659 = vmatprep.mubr.bf16.mxu0 0
    %660 = vmatmul.mubr.bf16.gmra.mrb[0].mxu0 %v615
    %v661 = vpop.f32.mrb[0].mxu0
    %v662 = vadd.f32 0.0, %v661
    %v663 = vpop.f32.mrb[0].mxu0
    %v664 = vadd.f32 0.0, %v663
    %v665 = vpop.f32.mrb[0].mxu0
    %v666 = vpop.f32.mrb[0].mxu0
    %667 = vdwg.mxu0
    %v668 = vadd.f32 %v508, %v652
    %v669 = vadd.f32 %v509, %v654
    %v670 = vadd.f32 %v510, %v656
    %v671 = vadd.f32 %v511, %v658
    %v672 = vadd.f32 %v512, %v662
    %v673 = vadd.f32 %v513, %v664
    %v674 = vmax.f32 %v668, 0.0
    %v675 = vmax.f32 %v669, 0.0
    %v676 = vmax.f32 %v670, 0.0
    %v677 = vmax.f32 %v671, 0.0
    %v678 = vmax.f32 %v672, 0.0
    %v679 = vmax.f32 %v673, 0.0
    %v680 = vpack.c.bf16 %v676, %v674
    %v681 = vpack.c.bf16 %v677, %v675
    %v682 = vpack.c.bf16 %v678, %v678
    %v683 = vpack.c.bf16 %v679, %v679
    %v688 = vunpack.c.l.b16 %v680
    %v689 = vunpack.c.l.b16 %v681
    %v690 = vunpack.c.h.b16 %v680
    %v691 = vunpack.c.h.b16 %v681
    %v692 = vunpack.c.l.b16 %v682
    %v693 = vunpack.c.l.b16 %v683
    %v694 = vpack.c.b16 %v689, %v688
    %v695 = vpack.c.b16 %v691, %v690
    %v696 = vpack.c.b16 %v693, %v692
    %vm700 = vcmask 1043456
    %vm701 = vcmask 523268
    %vm702 = vmor %vm701, %vm700
    %703 = vst.msk [vmem:[#allocation3] sm:$0xff] %vm702, %v694
    %704 = vst.msk [vmem:[#allocation3 + $0x8] sm:$0xff] %vm702, %v695
    %705 = vst.msk [vmem:[#allocation3 + $0x10] sm:$0xff] %vm702, %v696
    %v706 = vld [vmem:[#allocation3] sm:$0x11]
    %v707 = vld [vmem:[#allocation3] sm:$0x22]
    %v709 = vrot.slane %v707, 5
    %v710 = vrot.slane %v709, 4
    %v712 = vmax.bf16 %v706, %v710
    %v713 = vld [vmem:[%s4] sm:$0xf]
    %v714 = vld [vmem:[%s4 + $0x4] sm:$0xf]
    %v715 = vld [vmem:[%s4 + $0x8] sm:$0xf]
    %v716 = vld [vmem:[%s4 + $0xc] sm:$0xf]
    %v717 = vld [vmem:[%s4 + $0x10] sm:$0xf]
    %v718 = vld [vmem:[%s4 + $0x14] sm:$0xf]
    %v719 = vld [vmem:[%s4 + $0x18] sm:$0xf]
    %v720 = vld [vmem:[%s4 + $0x1c] sm:$0xf]
    %v721 = vld [vmem:[%s4 + $0x20] sm:$0xf]
    %v722 = vld [vmem:[%s4 + $0x24] sm:$0xf]
    %v723 = vld [vmem:[%s4 + $0x28] sm:$0xf]
    %v724 = vld [vmem:[%s4 + $0x2c] sm:$0xf]
    %v725 = vld [vmem:[%s4 + $0x30] sm:$0xf]
    %v726 = vld [vmem:[%s4 + $0x34] sm:$0xf]
    %v727 = vld [vmem:[%s4 + $0x38] sm:$0xf]
    %v728 = vld [vmem:[%s4 + $0x3c] sm:$0xf]
    %v729 = vld [vmem:[%s4 + $0x40] sm:$0xf]
    %v730 = vld [vmem:[%s4 + $0x44] sm:$0xf]
    %v731 = vld [vmem:[%s4 + $0x48] sm:$0xf]
    %v732 = vld [vmem:[%s4 + $0x4c] sm:$0xf]
    %v733 = vld [vmem:[%s4 + $0x50] sm:$0xf]
    %v734 = vld [vmem:[%s4 + $0x54] sm:$0xf]
    %v735 = vld [vmem:[%s4 + $0x58] sm:$0xf]
    %v736 = vld [vmem:[%s4 + $0x5c] sm:$0xf]
    %v738 = vunpack.c.l.b16 %v712
    %v739 = vunpack.c.h.b16 %v712
    %v740 = vpack.c.b16 %v738, %v738
    %v741 = vpack.c.b16 %v739, %v739
    %v767 = vunpack.c.l.b16 %v713
    %v768 = vunpack.c.l.b16 %v714
    %v769 = vunpack.c.l.b16 %v715
    %v770 = vunpack.c.l.b16 %v716
    %v771 = vunpack.c.l.b16 %v717
    %v772 = vunpack.c.l.b16 %v718
    %v773 = vunpack.c.l.b16 %v719
    %v774 = vunpack.c.l.b16 %v720
    %v775 = vunpack.c.l.b16 %v721
    %v776 = vunpack.c.l.b16 %v722
    %v777 = vunpack.c.l.b16 %v723
    %v778 = vunpack.c.l.b16 %v724
    %v779 = vunpack.c.l.b16 %v725
    %v780 = vunpack.c.l.b16 %v726
    %v781 = vunpack.c.l.b16 %v727
    %v782 = vunpack.c.l.b16 %v728
    %v783 = vunpack.c.l.b16 %v729
    %v784 = vunpack.c.l.b16 %v730
    %v785 = vunpack.c.l.b16 %v731
    %v786 = vunpack.c.l.b16 %v732
    %v787 = vunpack.c.l.b16 %v733
    %v788 = vunpack.c.l.b16 %v734
    %v789 = vunpack.c.l.b16 %v735
    %v790 = vunpack.c.l.b16 %v736
    %v791 = vpack.c.b16 %v768, %v767
    %v792 = vpack.c.b16 %v770, %v769
    %v793 = vpack.c.b16 %v772, %v771
    %v794 = vpack.c.b16 %v774, %v773
    %v795 = vpack.c.b16 %v776, %v775
    %v796 = vpack.c.b16 %v778, %v777
    %v797 = vpack.c.b16 %v780, %v779
    %v798 = vpack.c.b16 %v782, %v781
    %v799 = vpack.c.b16 %v784, %v783
    %v800 = vpack.c.b16 %v786, %v785
    %v801 = vpack.c.b16 %v788, %v787
    %v802 = vpack.c.b16 %v790, %v789
    %vm815 = vcmask 523264
    %v817 = vsel %vm815, %v741, 0
    %819 = vmatprep.subr.bf16.mxu0 0
    %820 = vmatpush1.bf16.msra.mxu0 %v791
    %821 = vmatprep.subr.bf16.mxu0 0
    %822 = vmatpush1.bf16.msra.mxu0 %v792
    %823 = vmatprep.subr.bf16.mxu0 0
    %824 = vmatpush1.bf16.msra.mxu0 %v793
    %825 = vmatprep.subr.bf16.mxu0 0
    %826 = vmatpush1.bf16.msra.mxu0 %v794
    %827 = vmatprep.subr.bf16.mxu0 0
    %828 = vmatpush1.bf16.msra.mxu0 %v795
    %829 = vmatprep.subr.bf16.mxu0 0
    %830 = vmatpush1.bf16.msra.mxu0 %v796
    %831 = vmatprep.subr.bf16.mxu0 0
    %832 = vmatpush1.bf16.msra.mxu0 %v797
    %833 = vmatprep.subr.bf16.mxu0 0
    %834 = vmatpush1.bf16.msra.mxu0 %v798
    %835 = vmatprep.subr.bf16.mxu0 0
    %836 = vmatpush1.bf16.msra.mxu0 %v799
    %837 = vmatprep.subr.bf16.mxu0 0
    %838 = vmatpush1.bf16.msra.mxu0 %v800
    %839 = vmatprep.subr.bf16.mxu0 0
    %840 = vmatpush1.bf16.msra.mxu0 %v801
    %841 = vmatprep.subr.bf16.mxu0 0
    %842 = vmatpush1.bf16.msra.mxu0 %v802
    %843 = vmatprep.subr.bf16.mxu0 0
    %844 = vmatpush1.bf16.msra.mxu0 0
    %845 = vmatprep.subr.bf16.mxu0 0
    %846 = vmatpush1.bf16.msra.mxu0 0
    %847 = vmatprep.subr.bf16.mxu0 0
    %848 = vmatpush1.bf16.msra.mxu0 0
    %849 = vmatprep.subr.bf16.mxu0 0
    %850 = vmatpush1.bf16.msra.mxu0 0
    %851 = vmatprep.mubr.bf16.mxu0 %v817
    %852 = vmatmul.mubr.bf16.gmra.mrb[0].mxu0 %v740
    %v853 = vpop.f32.mrb[0].mxu0
    %v854 = vadd.f32 0.0, %v853
    %v855 = vpop.f32.mrb[0].mxu0
    %v856 = vpop.f32.mrb[0].mxu0
    %v857 = vpop.f32.mrb[0].mxu0
    %858 = vdwg.mxu0
    %s859 = scalar_lea.vmem %s4, 96
    %v860 = vld [vmem:[%s859] sm:$0xf]
    %v861 = vld [vmem:[%s859 + $0x4] sm:$0xf]
    %v862 = vld [vmem:[%s859 + $0x8] sm:$0xf]
    %v863 = vld [vmem:[%s859 + $0xc] sm:$0xf]
    %v864 = vld [vmem:[%s859 + $0x10] sm:$0xf]
    %v865 = vld [vmem:[%s859 + $0x14] sm:$0xf]
    %v866 = vld [vmem:[%s859 + $0x18] sm:$0xf]
    %v867 = vld [vmem:[%s859 + $0x1c] sm:$0xf]
    %v868 = vld [vmem:[%s859 + $0x20] sm:$0xf]
    %v869 = vld [vmem:[%s859 + $0x24] sm:$0xf]
    %v870 = vld [vmem:[%s859 + $0x28] sm:$0xf]
    %v871 = vld [vmem:[%s859 + $0x2c] sm:$0xf]
    %v872 = vld [vmem:[%s859 + $0x30] sm:$0xf]
    %v873 = vld [vmem:[%s859 + $0x34] sm:$0xf]
    %v874 = vld [vmem:[%s859 + $0x38] sm:$0xf]
    %v875 = vld [vmem:[%s859 + $0x3c] sm:$0xf]
    %v876 = vld [vmem:[%s859 + $0x40] sm:$0xf]
    %v877 = vld [vmem:[%s859 + $0x44] sm:$0xf]
    %v878 = vld [vmem:[%s859 + $0x48] sm:$0xf]
    %v879 = vld [vmem:[%s859 + $0x4c] sm:$0xf]
    %v880 = vld [vmem:[%s859 + $0x50] sm:$0xf]
    %v881 = vld [vmem:[%s859 + $0x54] sm:$0xf]
    %v882 = vld [vmem:[%s859 + $0x58] sm:$0xf]
    %v883 = vld [vmem:[%s859 + $0x5c] sm:$0xf]
    %v908 = vunpack.c.l.b16 %v860
    %v909 = vunpack.c.l.b16 %v861
    %v910 = vunpack.c.l.b16 %v862
    %v911 = vunpack.c.l.b16 %v863
    %v912 = vunpack.c.l.b16 %v864
    %v913 = vunpack.c.l.b16 %v865
    %v914 = vunpack.c.l.b16 %v866
    %v915 = vunpack.c.l.b16 %v867
    %v916 = vunpack.c.l.b16 %v868
    %v917 = vunpack.c.l.b16 %v869
    %v918 = vunpack.c.l.b16 %v870
    %v919 = vunpack.c.l.b16 %v871
    %v920 = vunpack.c.l.b16 %v872
    %v921 = vunpack.c.l.b16 %v873
    %v922 = vunpack.c.l.b16 %v874
    %v923 = vunpack.c.l.b16 %v875
    %v924 = vunpack.c.l.b16 %v876
    %v925 = vunpack.c.l.b16 %v877
    %v926 = vunpack.c.l.b16 %v878
    %v927 = vunpack.c.l.b16 %v879
    %v928 = vunpack.c.l.b16 %v880
    %v929 = vunpack.c.l.b16 %v881
    %v930 = vunpack.c.l.b16 %v882
    %v931 = vunpack.c.l.b16 %v883
    %v932 = vpack.c.b16 %v909, %v908
    %v933 = vpack.c.b16 %v911, %v910
    %v934 = vpack.c.b16 %v913, %v912
    %v935 = vpack.c.b16 %v915, %v914
    %v936 = vpack.c.b16 %v917, %v916
    %v937 = vpack.c.b16 %v919, %v918
    %v938 = vpack.c.b16 %v921, %v920
    %v939 = vpack.c.b16 %v923, %v922
    %v940 = vpack.c.b16 %v925, %v924
    %v941 = vpack.c.b16 %v927, %v926
    %v942 = vpack.c.b16 %v929, %v928
    %v943 = vpack.c.b16 %v931, %v930
    %956 = vmatprep.subr.bf16.mxu0 0
    %957 = vmatpush1.bf16.msra.mxu0 %v932
    %958 = vmatprep.subr.bf16.mxu0 0
    %959 = vmatpush1.bf16.msra.mxu0 %v933
    %960 = vmatprep.subr.bf16.mxu0 0
    %961 = vmatpush1.bf16.msra.mxu0 %v934
    %962 = vmatprep.subr.bf16.mxu0 0
    %963 = vmatpush1.bf16.msra.mxu0 %v935
    %964 = vmatprep.subr.bf16.mxu0 0
    %965 = vmatpush1.bf16.msra.mxu0 %v936
    %966 = vmatprep.subr.bf16.mxu0 0
    %967 = vmatpush1.bf16.msra.mxu0 %v937
    %968 = vmatprep.subr.bf16.mxu0 0
    %969 = vmatpush1.bf16.msra.mxu0 %v938
    %970 = vmatprep.subr.bf16.mxu0 0
    %971 = vmatpush1.bf16.msra.mxu0 %v939
    %972 = vmatprep.subr.bf16.mxu0 0
    %973 = vmatpush1.bf16.msra.mxu0 %v940
    %974 = vmatprep.subr.bf16.mxu0 0
    %975 = vmatpush1.bf16.msra.mxu0 %v941
    %976 = vmatprep.subr.bf16.mxu0 0
    %977 = vmatpush1.bf16.msra.mxu0 %v942
    %978 = vmatprep.subr.bf16.mxu0 0
    %979 = vmatpush1.bf16.msra.mxu0 %v943
    %980 = vmatprep.subr.bf16.mxu0 0
    %981 = vmatpush1.bf16.msra.mxu0 0
    %982 = vmatprep.subr.bf16.mxu0 0
    %983 = vmatpush1.bf16.msra.mxu0 0
    %984 = vmatprep.subr.bf16.mxu0 0
    %985 = vmatpush1.bf16.msra.mxu0 0
    %986 = vmatprep.subr.bf16.mxu0 0
    %987 = vmatpush1.bf16.msra.mxu0 0
    %988 = vmatprep.mubr.bf16.mxu0 %v817
    %989 = vmatmul.mubr.bf16.gmra.mrb[0].mxu0 %v740
    %v990 = vpop.f32.mrb[0].mxu0
    %v991 = vadd.f32 0.0, %v990
    %v992 = vpop.f32.mrb[0].mxu0
    %v993 = vpop.f32.mrb[0].mxu0
    %v994 = vpop.f32.mrb[0].mxu0
    %995 = vdwg.mxu0
    %v996 = vmax.f32 %v854, %v991
    %v997 = vld [vmem:[#allocation3] sm:$0x44]
    %v998 = vld [vmem:[#allocation3] sm:$0x88]
    %v1000 = vrot.slane %v998, 5
    %v1001 = vrot.slane %v1000, 4
    %v1003 = vmax.bf16 %v997, %v1001
    %v1005 = vunpack.c.l.b16 %v1003
    %v1006 = vunpack.c.h.b16 %v1003
    %v1007 = vpack.c.b16 %v1005, %v1005
    %v1008 = vpack.c.b16 %v1006, %v1006
    %v1009 = vrot.slane %v1007, 2
    %v1010 = vrot.slane %v1008, 2
    %v1013 = vsel %vm815, %v1010, 0
    %1015 = vmatprep.subr.bf16.mxu0 0
    %1016 = vmatpush1.bf16.msra.mxu0 %v791
    %1017 = vmatprep.subr.bf16.mxu0 0
    %1018 = vmatpush1.bf16.msra.mxu0 %v792
    %1019 = vmatprep.subr.bf16.mxu0 0
    %1020 = vmatpush1.bf16.msra.mxu0 %v793
    %1021 = vmatprep.subr.bf16.mxu0 0
    %1022 = vmatpush1.bf16.msra.mxu0 %v794
    %1023 = vmatprep.subr.bf16.mxu0 0
    %1024 = vmatpush1.bf16.msra.mxu0 %v795
    %1025 = vmatprep.subr.bf16.mxu0 0
    %1026 = vmatpush1.bf16.msra.mxu0 %v796
    %1027 = vmatprep.subr.bf16.mxu0 0
    %1028 = vmatpush1.bf16.msra.mxu0 %v797
    %1029 = vmatprep.subr.bf16.mxu0 0
    %1030 = vmatpush1.bf16.msra.mxu0 %v798
    %1031 = vmatprep.subr.bf16.mxu0 0
    %1032 = vmatpush1.bf16.msra.mxu0 %v799
    %1033 = vmatprep.subr.bf16.mxu0 0
    %1034 = vmatpush1.bf16.msra.mxu0 %v800
    %1035 = vmatprep.subr.bf16.mxu0 0
    %1036 = vmatpush1.bf16.msra.mxu0 %v801
    %1037 = vmatprep.subr.bf16.mxu0 0
    %1038 = vmatpush1.bf16.msra.mxu0 %v802
    %1039 = vmatprep.subr.bf16.mxu0 0
    %1040 = vmatpush1.bf16.msra.mxu0 0
    %1041 = vmatprep.subr.bf16.mxu0 0
    %1042 = vmatpush1.bf16.msra.mxu0 0
    %1043 = vmatprep.subr.bf16.mxu0 0
    %1044 = vmatpush1.bf16.msra.mxu0 0
    %1045 = vmatprep.subr.bf16.mxu0 0
    %1046 = vmatpush1.bf16.msra.mxu0 0
    %1047 = vmatprep.mubr.bf16.mxu0 %v1013
    %1048 = vmatmul.mubr.bf16.gmra.mrb[0].mxu0 %v1009
    %v1049 = vpop.f32.mrb[0].mxu0
    %v1050 = vadd.f32 0.0, %v1049
    %v1051 = vpop.f32.mrb[0].mxu0
    %v1052 = vpop.f32.mrb[0].mxu0
    %v1053 = vpop.f32.mrb[0].mxu0
    %1054 = vdwg.mxu0
    %1055 = vmatprep.subr.bf16.mxu0 0
    %1056 = vmatpush1.bf16.msra.mxu0 %v932
    %1057 = vmatprep.subr.bf16.mxu0 0
    %1058 = vmatpush1.bf16.msra.mxu0 %v933
    %1059 = vmatprep.subr.bf16.mxu0 0
    %1060 = vmatpush1.bf16.msra.mxu0 %v934
    %1061 = vmatprep.subr.bf16.mxu0 0
    %1062 = vmatpush1.bf16.msra.mxu0 %v935
    %1063 = vmatprep.subr.bf16.mxu0 0
    %1064 = vmatpush1.bf16.msra.mxu0 %v936
    %1065 = vmatprep.subr.bf16.mxu0 0
    %1066 = vmatpush1.bf16.msra.mxu0 %v937
    %1067 = vmatprep.subr.bf16.mxu0 0
    %1068 = vmatpush1.bf16.msra.mxu0 %v938
    %1069 = vmatprep.subr.bf16.mxu0 0
    %1070 = vmatpush1.bf16.msra.mxu0 %v939
    %1071 = vmatprep.subr.bf16.mxu0 0
    %1072 = vmatpush1.bf16.msra.mxu0 %v940
    %1073 = vmatprep.subr.bf16.mxu0 0
    %1074 = vmatpush1.bf16.msra.mxu0 %v941
    %1075 = vmatprep.subr.bf16.mxu0 0
    %1076 = vmatpush1.bf16.msra.mxu0 %v942
    %1077 = vmatprep.subr.bf16.mxu0 0
    %1078 = vmatpush1.bf16.msra.mxu0 %v943
    %1079 = vmatprep.subr.bf16.mxu0 0
    %1080 = vmatpush1.bf16.msra.mxu0 0
    %1081 = vmatprep.subr.bf16.mxu0 0
    %1082 = vmatpush1.bf16.msra.mxu0 0
    %1083 = vmatprep.subr.bf16.mxu0 0
    %1084 = vmatpush1.bf16.msra.mxu0 0
    %1085 = vmatprep.subr.bf16.mxu0 0
    %1086 = vmatpush1.bf16.msra.mxu0 0
    %1087 = vmatprep.mubr.bf16.mxu0 %v1013
    %1088 = vmatmul.mubr.bf16.gmra.mrb[0].mxu0 %v1009
    %v1089 = vpop.f32.mrb[0].mxu0
    %v1090 = vadd.f32 0.0, %v1089
    %v1091 = vpop.f32.mrb[0].mxu0
    %v1092 = vpop.f32.mrb[0].mxu0
    %v1093 = vpop.f32.mrb[0].mxu0
    %1094 = vdwg.mxu0
    %v1095 = vmax.f32 %v1050, %v1090
    %v1096 = vld [vmem:[#allocation3 + $0x8] sm:$0x11]
    %v1097 = vld [vmem:[#allocation3 + $0x8] sm:$0x22]
    %v1099 = vrot.slane %v1097, 5
    %v1100 = vrot.slane %v1099, 4
    %v1102 = vmax.bf16 %v1096, %v1100
    %v1104 = vunpack.c.l.b16 %v1102
    %v1105 = vunpack.c.h.b16 %v1102
    %v1106 = vpack.c.b16 %v1104, %v1104
    %v1107 = vpack.c.b16 %v1105, %v1105
    %v1110 = vsel %vm815, %v1107, 0
    %1112 = vmatprep.subr.bf16.mxu0 0
    %1113 = vmatpush1.bf16.msra.mxu0 %v791
    %1114 = vmatprep.subr.bf16.mxu0 0
    %1115 = vmatpush1.bf16.msra.mxu0 %v792
    %1116 = vmatprep.subr.bf16.mxu0 0
    %1117 = vmatpush1.bf16.msra.mxu0 %v793
    %1118 = vmatprep.subr.bf16.mxu0 0
    %1119 = vmatpush1.bf16.msra.mxu0 %v794
    %1120 = vmatprep.subr.bf16.mxu0 0
    %1121 = vmatpush1.bf16.msra.mxu0 %v795
    %1122 = vmatprep.subr.bf16.mxu0 0
    %1123 = vmatpush1.bf16.msra.mxu0 %v796
    %1124 = vmatprep.subr.bf16.mxu0 0
    %1125 = vmatpush1.bf16.msra.mxu0 %v797
    %1126 = vmatprep.subr.bf16.mxu0 0
    %1127 = vmatpush1.bf16.msra.mxu0 %v798
    %1128 = vmatprep.subr.bf16.mxu0 0
    %1129 = vmatpush1.bf16.msra.mxu0 %v799
    %1130 = vmatprep.subr.bf16.mxu0 0
    %1131 = vmatpush1.bf16.msra.mxu0 %v800
    %1132 = vmatprep.subr.bf16.mxu0 0
    %1133 = vmatpush1.bf16.msra.mxu0 %v801
    %1134 = vmatprep.subr.bf16.mxu0 0
    %1135 = vmatpush1.bf16.msra.mxu0 %v802
    %1136 = vmatprep.subr.bf16.mxu0 0
    %1137 = vmatpush1.bf16.msra.mxu0 0
    %1138 = vmatprep.subr.bf16.mxu0 0
    %1139 = vmatpush1.bf16.msra.mxu0 0
    %1140 = vmatprep.subr.bf16.mxu0 0
    %1141 = vmatpush1.bf16.msra.mxu0 0
    %1142 = vmatprep.subr.bf16.mxu0 0
    %1143 = vmatpush1.bf16.msra.mxu0 0
    %1144 = vmatprep.mubr.bf16.mxu0 %v1110
    %1145 = vmatmul.mubr.bf16.gmra.mrb[0].mxu0 %v1106
    %v1146 = vpop.f32.mrb[0].mxu0
    %v1147 = vadd.f32 0.0, %v1146
    %v1148 = vpop.f32.mrb[0].mxu0
    %v1149 = vpop.f32.mrb[0].mxu0
    %v1150 = vpop.f32.mrb[0].mxu0
    %1151 = vdwg.mxu0
    %1152 = vmatprep.subr.bf16.mxu0 0
    %1153 = vmatpush1.bf16.msra.mxu0 %v932
    %1154 = vmatprep.subr.bf16.mxu0 0
    %1155 = vmatpush1.bf16.msra.mxu0 %v933
    %1156 = vmatprep.subr.bf16.mxu0 0
    %1157 = vmatpush1.bf16.msra.mxu0 %v934
    %1158 = vmatprep.subr.bf16.mxu0 0
    %1159 = vmatpush1.bf16.msra.mxu0 %v935
    %1160 = vmatprep.subr.bf16.mxu0 0
    %1161 = vmatpush1.bf16.msra.mxu0 %v936
    %1162 = vmatprep.subr.bf16.mxu0 0
    %1163 = vmatpush1.bf16.msra.mxu0 %v937
    %1164 = vmatprep.subr.bf16.mxu0 0
    %1165 = vmatpush1.bf16.msra.mxu0 %v938
    %1166 = vmatprep.subr.bf16.mxu0 0
    %1167 = vmatpush1.bf16.msra.mxu0 %v939
    %1168 = vmatprep.subr.bf16.mxu0 0
    %1169 = vmatpush1.bf16.msra.mxu0 %v940
    %1170 = vmatprep.subr.bf16.mxu0 0
    %1171 = vmatpush1.bf16.msra.mxu0 %v941
    %1172 = vmatprep.subr.bf16.mxu0 0
    %1173 = vmatpush1.bf16.msra.mxu0 %v942
    %1174 = vmatprep.subr.bf16.mxu0 0
    %1175 = vmatpush1.bf16.msra.mxu0 %v943
    %1176 = vmatprep.subr.bf16.mxu0 0
    %1177 = vmatpush1.bf16.msra.mxu0 0
    %1178 = vmatprep.subr.bf16.mxu0 0
    %1179 = vmatpush1.bf16.msra.mxu0 0
    %1180 = vmatprep.subr.bf16.mxu0 0
    %1181 = vmatpush1.bf16.msra.mxu0 0
    %1182 = vmatprep.subr.bf16.mxu0 0
    %1183 = vmatpush1.bf16.msra.mxu0 0
    %1184 = vmatprep.mubr.bf16.mxu0 %v1110
    %1185 = vmatmul.mubr.bf16.gmra.mrb[0].mxu0 %v1106
    %v1186 = vpop.f32.mrb[0].mxu0
    %v1187 = vadd.f32 0.0, %v1186
    %v1188 = vpop.f32.mrb[0].mxu0
    %v1189 = vpop.f32.mrb[0].mxu0
    %v1190 = vpop.f32.mrb[0].mxu0
    %1191 = vdwg.mxu0
    %v1192 = vmax.f32 %v1147, %v1187
    %v1193 = vld [vmem:[#allocation3 + $0x8] sm:$0x44]
    %v1194 = vld [vmem:[#allocation3 + $0x8] sm:$0x88]
    %v1196 = vrot.slane %v1194, 5
    %v1197 = vrot.slane %v1196, 4
    %v1199 = vmax.bf16 %v1193, %v1197
    %v1201 = vunpack.c.l.b16 %v1199
    %v1202 = vunpack.c.h.b16 %v1199
    %v1203 = vpack.c.b16 %v1201, %v1201
    %v1204 = vpack.c.b16 %v1202, %v1202
    %v1205 = vrot.slane %v1203, 2
    %v1206 = vrot.slane %v1204, 2
    %v1209 = vsel %vm815, %v1206, 0
    %1211 = vmatprep.subr.bf16.mxu0 0
    %1212 = vmatpush1.bf16.msra.mxu0 %v791
    %1213 = vmatprep.subr.bf16.mxu0 0
    %1214 = vmatpush1.bf16.msra.mxu0 %v792
    %1215 = vmatprep.subr.bf16.mxu0 0
    %1216 = vmatpush1.bf16.msra.mxu0 %v793
    %1217 = vmatprep.subr.bf16.mxu0 0
    %1218 = vmatpush1.bf16.msra.mxu0 %v794
    %1219 = vmatprep.subr.bf16.mxu0 0
    %1220 = vmatpush1.bf16.msra.mxu0 %v795
    %1221 = vmatprep.subr.bf16.mxu0 0
    %1222 = vmatpush1.bf16.msra.mxu0 %v796
    %1223 = vmatprep.subr.bf16.mxu0 0
    %1224 = vmatpush1.bf16.msra.mxu0 %v797
    %1225 = vmatprep.subr.bf16.mxu0 0
    %1226 = vmatpush1.bf16.msra.mxu0 %v798
    %1227 = vmatprep.subr.bf16.mxu0 0
    %1228 = vmatpush1.bf16.msra.mxu0 %v799
    %1229 = vmatprep.subr.bf16.mxu0 0
    %1230 = vmatpush1.bf16.msra.mxu0 %v800
    %1231 = vmatprep.subr.bf16.mxu0 0
    %1232 = vmatpush1.bf16.msra.mxu0 %v801
    %1233 = vmatprep.subr.bf16.mxu0 0
    %1234 = vmatpush1.bf16.msra.mxu0 %v802
    %1235 = vmatprep.subr.bf16.mxu0 0
    %1236 = vmatpush1.bf16.msra.mxu0 0
    %1237 = vmatprep.subr.bf16.mxu0 0
    %1238 = vmatpush1.bf16.msra.mxu0 0
    %1239 = vmatprep.subr.bf16.mxu0 0
    %1240 = vmatpush1.bf16.msra.mxu0 0
    %1241 = vmatprep.subr.bf16.mxu0 0
    %1242 = vmatpush1.bf16.msra.mxu0 0
    %1243 = vmatprep.mubr.bf16.mxu0 %v1209
    %1244 = vmatmul.mubr.bf16.gmra.mrb[0].mxu0 %v1205
    %v1245 = vpop.f32.mrb[0].mxu0
    %v1246 = vadd.f32 0.0, %v1245
    %v1247 = vpop.f32.mrb[0].mxu0
    %v1248 = vpop.f32.mrb[0].mxu0
    %v1249 = vpop.f32.mrb[0].mxu0
    %1250 = vdwg.mxu0
    %1251 = vmatprep.subr.bf16.mxu0 0
    %1252 = vmatpush1.bf16.msra.mxu0 %v932
    %1253 = vmatprep.subr.bf16.mxu0 0
    %1254 = vmatpush1.bf16.msra.mxu0 %v933
    %1255 = vmatprep.subr.bf16.mxu0 0
    %1256 = vmatpush1.bf16.msra.mxu0 %v934
    %1257 = vmatprep.subr.bf16.mxu0 0
    %1258 = vmatpush1.bf16.msra.mxu0 %v935
    %1259 = vmatprep.subr.bf16.mxu0 0
    %1260 = vmatpush1.bf16.msra.mxu0 %v936
    %1261 = vmatprep.subr.bf16.mxu0 0
    %1262 = vmatpush1.bf16.msra.mxu0 %v937
    %1263 = vmatprep.subr.bf16.mxu0 0
    %1264 = vmatpush1.bf16.msra.mxu0 %v938
    %1265 = vmatprep.subr.bf16.mxu0 0
    %1266 = vmatpush1.bf16.msra.mxu0 %v939
    %1267 = vmatprep.subr.bf16.mxu0 0
    %1268 = vmatpush1.bf16.msra.mxu0 %v940
    %1269 = vmatprep.subr.bf16.mxu0 0
    %1270 = vmatpush1.bf16.msra.mxu0 %v941
    %1271 = vmatprep.subr.bf16.mxu0 0
    %1272 = vmatpush1.bf16.msra.mxu0 %v942
    %1273 = vmatprep.subr.bf16.mxu0 0
    %1274 = vmatpush1.bf16.msra.mxu0 %v943
    %1275 = vmatprep.subr.bf16.mxu0 0
    %1276 = vmatpush1.bf16.msra.mxu0 0
    %1277 = vmatprep.subr.bf16.mxu0 0
    %1278 = vmatpush1.bf16.msra.mxu0 0
    %1279 = vmatprep.subr.bf16.mxu0 0
    %1280 = vmatpush1.bf16.msra.mxu0 0
    %1281 = vmatprep.subr.bf16.mxu0 0
    %1282 = vmatpush1.bf16.msra.mxu0 0
    %1283 = vmatprep.mubr.bf16.mxu0 %v1209
    %1284 = vmatmul.mubr.bf16.gmra.mrb[0].mxu0 %v1205
    %v1285 = vpop.f32.mrb[0].mxu0
    %v1286 = vadd.f32 0.0, %v1285
    %v1287 = vpop.f32.mrb[0].mxu0
    %v1288 = vpop.f32.mrb[0].mxu0
    %v1289 = vpop.f32.mrb[0].mxu0
    %1290 = vdwg.mxu0
    %v1291 = vmax.f32 %v1246, %v1286
    %v1292 = vld [vmem:[#allocation3 + $0x10] sm:$0x11]
    %v1293 = vld [vmem:[#allocation3 + $0x10] sm:$0x22]
    %v1295 = vrot.slane %v1293, 5
    %v1296 = vrot.slane %v1295, 4
    %v1298 = vmax.bf16 %v1292, %v1296
    %v1300 = vunpack.c.l.b16 %v1298
    %v1301 = vunpack.c.h.b16 %v1298
    %v1302 = vpack.c.b16 %v1300, %v1300
    %v1303 = vpack.c.b16 %v1301, %v1301
    %v1306 = vsel %vm815, %v1303, 0
    %1308 = vmatprep.subr.bf16.mxu0 0
    %1309 = vmatpush1.bf16.msra.mxu0 %v791
    %1310 = vmatprep.subr.bf16.mxu0 0
    %1311 = vmatpush1.bf16.msra.mxu0 %v792
    %1312 = vmatprep.subr.bf16.mxu0 0
    %1313 = vmatpush1.bf16.msra.mxu0 %v793
    %1314 = vmatprep.subr.bf16.mxu0 0
    %1315 = vmatpush1.bf16.msra.mxu0 %v794
    %1316 = vmatprep.subr.bf16.mxu0 0
    %1317 = vmatpush1.bf16.msra.mxu0 %v795
    %1318 = vmatprep.subr.bf16.mxu0 0
    %1319 = vmatpush1.bf16.msra.mxu0 %v796
    %1320 = vmatprep.subr.bf16.mxu0 0
    %1321 = vmatpush1.bf16.msra.mxu0 %v797
    %1322 = vmatprep.subr.bf16.mxu0 0
    %1323 = vmatpush1.bf16.msra.mxu0 %v798
    %1324 = vmatprep.subr.bf16.mxu0 0
    %1325 = vmatpush1.bf16.msra.mxu0 %v799
    %1326 = vmatprep.subr.bf16.mxu0 0
    %1327 = vmatpush1.bf16.msra.mxu0 %v800
    %1328 = vmatprep.subr.bf16.mxu0 0
    %1329 = vmatpush1.bf16.msra.mxu0 %v801
    %1330 = vmatprep.subr.bf16.mxu0 0
    %1331 = vmatpush1.bf16.msra.mxu0 %v802
    %1332 = vmatprep.subr.bf16.mxu0 0
    %1333 = vmatpush1.bf16.msra.mxu0 0
    %1334 = vmatprep.subr.bf16.mxu0 0
    %1335 = vmatpush1.bf16.msra.mxu0 0
    %1336 = vmatprep.subr.bf16.mxu0 0
    %1337 = vmatpush1.bf16.msra.mxu0 0
    %1338 = vmatprep.subr.bf16.mxu0 0
    %1339 = vmatpush1.bf16.msra.mxu0 0
    %1340 = vmatprep.mubr.bf16.mxu0 %v1306
    %1341 = vmatmul.mubr.bf16.gmra.mrb[0].mxu0 %v1302
    %v1342 = vpop.f32.mrb[0].mxu0
    %v1343 = vadd.f32 0.0, %v1342
    %v1344 = vpop.f32.mrb[0].mxu0
    %v1345 = vpop.f32.mrb[0].mxu0
    %v1346 = vpop.f32.mrb[0].mxu0
    %1347 = vdwg.mxu0
    %1348 = vmatprep.subr.bf16.mxu0 0
    %1349 = vmatpush1.bf16.msra.mxu0 %v932
    %1350 = vmatprep.subr.bf16.mxu0 0
    %1351 = vmatpush1.bf16.msra.mxu0 %v933
    %1352 = vmatprep.subr.bf16.mxu0 0
    %1353 = vmatpush1.bf16.msra.mxu0 %v934
    %1354 = vmatprep.subr.bf16.mxu0 0
    %1355 = vmatpush1.bf16.msra.mxu0 %v935
    %1356 = vmatprep.subr.bf16.mxu0 0
    %1357 = vmatpush1.bf16.msra.mxu0 %v936
    %1358 = vmatprep.subr.bf16.mxu0 0
    %1359 = vmatpush1.bf16.msra.mxu0 %v937
    %1360 = vmatprep.subr.bf16.mxu0 0
    %1361 = vmatpush1.bf16.msra.mxu0 %v938
    %1362 = vmatprep.subr.bf16.mxu0 0
    %1363 = vmatpush1.bf16.msra.mxu0 %v939
    %1364 = vmatprep.subr.bf16.mxu0 0
    %1365 = vmatpush1.bf16.msra.mxu0 %v940
    %1366 = vmatprep.subr.bf16.mxu0 0
    %1367 = vmatpush1.bf16.msra.mxu0 %v941
    %1368 = vmatprep.subr.bf16.mxu0 0
    %1369 = vmatpush1.bf16.msra.mxu0 %v942
    %1370 = vmatprep.subr.bf16.mxu0 0
    %1371 = vmatpush1.bf16.msra.mxu0 %v943
    %1372 = vmatprep.subr.bf16.mxu0 0
    %1373 = vmatpush1.bf16.msra.mxu0 0
    %1374 = vmatprep.subr.bf16.mxu0 0
    %1375 = vmatpush1.bf16.msra.mxu0 0
    %1376 = vmatprep.subr.bf16.mxu0 0
    %1377 = vmatpush1.bf16.msra.mxu0 0
    %1378 = vmatprep.subr.bf16.mxu0 0
    %1379 = vmatpush1.bf16.msra.mxu0 0
    %1380 = vmatprep.mubr.bf16.mxu0 %v1306
    %1381 = vmatmul.mubr.bf16.gmra.mrb[0].mxu0 %v1302
    %v1382 = vpop.f32.mrb[0].mxu0
    %v1383 = vadd.f32 0.0, %v1382
    %v1384 = vpop.f32.mrb[0].mxu0
    %v1385 = vpop.f32.mrb[0].mxu0
    %v1386 = vpop.f32.mrb[0].mxu0
    %1387 = vdwg.mxu0
    %v1388 = vmax.f32 %v1343, %v1383
    %v1389 = vld [vmem:[#allocation3 + $0x10] sm:$0x44]
    %v1390 = vld [vmem:[#allocation3 + $0x10] sm:$0x88]
    %v1392 = vrot.slane %v1390, 5
    %v1393 = vrot.slane %v1392, 4
    %v1395 = vmax.bf16 %v1389, %v1393
    %v1397 = vunpack.c.l.b16 %v1395
    %v1398 = vunpack.c.h.b16 %v1395
    %v1399 = vpack.c.b16 %v1397, %v1397
    %v1400 = vpack.c.b16 %v1398, %v1398
    %v1401 = vrot.slane %v1399, 2
    %v1402 = vrot.slane %v1400, 2
    %v1405 = vsel %vm815, %v1402, 0
    %1407 = vmatprep.subr.bf16.mxu0 0
    %1408 = vmatpush1.bf16.msra.mxu0 %v791
    %1409 = vmatprep.subr.bf16.mxu0 0
    %1410 = vmatpush1.bf16.msra.mxu0 %v792
    %1411 = vmatprep.subr.bf16.mxu0 0
    %1412 = vmatpush1.bf16.msra.mxu0 %v793
    %1413 = vmatprep.subr.bf16.mxu0 0
    %1414 = vmatpush1.bf16.msra.mxu0 %v794
    %1415 = vmatprep.subr.bf16.mxu0 0
    %1416 = vmatpush1.bf16.msra.mxu0 %v795
    %1417 = vmatprep.subr.bf16.mxu0 0
    %1418 = vmatpush1.bf16.msra.mxu0 %v796
    %1419 = vmatprep.subr.bf16.mxu0 0
    %1420 = vmatpush1.bf16.msra.mxu0 %v797
    %1421 = vmatprep.subr.bf16.mxu0 0
    %1422 = vmatpush1.bf16.msra.mxu0 %v798
    %1423 = vmatprep.subr.bf16.mxu0 0
    %1424 = vmatpush1.bf16.msra.mxu0 %v799
    %1425 = vmatprep.subr.bf16.mxu0 0
    %1426 = vmatpush1.bf16.msra.mxu0 %v800
    %1427 = vmatprep.subr.bf16.mxu0 0
    %1428 = vmatpush1.bf16.msra.mxu0 %v801
    %1429 = vmatprep.subr.bf16.mxu0 0
    %1430 = vmatpush1.bf16.msra.mxu0 %v802
    %1431 = vmatprep.subr.bf16.mxu0 0
    %1432 = vmatpush1.bf16.msra.mxu0 0
    %1433 = vmatprep.subr.bf16.mxu0 0
    %1434 = vmatpush1.bf16.msra.mxu0 0
    %1435 = vmatprep.subr.bf16.mxu0 0
    %1436 = vmatpush1.bf16.msra.mxu0 0
    %1437 = vmatprep.subr.bf16.mxu0 0
    %1438 = vmatpush1.bf16.msra.mxu0 0
    %1439 = vmatprep.mubr.bf16.mxu0 %v1405
    %1440 = vmatmul.mubr.bf16.gmra.mrb[0].mxu0 %v1401
    %v1441 = vpop.f32.mrb[0].mxu0
    %v1442 = vadd.f32 0.0, %v1441
    %v1443 = vpop.f32.mrb[0].mxu0
    %v1444 = vpop.f32.mrb[0].mxu0
    %v1445 = vpop.f32.mrb[0].mxu0
    %1446 = vdwg.mxu0
    %1447 = vmatprep.subr.bf16.mxu0 0
    %1448 = vmatpush1.bf16.msra.mxu0 %v932
    %1449 = vmatprep.subr.bf16.mxu0 0
    %1450 = vmatpush1.bf16.msra.mxu0 %v933
    %1451 = vmatprep.subr.bf16.mxu0 0
    %1452 = vmatpush1.bf16.msra.mxu0 %v934
    %1453 = vmatprep.subr.bf16.mxu0 0
    %1454 = vmatpush1.bf16.msra.mxu0 %v935
    %1455 = vmatprep.subr.bf16.mxu0 0
    %1456 = vmatpush1.bf16.msra.mxu0 %v936
    %1457 = vmatprep.subr.bf16.mxu0 0
    %1458 = vmatpush1.bf16.msra.mxu0 %v937
    %1459 = vmatprep.subr.bf16.mxu0 0
    %1460 = vmatpush1.bf16.msra.mxu0 %v938
    %1461 = vmatprep.subr.bf16.mxu0 0
    %1462 = vmatpush1.bf16.msra.mxu0 %v939
    %1463 = vmatprep.subr.bf16.mxu0 0
    %1464 = vmatpush1.bf16.msra.mxu0 %v940
    %1465 = vmatprep.subr.bf16.mxu0 0
    %1466 = vmatpush1.bf16.msra.mxu0 %v941
    %1467 = vmatprep.subr.bf16.mxu0 0
    %1468 = vmatpush1.bf16.msra.mxu0 %v942
    %1469 = vmatprep.subr.bf16.mxu0 0
    %1470 = vmatpush1.bf16.msra.mxu0 %v943
    %1471 = vmatprep.subr.bf16.mxu0 0
    %1472 = vmatpush1.bf16.msra.mxu0 0
    %1473 = vmatprep.subr.bf16.mxu0 0
    %1474 = vmatpush1.bf16.msra.mxu0 0
    %1475 = vmatprep.subr.bf16.mxu0 0
    %1476 = vmatpush1.bf16.msra.mxu0 0
    %1477 = vmatprep.subr.bf16.mxu0 0
    %1478 = vmatpush1.bf16.msra.mxu0 0
    %1479 = vmatprep.mubr.bf16.mxu0 %v1405
    %1480 = vmatmul.mubr.bf16.gmra.mrb[0].mxu0 %v1401
    %v1481 = vpop.f32.mrb[0].mxu0
    %v1482 = vadd.f32 0.0, %v1481
    %v1483 = vpop.f32.mrb[0].mxu0
    %v1484 = vpop.f32.mrb[0].mxu0
    %v1485 = vpop.f32.mrb[0].mxu0
    %1486 = vdwg.mxu0
    %v1487 = vmax.f32 %v1442, %v1482
    %v1489 = vrot.slane %v1095, 6
    %v1492 = vrot.slane %v1192, 4
    %v1495 = vrot.slane %v1291, 2
    %v1498 = vrot.slane %v1487, 6
    %v1500 = vsel %vm97, %v996, %v1489
    %v1501 = vsel %vm700, %v1500, %v1492
    %vm1502 = vcmask 1045504
    %v1503 = vsel %vm1502, %v1501, %v1495
    %v1504 = vsel %vm97, %v1388, %v1498
    %vm1505 = vcmask 785408
    %v1506 = vsel %vm1505, %v1503, 0.0
    %vm1507 = vcmask 781312
    %v1508 = vsel %vm1507, %v1504, 0.0
    %v1509 = vadd.f32 %v1506, %v1508
    %v1510 = vrot.slane %v1509, 4
    %v1511 = vadd.f32 %v1509, %v1510
    %v1512 = vrot.slane %v1511, 2
    %v1513 = vadd.f32 %v1511, %v1512
    %v1514 = vrot.slane %v1513, 1
    %v1515 = vadd.f32 %v1513, %v1514
    %1517 = vrot.lane.b32.xlu0 %v1515, 112
    %v1518 = vpop.permute.xlu0 %1517
    %v1520 = vadd.f32 %v1515, %v1518
    %1521 = vrot.lane.b32.xlu0 %v1515, 96
    %v1522 = vpop.permute.xlu0 %1521
    %v1524 = vadd.f32 %v1520, %v1522
    %1525 = vrot.lane.b32.xlu0 %v1515, 80
    %v1526 = vpop.permute.xlu0 %1525
    %v1528 = vadd.f32 %v1524, %v1526
    %1529 = vrot.lane.b32.xlu0 %v1515, 64
    %v1530 = vpop.permute.xlu0 %1529
    %v1532 = vadd.f32 %v1528, %v1530
    %1533 = vrot.lane.b32.xlu0 %v1515, 48
    %v1534 = vpop.permute.xlu0 %1533
    %v1536 = vadd.f32 %v1532, %v1534
    %v1537 = vmul.f32 %v1536, 0.013888889
    %1539 = vrot.lane.b32.xlu0 %v1537, 16
    %v1540 = vpop.permute.xlu0 %1539
    %1542 = vrot.lane.b32.xlu0 %v1537, 32
    %v1543 = vpop.permute.xlu0 %1542
    %1545 = vrot.lane.b32.xlu0 %v1537, 48
    %v1546 = vpop.permute.xlu0 %1545
    %1548 = vrot.lane.b32.xlu0 %v1537, 64
    %v1549 = vpop.permute.xlu0 %1548
    %1551 = vrot.lane.b32.xlu0 %v1537, 80
    %v1552 = vpop.permute.xlu0 %1551
    %vm1554 = vcmask 130048
    %v1555 = vsel %vm1554, %v1537, %v1540
    %vm1556 = vcmask 261120
    %v1557 = vsel %vm1556, %v1555, %v1543
    %vm1558 = vcmask 392192
    %v1559 = vsel %vm1558, %v1557, %v1546
    %v1560 = vsel %vm815, %v1559, %v1549
    %vm1561 = vcmask 654336
    %v1562 = vsel %vm1561, %v1560, %v1552
    %v1563 = vlaneseq
    %v1564 = vshrl.u32 %v1563, 7
    %v1565 = vsub.s32 0, %v1564
    %v1566 = vrot.slane %v1562, %v1565
    %v1567 = vsub.f32 %v1503, %v1566
    %v1568 = vsub.f32 %v1504, %v1566
    %v1569 = vmul.f32 %v1567, %v1567
    %v1570 = vmul.f32 %v1568, %v1568
    %v1571 = vsel %vm1505, %v1569, 0.0
    %v1572 = vsel %vm1507, %v1570, 0.0
    %v1573 = vadd.f32 %v1571, %v1572
    %v1574 = vrot.slane %v1573, 4
    %v1575 = vadd.f32 %v1573, %v1574
    %v1576 = vrot.slane %v1575, 2
    %v1577 = vadd.f32 %v1575, %v1576
    %v1578 = vrot.slane %v1577, 1
    %v1579 = vadd.f32 %v1577, %v1578
    %1581 = vrot.lane.b32.xlu0 %v1579, 112
    %v1582 = vpop.permute.xlu0 %1581
    %v1584 = vadd.f32 %v1579, %v1582
    %1585 = vrot.lane.b32.xlu0 %v1579, 96
    %v1586 = vpop.permute.xlu0 %1585
    %v1588 = vadd.f32 %v1584, %v1586
    %1589 = vrot.lane.b32.xlu0 %v1579, 80
    %v1590 = vpop.permute.xlu0 %1589
    %v1592 = vadd.f32 %v1588, %v1590
    %1593 = vrot.lane.b32.xlu0 %v1579, 64
    %v1594 = vpop.permute.xlu0 %1593
    %v1596 = vadd.f32 %v1592, %v1594
    %1597 = vrot.lane.b32.xlu0 %v1579, 48
    %v1598 = vpop.permute.xlu0 %1597
    %v1600 = vadd.f32 %v1596, %v1598
    %v1601 = vmul.f32 %v1600, 0.013888889
    %1603 = vrot.lane.b32.xlu0 %v1601, 16
    %v1604 = vpop.permute.xlu0 %1603
    %1606 = vrot.lane.b32.xlu0 %v1601, 32
    %v1607 = vpop.permute.xlu0 %1606
    %1609 = vrot.lane.b32.xlu0 %v1601, 48
    %v1610 = vpop.permute.xlu0 %1609
    %1612 = vrot.lane.b32.xlu0 %v1601, 64
    %v1613 = vpop.permute.xlu0 %1612
    %1615 = vrot.lane.b32.xlu0 %v1601, 80
    %v1616 = vpop.permute.xlu0 %1615
    %v1618 = vsel %vm1554, %v1601, %v1604
    %v1619 = vsel %vm1556, %v1618, %v1607
    %v1620 = vsel %vm1558, %v1619, %v1610
    %v1621 = vsel %vm815, %v1620, %v1613
    %v1622 = vsel %vm1561, %v1621, %v1616
    %v1623 = vadd.f32 %v1622, 1e-05
    %v1624 = vrsqrt.pop %v1623
    %v1625 = vld [vmem:[%s7 + $0x6] ss:$0 sm:$0xff]
    %v1626 = vmul.f32 %v1624, %v1625
    %v1627 = vlaneseq
    %v1628 = vshrl.u32 %v1627, 7
    %v1629 = vsub.s32 0, %v1628
    %v1630 = vrot.slane %v1626, %v1629
    %v1631 = vmul.f32 %v1567, %v1630
    %v1632 = vmul.f32 %v1568, %v1630
    %v1633 = vld [vmem:[%s7 + $0x7] ss:$0 sm:$0xff]
    %v1634 = vadd.f32 %v1631, %v1633
    %v1635 = vadd.f32 %v1632, %v1633
    %v1638 = vrot.slane %v1634, 6
    %v1639 = vrot.slane %v1635, 6
    %v1640 = vsel %vm97, %v1638, %v1639
    %v1643 = vsel %vm97, 0.0, %v1638
    %v1644 = vsel %vm1502, %v1640, 0.0
    %v1645 = vpack.c.bf16 %v1644, %v1643
    %1646 = vst.msk [vmem:[#allocation4] sm:$0xff] %vm1505, %v1645
    %v1647 = vld [vmem:[%s7 + $0x2] ss:$0 sm:$0xff]
    %v1648 = vld [vmem:[#allocation4] sm:$0x3f]
    %v1649 = vld [vmem:[%s3] sm:$0xf]
    %v1650 = vld [vmem:[%s3 + $0x4] sm:$0xf]
    %v1651 = vld [vmem:[%s3 + $0x8] sm:$0xf]
    %v1652 = vld [vmem:[%s3 + $0xc] sm:$0xf]
    %v1653 = vld [vmem:[%s3 + $0x10] sm:$0xf]
    %v1654 = vld [vmem:[%s3 + $0x14] sm:$0xf]
    %v1655 = vld [vmem:[%s3 + $0x18] sm:$0xf]
    %v1656 = vld [vmem:[%s3 + $0x1c] sm:$0xf]
    %v1657 = vld [vmem:[%s3 + $0x20] sm:$0xf]
    %v1658 = vld [vmem:[%s3 + $0x24] sm:$0xf]
    %v1659 = vld [vmem:[%s3 + $0x28] sm:$0xf]
    %v1660 = vld [vmem:[%s3 + $0x2c] sm:$0xf]
    %v1673 = vunpack.c.l.b16 %v1649
    %v1674 = vunpack.c.l.b16 %v1650
    %v1675 = vunpack.c.l.b16 %v1651
    %v1676 = vunpack.c.l.b16 %v1652
    %v1677 = vunpack.c.l.b16 %v1653
    %v1678 = vunpack.c.l.b16 %v1654
    %v1679 = vunpack.c.l.b16 %v1655
    %v1680 = vunpack.c.l.b16 %v1656
    %v1681 = vunpack.c.l.b16 %v1657
    %v1682 = vunpack.c.l.b16 %v1658
    %v1683 = vunpack.c.l.b16 %v1659
    %v1684 = vunpack.c.l.b16 %v1660
    %v1685 = vpack.c.b16 %v1674, %v1673
    %v1686 = vpack.c.b16 %v1676, %v1675
    %v1687 = vpack.c.b16 %v1678, %v1677
    %v1688 = vpack.c.b16 %v1680, %v1679
    %v1689 = vpack.c.b16 %v1682, %v1681
    %v1690 = vpack.c.b16 %v1684, %v1683
    %v1698 = vsel %vm1505, %v1648, 0
    %1700 = vmatprep.subr.bf16.mxu0 0
    %1701 = vmatpush1.bf16.msra.mxu0 %v1685
    %1702 = vmatprep.subr.bf16.mxu0 0
    %1703 = vmatpush1.bf16.msra.mxu0 %v1686
    %1704 = vmatprep.subr.bf16.mxu0 0
    %1705 = vmatpush1.bf16.msra.mxu0 %v1687
    %1706 = vmatprep.subr.bf16.mxu0 0
    %1707 = vmatpush1.bf16.msra.mxu0 %v1688
    %1708 = vmatprep.subr.bf16.mxu0 0
    %1709 = vmatpush1.bf16.msra.mxu0 %v1689
    %1710 = vmatprep.subr.bf16.mxu0 0
    %1711 = vmatpush1.bf16.msra.mxu0 %v1690
    %1712 = vmatprep.subr.bf16.mxu0 0
    %1713 = vmatpush1.bf16.msra.mxu0 0
    %1714 = vmatprep.subr.bf16.mxu0 0
    %1715 = vmatpush1.bf16.msra.mxu0 0
    %1716 = vmatprep.subr.bf16.mxu0 0
    %1717 = vmatpush1.bf16.msra.mxu0 0
    %1718 = vmatprep.subr.bf16.mxu0 0
    %1719 = vmatpush1.bf16.msra.mxu0 0
    %1720 = vmatprep.subr.bf16.mxu0 0
    %1721 = vmatpush1.bf16.msra.mxu0 0
    %1722 = vmatprep.subr.bf16.mxu0 0
    %1723 = vmatpush1.bf16.msra.mxu0 0
    %1724 = vmatprep.subr.bf16.mxu0 0
    %1725 = vmatpush1.bf16.msra.mxu0 0
    %1726 = vmatprep.subr.bf16.mxu0 0
    %1727 = vmatpush1.bf16.msra.mxu0 0
    %1728 = vmatprep.subr.bf16.mxu0 0
    %1729 = vmatpush1.bf16.msra.mxu0 0
    %1730 = vmatprep.subr.bf16.mxu0 0
    %1731 = vmatpush1.bf16.msra.mxu0 0
    %1732 = vmatprep.mubr.bf16.mxu0 0
    %1733 = vmatmul.mubr.bf16.gmra.mrb[0].mxu0 %v1698
    %v1734 = vpop.f32.mrb[0].mxu0
    %v1735 = vadd.f32 0.0, %v1734
    %v1736 = vpop.f32.mrb[0].mxu0
    %v1737 = vpop.f32.mrb[0].mxu0
    %v1738 = vadd.f32 0.0, %v1737
    %v1739 = vpop.f32.mrb[0].mxu0
    %1740 = vdwg.mxu0
    %v1741 = vadd.f32 %v1647, %v1735
    %v1742 = vadd.f32 %v1647, %v1738
    %v1743 = vld [vmem:[#allocation4] sm:$0x7e]
    %s1744 = scalar_lea.vmem %s3, 48
    %v1745 = vld [vmem:[%s1744] sm:$0xf]
    %v1746 = vld [vmem:[%s1744 + $0x4] sm:$0xf]
    %v1747 = vld [vmem:[%s1744 + $0x8] sm:$0xf]
    %v1748 = vld [vmem:[%s1744 + $0xc] sm:$0xf]
    %v1749 = vld [vmem:[%s1744 + $0x10] sm:$0xf]
    %v1750 = vld [vmem:[%s1744 + $0x14] sm:$0xf]
    %v1751 = vld [vmem:[%s1744 + $0x18] sm:$0xf]
    %v1752 = vld [vmem:[%s1744 + $0x1c] sm:$0xf]
    %v1753 = vld [vmem:[%s1744 + $0x20] sm:$0xf]
    %v1754 = vld [vmem:[%s1744 + $0x24] sm:$0xf]
    %v1755 = vld [vmem:[%s1744 + $0x28] sm:$0xf]
    %v1756 = vld [vmem:[%s1744 + $0x2c] sm:$0xf]
    %v1758 = vrot.slane %v1743, 1
    %v1771 = vunpack.c.l.b16 %v1745
    %v1772 = vunpack.c.l.b16 %v1746
    %v1773 = vunpack.c.l.b16 %v1747
    %v1774 = vunpack.c.l.b16 %v1748
    %v1775 = vunpack.c.l.b16 %v1749
    %v1776 = vunpack.c.l.b16 %v1750
    %v1777 = vunpack.c.l.b16 %v1751
    %v1778 = vunpack.c.l.b16 %v1752
    %v1779 = vunpack.c.l.b16 %v1753
    %v1780 = vunpack.c.l.b16 %v1754
    %v1781 = vunpack.c.l.b16 %v1755
    %v1782 = vunpack.c.l.b16 %v1756
    %v1783 = vpack.c.b16 %v1772, %v1771
    %v1784 = vpack.c.b16 %v1774, %v1773
    %v1785 = vpack.c.b16 %v1776, %v1775
    %v1786 = vpack.c.b16 %v1778, %v1777
    %v1787 = vpack.c.b16 %v1780, %v1779
    %v1788 = vpack.c.b16 %v1782, %v1781
    %v1796 = vsel %vm1505, %v1758, 0
    %1798 = vmatprep.subr.bf16.mxu0 0
    %1799 = vmatpush1.bf16.msra.mxu0 %v1783
    %1800 = vmatprep.subr.bf16.mxu0 0
    %1801 = vmatpush1.bf16.msra.mxu0 %v1784
    %1802 = vmatprep.subr.bf16.mxu0 0
    %1803 = vmatpush1.bf16.msra.mxu0 %v1785
    %1804 = vmatprep.subr.bf16.mxu0 0
    %1805 = vmatpush1.bf16.msra.mxu0 %v1786
    %1806 = vmatprep.subr.bf16.mxu0 0
    %1807 = vmatpush1.bf16.msra.mxu0 %v1787
    %1808 = vmatprep.subr.bf16.mxu0 0
    %1809 = vmatpush1.bf16.msra.mxu0 %v1788
    %1810 = vmatprep.subr.bf16.mxu0 0
    %1811 = vmatpush1.bf16.msra.mxu0 0
    %1812 = vmatprep.subr.bf16.mxu0 0
    %1813 = vmatpush1.bf16.msra.mxu0 0
    %1814 = vmatprep.subr.bf16.mxu0 0
    %1815 = vmatpush1.bf16.msra.mxu0 0
    %1816 = vmatprep.subr.bf16.mxu0 0
    %1817 = vmatpush1.bf16.msra.mxu0 0
    %1818 = vmatprep.subr.bf16.mxu0 0
    %1819 = vmatpush1.bf16.msra.mxu0 0
    %1820 = vmatprep.subr.bf16.mxu0 0
    %1821 = vmatpush1.bf16.msra.mxu0 0
    %1822 = vmatprep.subr.bf16.mxu0 0
    %1823 = vmatpush1.bf16.msra.mxu0 0
    %1824 = vmatprep.subr.bf16.mxu0 0
    %1825 = vmatpush1.bf16.msra.mxu0 0
    %1826 = vmatprep.subr.bf16.mxu0 0
    %1827 = vmatpush1.bf16.msra.mxu0 0
    %1828 = vmatprep.subr.bf16.mxu0 0
    %1829 = vmatpush1.bf16.msra.mxu0 0
    %1830 = vmatprep.mubr.bf16.mxu0 0
    %1831 = vmatmul.mubr.bf16.gmra.mrb[0].mxu0 %v1796
    %v1832 = vpop.f32.mrb[0].mxu0
    %v1833 = vadd.f32 0.0, %v1832
    %v1834 = vpop.f32.mrb[0].mxu0
    %v1835 = vpop.f32.mrb[0].mxu0
    %v1836 = vadd.f32 0.0, %v1835
    %v1837 = vpop.f32.mrb[0].mxu0
    %1838 = vdwg.mxu0
    %v1839 = vadd.f32 %v1741, %v1833
    %v1840 = vadd.f32 %v1742, %v1836
    %v1841 = vld [vmem:[#allocation4] sm:$0xfc]
    %s1842 = scalar_lea.vmem %s3, 96
    %v1843 = vld [vmem:[%s1842] sm:$0xf]
    %v1844 = vld [vmem:[%s1842 + $0x4] sm:$0xf]
    %v1845 = vld [vmem:[%s1842 + $0x8] sm:$0xf]
    %v1846 = vld [vmem:[%s1842 + $0xc] sm:$0xf]
    %v1847 = vld [vmem:[%s1842 + $0x10] sm:$0xf]
    %v1848 = vld [vmem:[%s1842 + $0x14] sm:$0xf]
    %v1849 = vld [vmem:[%s1842 + $0x18] sm:$0xf]
    %v1850 = vld [vmem:[%s1842 + $0x1c] sm:$0xf]
    %v1851 = vld [vmem:[%s1842 + $0x20] sm:$0xf]
    %v1852 = vld [vmem:[%s1842 + $0x24] sm:$0xf]
    %v1853 = vld [vmem:[%s1842 + $0x28] sm:$0xf]
    %v1854 = vld [vmem:[%s1842 + $0x2c] sm:$0xf]
    %v1856 = vrot.slane %v1841, 2
    %v1869 = vunpack.c.l.b16 %v1843
    %v1870 = vunpack.c.l.b16 %v1844
    %v1871 = vunpack.c.l.b16 %v1845
    %v1872 = vunpack.c.l.b16 %v1846
    %v1873 = vunpack.c.l.b16 %v1847
    %v1874 = vunpack.c.l.b16 %v1848
    %v1875 = vunpack.c.l.b16 %v1849
    %v1876 = vunpack.c.l.b16 %v1850
    %v1877 = vunpack.c.l.b16 %v1851
    %v1878 = vunpack.c.l.b16 %v1852
    %v1879 = vunpack.c.l.b16 %v1853
    %v1880 = vunpack.c.l.b16 %v1854
    %v1881 = vpack.c.b16 %v1870, %v1869
    %v1882 = vpack.c.b16 %v1872, %v1871
    %v1883 = vpack.c.b16 %v1874, %v1873
    %v1884 = vpack.c.b16 %v1876, %v1875
    %v1885 = vpack.c.b16 %v1878, %v1877
    %v1886 = vpack.c.b16 %v1880, %v1879
    %v1894 = vsel %vm1505, %v1856, 0
    %1896 = vmatprep.subr.bf16.mxu0 0
    %1897 = vmatpush1.bf16.msra.mxu0 %v1881
    %1898 = vmatprep.subr.bf16.mxu0 0
    %1899 = vmatpush1.bf16.msra.mxu0 %v1882
    %1900 = vmatprep.subr.bf16.mxu0 0
    %1901 = vmatpush1.bf16.msra.mxu0 %v1883
    %1902 = vmatprep.subr.bf16.mxu0 0
    %1903 = vmatpush1.bf16.msra.mxu0 %v1884
    %1904 = vmatprep.subr.bf16.mxu0 0
    %1905 = vmatpush1.bf16.msra.mxu0 %v1885
    %1906 = vmatprep.subr.bf16.mxu0 0
    %1907 = vmatpush1.bf16.msra.mxu0 %v1886
    %1908 = vmatprep.subr.bf16.mxu0 0
    %1909 = vmatpush1.bf16.msra.mxu0 0
    %1910 = vmatprep.subr.bf16.mxu0 0
    %1911 = vmatpush1.bf16.msra.mxu0 0
    %1912 = vmatprep.subr.bf16.mxu0 0
    %1913 = vmatpush1.bf16.msra.mxu0 0
    %1914 = vmatprep.subr.bf16.mxu0 0
    %1915 = vmatpush1.bf16.msra.mxu0 0
    %1916 = vmatprep.subr.bf16.mxu0 0
    %1917 = vmatpush1.bf16.msra.mxu0 0
    %1918 = vmatprep.subr.bf16.mxu0 0
    %1919 = vmatpush1.bf16.msra.mxu0 0
    %1920 = vmatprep.subr.bf16.mxu0 0
    %1921 = vmatpush1.bf16.msra.mxu0 0
    %1922 = vmatprep.subr.bf16.mxu0 0
    %1923 = vmatpush1.bf16.msra.mxu0 0
    %1924 = vmatprep.subr.bf16.mxu0 0
    %1925 = vmatpush1.bf16.msra.mxu0 0
    %1926 = vmatprep.subr.bf16.mxu0 0
    %1927 = vmatpush1.bf16.msra.mxu0 0
    %1928 = vmatprep.mubr.bf16.mxu0 0
    %1929 = vmatmul.mubr.bf16.gmra.mrb[0].mxu0 %v1894
    %v1930 = vpop.f32.mrb[0].mxu0
    %v1931 = vadd.f32 0.0, %v1930
    %v1932 = vpop.f32.mrb[0].mxu0
    %v1933 = vpop.f32.mrb[0].mxu0
    %v1934 = vadd.f32 0.0, %v1933
    %v1935 = vpop.f32.mrb[0].mxu0
    %1936 = vdwg.mxu0
    %v1937 = vadd.f32 %v1839, %v1931
    %v1938 = vadd.f32 %v1840, %v1934
    %v1939 = vmax.f32 %v1937, 0.0
    %v1940 = vmax.f32 %v1938, 0.0
    %v1943 = vrot.slane %v1939, 6
    %v1944 = vrot.slane %v1940, 6
    %v1945 = vsel %vm97, %v1943, %v1944
    %v1948 = vsel %vm97, 0.0, %v1943
    %v1949 = vsel %vm1502, %v1945, 0.0
    %v1950 = vpack.c.bf16 %v1949, %v1948
    %1951 = vst.msk [vmem:[#allocation5] sm:$0xff] %vm1505, %v1950
    %v1952 = vld [vmem:[%s7 + $0x3] ss:$0 sm:$0xff]
    %v1953 = vld [vmem:[#allocation5] sm:$0x3f]
    %s1954 = scalar_lea.vmem %s3, 144
    %v1955 = vld [vmem:[%s1954] sm:$0xf]
    %v1956 = vld [vmem:[%s1954 + $0x4] sm:$0xf]
    %v1957 = vld [vmem:[%s1954 + $0x8] sm:$0xf]
    %v1958 = vld [vmem:[%s1954 + $0xc] sm:$0xf]
    %v1959 = vld [vmem:[%s1954 + $0x10] sm:$0xf]
    %v1960 = vld [vmem:[%s1954 + $0x14] sm:$0xf]
    %v1961 = vld [vmem:[%s1954 + $0x18] sm:$0xf]
    %v1962 = vld [vmem:[%s1954 + $0x1c] sm:$0xf]
    %v1963 = vld [vmem:[%s1954 + $0x20] sm:$0xf]
    %v1964 = vld [vmem:[%s1954 + $0x24] sm:$0xf]
    %v1965 = vld [vmem:[%s1954 + $0x28] sm:$0xf]
    %v1966 = vld [vmem:[%s1954 + $0x2c] sm:$0xf]
    %v1979 = vunpack.c.l.b16 %v1955
    %v1980 = vunpack.c.l.b16 %v1956
    %v1981 = vunpack.c.l.b16 %v1957
    %v1982 = vunpack.c.l.b16 %v1958
    %v1983 = vunpack.c.l.b16 %v1959
    %v1984 = vunpack.c.l.b16 %v1960
    %v1985 = vunpack.c.l.b16 %v1961
    %v1986 = vunpack.c.l.b16 %v1962
    %v1987 = vunpack.c.l.b16 %v1963
    %v1988 = vunpack.c.l.b16 %v1964
    %v1989 = vunpack.c.l.b16 %v1965
    %v1990 = vunpack.c.l.b16 %v1966
    %v1991 = vpack.c.b16 %v1980, %v1979
    %v1992 = vpack.c.b16 %v1982, %v1981
    %v1993 = vpack.c.b16 %v1984, %v1983
    %v1994 = vpack.c.b16 %v1986, %v1985
    %v1995 = vpack.c.b16 %v1988, %v1987
    %v1996 = vpack.c.b16 %v1990, %v1989
    %v2004 = vsel %vm1505, %v1953, 0
    %2006 = vmatprep.subr.bf16.mxu0 0
    %2007 = vmatpush1.bf16.msra.mxu0 %v1991
    %2008 = vmatprep.subr.bf16.mxu0 0
    %2009 = vmatpush1.bf16.msra.mxu0 %v1992
    %2010 = vmatprep.subr.bf16.mxu0 0
    %2011 = vmatpush1.bf16.msra.mxu0 %v1993
    %2012 = vmatprep.subr.bf16.mxu0 0
    %2013 = vmatpush1.bf16.msra.mxu0 %v1994
    %2014 = vmatprep.subr.bf16.mxu0 0
    %2015 = vmatpush1.bf16.msra.mxu0 %v1995
    %2016 = vmatprep.subr.bf16.mxu0 0
    %2017 = vmatpush1.bf16.msra.mxu0 %v1996
    %2018 = vmatprep.subr.bf16.mxu0 0
    %2019 = vmatpush1.bf16.msra.mxu0 0
    %2020 = vmatprep.subr.bf16.mxu0 0
    %2021 = vmatpush1.bf16.msra.mxu0 0
    %2022 = vmatprep.subr.bf16.mxu0 0
    %2023 = vmatpush1.bf16.msra.mxu0 0
    %2024 = vmatprep.subr.bf16.mxu0 0
    %2025 = vmatpush1.bf16.msra.mxu0 0
    %2026 = vmatprep.subr.bf16.mxu0 0
    %2027 = vmatpush1.bf16.msra.mxu0 0
    %2028 = vmatprep.subr.bf16.mxu0 0
    %2029 = vmatpush1.bf16.msra.mxu0 0
    %2030 = vmatprep.subr.bf16.mxu0 0
    %2031 = vmatpush1.bf16.msra.mxu0 0
    %2032 = vmatprep.subr.bf16.mxu0 0
    %2033 = vmatpush1.bf16.msra.mxu0 0
    %2034 = vmatprep.subr.bf16.mxu0 0
    %2035 = vmatpush1.bf16.msra.mxu0 0
    %2036 = vmatprep.subr.bf16.mxu0 0
    %2037 = vmatpush1.bf16.msra.mxu0 0
    %2038 = vmatprep.mubr.bf16.mxu0 0
    %2039 = vmatmul.mubr.bf16.gmra.mrb[0].mxu0 %v2004
    %v2040 = vpop.f32.mrb[0].mxu0
    %v2041 = vadd.f32 0.0, %v2040
    %v2042 = vpop.f32.mrb[0].mxu0
    %v2043 = vpop.f32.mrb[0].mxu0
    %v2044 = vadd.f32 0.0, %v2043
    %v2045 = vpop.f32.mrb[0].mxu0
    %2046 = vdwg.mxu0
    %v2047 = vadd.f32 %v1952, %v2041
    %v2048 = vadd.f32 %v1952, %v2044
    %v2049 = vld [vmem:[#allocation5] sm:$0x7e]
    %s2050 = scalar_lea.vmem %s3, 192
    %v2051 = vld [vmem:[%s2050] sm:$0xf]
    %v2052 = vld [vmem:[%s2050 + $0x4] sm:$0xf]
    %v2053 = vld [vmem:[%s2050 + $0x8] sm:$0xf]
    %v2054 = vld [vmem:[%s2050 + $0xc] sm:$0xf]
    %v2055 = vld [vmem:[%s2050 + $0x10] sm:$0xf]
    %v2056 = vld [vmem:[%s2050 + $0x14] sm:$0xf]
    %v2057 = vld [vmem:[%s2050 + $0x18] sm:$0xf]
    %v2058 = vld [vmem:[%s2050 + $0x1c] sm:$0xf]
    %v2059 = vld [vmem:[%s2050 + $0x20] sm:$0xf]
    %v2060 = vld [vmem:[%s2050 + $0x24] sm:$0xf]
    %v2061 = vld [vmem:[%s2050 + $0x28] sm:$0xf]
    %v2062 = vld [vmem:[%s2050 + $0x2c] sm:$0xf]
    %v2064 = vrot.slane %v2049, 1
    %v2077 = vunpack.c.l.b16 %v2051
    %v2078 = vunpack.c.l.b16 %v2052
    %v2079 = vunpack.c.l.b16 %v2053
    %v2080 = vunpack.c.l.b16 %v2054
    %v2081 = vunpack.c.l.b16 %v2055
    %v2082 = vunpack.c.l.b16 %v2056
    %v2083 = vunpack.c.l.b16 %v2057
    %v2084 = vunpack.c.l.b16 %v2058
    %v2085 = vunpack.c.l.b16 %v2059
    %v2086 = vunpack.c.l.b16 %v2060
    %v2087 = vunpack.c.l.b16 %v2061
    %v2088 = vunpack.c.l.b16 %v2062
    %v2089 = vpack.c.b16 %v2078, %v2077
    %v2090 = vpack.c.b16 %v2080, %v2079
    %v2091 = vpack.c.b16 %v2082, %v2081
    %v2092 = vpack.c.b16 %v2084, %v2083
    %v2093 = vpack.c.b16 %v2086, %v2085
    %v2094 = vpack.c.b16 %v2088, %v2087
    %v2102 = vsel %vm1505, %v2064, 0
    %2104 = vmatprep.subr.bf16.mxu0 0
    %2105 = vmatpush1.bf16.msra.mxu0 %v2089
    %2106 = vmatprep.subr.bf16.mxu0 0
    %2107 = vmatpush1.bf16.msra.mxu0 %v2090
    %2108 = vmatprep.subr.bf16.mxu0 0
    %2109 = vmatpush1.bf16.msra.mxu0 %v2091
    %2110 = vmatprep.subr.bf16.mxu0 0
    %2111 = vmatpush1.bf16.msra.mxu0 %v2092
    %2112 = vmatprep.subr.bf16.mxu0 0
    %2113 = vmatpush1.bf16.msra.mxu0 %v2093
    %2114 = vmatprep.subr.bf16.mxu0 0
    %2115 = vmatpush1.bf16.msra.mxu0 %v2094
    %2116 = vmatprep.subr.bf16.mxu0 0
    %2117 = vmatpush1.bf16.msra.mxu0 0
    %2118 = vmatprep.subr.bf16.mxu0 0
    %2119 = vmatpush1.bf16.msra.mxu0 0
    %2120 = vmatprep.subr.bf16.mxu0 0
    %2121 = vmatpush1.bf16.msra.mxu0 0
    %2122 = vmatprep.subr.bf16.mxu0 0
    %2123 = vmatpush1.bf16.msra.mxu0 0
    %2124 = vmatprep.subr.bf16.mxu0 0
    %2125 = vmatpush1.bf16.msra.mxu0 0
    %2126 = vmatprep.subr.bf16.mxu0 0
    %2127 = vmatpush1.bf16.msra.mxu0 0
    %2128 = vmatprep.subr.bf16.mxu0 0
    %2129 = vmatpush1.bf16.msra.mxu0 0
    %2130 = vmatprep.subr.bf16.mxu0 0
    %2131 = vmatpush1.bf16.msra.mxu0 0
    %2132 = vmatprep.subr.bf16.mxu0 0
    %2133 = vmatpush1.bf16.msra.mxu0 0
    %2134 = vmatprep.subr.bf16.mxu0 0
    %2135 = vmatpush1.bf16.msra.mxu0 0
    %2136 = vmatprep.mubr.bf16.mxu0 0
    %2137 = vmatmul.mubr.bf16.gmra.mrb[0].mxu0 %v2102
    %v2138 = vpop.f32.mrb[0].mxu0
    %v2139 = vadd.f32 0.0, %v2138
    %v2140 = vpop.f32.mrb[0].mxu0
    %v2141 = vpop.f32.mrb[0].mxu0
    %v2142 = vadd.f32 0.0, %v2141
    %v2143 = vpop.f32.mrb[0].mxu0
    %2144 = vdwg.mxu0
    %v2145 = vadd.f32 %v2047, %v2139
    %v2146 = vadd.f32 %v2048, %v2142
    %v2147 = vld [vmem:[#allocation5] sm:$0xfc]
    %s2148 = scalar_lea.vmem %s3, 240
    %v2149 = vld [vmem:[%s2148] sm:$0xf]
    %v2150 = vld [vmem:[%s2148 + $0x4] sm:$0xf]
    %v2151 = vld [vmem:[%s2148 + $0x8] sm:$0xf]
    %v2152 = vld [vmem:[%s2148 + $0xc] sm:$0xf]
    %v2153 = vld [vmem:[%s2148 + $0x10] sm:$0xf]
    %v2154 = vld [vmem:[%s2148 + $0x14] sm:$0xf]
    %v2155 = vld [vmem:[%s2148 + $0x18] sm:$0xf]
    %v2156 = vld [vmem:[%s2148 + $0x1c] sm:$0xf]
    %v2157 = vld [vmem:[%s2148 + $0x20] sm:$0xf]
    %v2158 = vld [vmem:[%s2148 + $0x24] sm:$0xf]
    %v2159 = vld [vmem:[%s2148 + $0x28] sm:$0xf]
    %v2160 = vld [vmem:[%s2148 + $0x2c] sm:$0xf]
    %v2162 = vrot.slane %v2147, 2
    %v2175 = vunpack.c.l.b16 %v2149
    %v2176 = vunpack.c.l.b16 %v2150
    %v2177 = vunpack.c.l.b16 %v2151
    %v2178 = vunpack.c.l.b16 %v2152
    %v2179 = vunpack.c.l.b16 %v2153
    %v2180 = vunpack.c.l.b16 %v2154
    %v2181 = vunpack.c.l.b16 %v2155
    %v2182 = vunpack.c.l.b16 %v2156
    %v2183 = vunpack.c.l.b16 %v2157
    %v2184 = vunpack.c.l.b16 %v2158
    %v2185 = vunpack.c.l.b16 %v2159
    %v2186 = vunpack.c.l.b16 %v2160
    %v2187 = vpack.c.b16 %v2176, %v2175
    %v2188 = vpack.c.b16 %v2178, %v2177
    %v2189 = vpack.c.b16 %v2180, %v2179
    %v2190 = vpack.c.b16 %v2182, %v2181
    %v2191 = vpack.c.b16 %v2184, %v2183
    %v2192 = vpack.c.b16 %v2186, %v2185
    %v2200 = vsel %vm1505, %v2162, 0
    %2202 = vmatprep.subr.bf16.mxu0 0
    %2203 = vmatpush1.bf16.msra.mxu0 %v2187
    %2204 = vmatprep.subr.bf16.mxu0 0
    %2205 = vmatpush1.bf16.msra.mxu0 %v2188
    %2206 = vmatprep.subr.bf16.mxu0 0
    %2207 = vmatpush1.bf16.msra.mxu0 %v2189
    %2208 = vmatprep.subr.bf16.mxu0 0
    %2209 = vmatpush1.bf16.msra.mxu0 %v2190
    %2210 = vmatprep.subr.bf16.mxu0 0
    %2211 = vmatpush1.bf16.msra.mxu0 %v2191
    %2212 = vmatprep.subr.bf16.mxu0 0
    %2213 = vmatpush1.bf16.msra.mxu0 %v2192
    %2214 = vmatprep.subr.bf16.mxu0 0
    %2215 = vmatpush1.bf16.msra.mxu0 0
    %2216 = vmatprep.subr.bf16.mxu0 0
    %2217 = vmatpush1.bf16.msra.mxu0 0
    %2218 = vmatprep.subr.bf16.mxu0 0
    %2219 = vmatpush1.bf16.msra.mxu0 0
    %2220 = vmatprep.subr.bf16.mxu0 0
    %2221 = vmatpush1.bf16.msra.mxu0 0
    %2222 = vmatprep.subr.bf16.mxu0 0
    %2223 = vmatpush1.bf16.msra.mxu0 0
    %2224 = vmatprep.subr.bf16.mxu0 0
    %2225 = vmatpush1.bf16.msra.mxu0 0
    %2226 = vmatprep.subr.bf16.mxu0 0
    %2227 = vmatpush1.bf16.msra.mxu0 0
    %2228 = vmatprep.subr.bf16.mxu0 0
    %2229 = vmatpush1.bf16.msra.mxu0 0
    %2230 = vmatprep.subr.bf16.mxu0 0
    %2231 = vmatpush1.bf16.msra.mxu0 0
    %2232 = vmatprep.subr.bf16.mxu0 0
    %2233 = vmatpush1.bf16.msra.mxu0 0
    %2234 = vmatprep.mubr.bf16.mxu0 0
    %2235 = vmatmul.mubr.bf16.gmra.mrb[0].mxu0 %v2200
    %v2236 = vpop.f32.mrb[0].mxu0
    %v2237 = vadd.f32 0.0, %v2236
    %v2238 = vpop.f32.mrb[0].mxu0
    %v2239 = vpop.f32.mrb[0].mxu0
    %v2240 = vadd.f32 0.0, %v2239
    %v2241 = vpop.f32.mrb[0].mxu0
    %2242 = vdwg.mxu0
    %v2243 = vadd.f32 %v2145, %v2237
    %v2244 = vadd.f32 %v2146, %v2240
    %v2245 = vmax.f32 %v2243, 0.0
    %v2246 = vmax.f32 %v2244, 0.0
    %v2247 = vsel %vm1505, %v2245, 0.0
    %v2248 = vsel %vm1507, %v2246, 0.0
    %v2249 = vadd.f32 %v2247, %v2248
    %v2250 = vrot.slane %v2249, 4
    %v2251 = vadd.f32 %v2249, %v2250
    %v2252 = vrot.slane %v2251, 2
    %v2253 = vadd.f32 %v2251, %v2252
    %v2254 = vrot.slane %v2253, 1
    %v2255 = vadd.f32 %v2253, %v2254
    %2257 = vrot.lane.b32.xlu0 %v2255, 112
    %v2258 = vpop.permute.xlu0 %2257
    %v2260 = vadd.f32 %v2255, %v2258
    %2261 = vrot.lane.b32.xlu0 %v2255, 96
    %v2262 = vpop.permute.xlu0 %2261
    %v2264 = vadd.f32 %v2260, %v2262
    %2265 = vrot.lane.b32.xlu0 %v2255, 80
    %v2266 = vpop.permute.xlu0 %2265
    %v2268 = vadd.f32 %v2264, %v2266
    %2269 = vrot.lane.b32.xlu0 %v2255, 64
    %v2270 = vpop.permute.xlu0 %2269
    %v2272 = vadd.f32 %v2268, %v2270
    %2273 = vrot.lane.b32.xlu0 %v2255, 48
    %v2274 = vpop.permute.xlu0 %2273
    %v2276 = vadd.f32 %v2272, %v2274
    %v2277 = vmul.f32 %v2276, 0.013888889
    %2279 = vrot.lane.b32.xlu0 %v2277, 16
    %v2280 = vpop.permute.xlu0 %2279
    %2282 = vrot.lane.b32.xlu0 %v2277, 32
    %v2283 = vpop.permute.xlu0 %2282
    %2285 = vrot.lane.b32.xlu0 %v2277, 48
    %v2286 = vpop.permute.xlu0 %2285
    %2288 = vrot.lane.b32.xlu0 %v2277, 64
    %v2289 = vpop.permute.xlu0 %2288
    %2291 = vrot.lane.b32.xlu0 %v2277, 80
    %v2292 = vpop.permute.xlu0 %2291
    %v2294 = vsel %vm1554, %v2277, %v2280
    %v2295 = vsel %vm1556, %v2294, %v2283
    %v2296 = vsel %vm1558, %v2295, %v2286
    %v2297 = vsel %vm815, %v2296, %v2289
    %v2298 = vsel %vm1561, %v2297, %v2292
    %v2299 = vlaneseq
    %v2300 = vshrl.u32 %v2299, 7
    %v2301 = vsub.s32 0, %v2300
    %v2302 = vrot.slane %v2298, %v2301
    %v2303 = vsub.f32 %v2245, %v2302
    %v2304 = vsub.f32 %v2246, %v2302
    %v2305 = vmul.f32 %v2303, %v2303
    %v2306 = vmul.f32 %v2304, %v2304
    %v2307 = vsel %vm1505, %v2305, 0.0
    %v2308 = vsel %vm1507, %v2306, 0.0
    %v2309 = vadd.f32 %v2307, %v2308
    %v2310 = vrot.slane %v2309, 4
    %v2311 = vadd.f32 %v2309, %v2310
    %v2312 = vrot.slane %v2311, 2
    %v2313 = vadd.f32 %v2311, %v2312
    %v2314 = vrot.slane %v2313, 1
    %v2315 = vadd.f32 %v2313, %v2314
    %2317 = vrot.lane.b32.xlu0 %v2315, 112
    %v2318 = vpop.permute.xlu0 %2317
    %v2320 = vadd.f32 %v2315, %v2318
    %2321 = vrot.lane.b32.xlu0 %v2315, 96
    %v2322 = vpop.permute.xlu0 %2321
    %v2324 = vadd.f32 %v2320, %v2322
    %2325 = vrot.lane.b32.xlu0 %v2315, 80
    %v2326 = vpop.permute.xlu0 %2325
    %v2328 = vadd.f32 %v2324, %v2326
    %2329 = vrot.lane.b32.xlu0 %v2315, 64
    %v2330 = vpop.permute.xlu0 %2329
    %v2332 = vadd.f32 %v2328, %v2330
    %2333 = vrot.lane.b32.xlu0 %v2315, 48
    %v2334 = vpop.permute.xlu0 %2333
    %v2336 = vadd.f32 %v2332, %v2334
    %v2337 = vmul.f32 %v2336, 0.013888889
    %2339 = vrot.lane.b32.xlu0 %v2337, 16
    %v2340 = vpop.permute.xlu0 %2339
    %2342 = vrot.lane.b32.xlu0 %v2337, 32
    %v2343 = vpop.permute.xlu0 %2342
    %2345 = vrot.lane.b32.xlu0 %v2337, 48
    %v2346 = vpop.permute.xlu0 %2345
    %2348 = vrot.lane.b32.xlu0 %v2337, 64
    %v2349 = vpop.permute.xlu0 %2348
    %2351 = vrot.lane.b32.xlu0 %v2337, 80
    %v2352 = vpop.permute.xlu0 %2351
    %v2354 = vsel %vm1554, %v2337, %v2340
    %v2355 = vsel %vm1556, %v2354, %v2343
    %v2356 = vsel %vm1558, %v2355, %v2346
    %v2357 = vsel %vm815, %v2356, %v2349
    %v2358 = vsel %vm1561, %v2357, %v2352
    %v2359 = vadd.f32 %v2358, 1e-05
    %v2360 = vrsqrt.pop %v2359
    %v2361 = vld [vmem:[%s7 + $0x10] ss:$0 sm:$0xff]
    %v2362 = vmul.f32 %v2360, %v2361
    %v2363 = vlaneseq
    %v2364 = vshrl.u32 %v2363, 7
    %v2365 = vsub.s32 0, %v2364
    %v2366 = vrot.slane %v2362, %v2365
    %v2367 = vmul.f32 %v2303, %v2366
    %v2368 = vmul.f32 %v2304, %v2366
    %v2369 = vld [vmem:[%s7 + $0x11] ss:$0 sm:$0xff]
    %v2370 = vadd.f32 %v2367, %v2369
    %v2371 = vadd.f32 %v2368, %v2369
    %v2374 = vrot.slane %v2370, 6
    %v2375 = vrot.slane %v2371, 6
    %v2376 = vsel %vm97, %v2374, %v2375
    %v2379 = vsel %vm97, 0.0, %v2374
    %v2380 = vsel %vm1502, %v2376, 0.0
    %v2381 = vpack.c.bf16 %v2380, %v2379
    %2382 = vst.msk [vmem:[#allocation4] sm:$0xff] %vm1505, %v2381
    %v2383 = vld [vmem:[%s7 + $0x4] ss:$0 sm:$0xff]
    %v2384 = vld [vmem:[#allocation4] sm:$0x3f]
    %s2385 = scalar_lea.vmem %s3, 288
    %v2386 = vld [vmem:[%s2385] sm:$0xf]
    %v2387 = vld [vmem:[%s2385 + $0x4] sm:$0xf]
    %v2388 = vld [vmem:[%s2385 + $0x8] sm:$0xf]
    %v2389 = vld [vmem:[%s2385 + $0xc] sm:$0xf]
    %v2390 = vld [vmem:[%s2385 + $0x10] sm:$0xf]
    %v2391 = vld [vmem:[%s2385 + $0x14] sm:$0xf]
    %v2392 = vld [vmem:[%s2385 + $0x18] sm:$0xf]
    %v2393 = vld [vmem:[%s2385 + $0x1c] sm:$0xf]
    %v2394 = vld [vmem:[%s2385 + $0x20] sm:$0xf]
    %v2395 = vld [vmem:[%s2385 + $0x24] sm:$0xf]
    %v2396 = vld [vmem:[%s2385 + $0x28] sm:$0xf]
    %v2397 = vld [vmem:[%s2385 + $0x2c] sm:$0xf]
    %v2410 = vunpack.c.l.b16 %v2386
    %v2411 = vunpack.c.l.b16 %v2387
    %v2412 = vunpack.c.l.b16 %v2388
    %v2413 = vunpack.c.l.b16 %v2389
    %v2414 = vunpack.c.l.b16 %v2390
    %v2415 = vunpack.c.l.b16 %v2391
    %v2416 = vunpack.c.l.b16 %v2392
    %v2417 = vunpack.c.l.b16 %v2393
    %v2418 = vunpack.c.l.b16 %v2394
    %v2419 = vunpack.c.l.b16 %v2395
    %v2420 = vunpack.c.l.b16 %v2396
    %v2421 = vunpack.c.l.b16 %v2397
    %v2422 = vpack.c.b16 %v2411, %v2410
    %v2423 = vpack.c.b16 %v2413, %v2412
    %v2424 = vpack.c.b16 %v2415, %v2414
    %v2425 = vpack.c.b16 %v2417, %v2416
    %v2426 = vpack.c.b16 %v2419, %v2418
    %v2427 = vpack.c.b16 %v2421, %v2420
    %v2435 = vsel %vm1505, %v2384, 0
    %2437 = vmatprep.subr.bf16.mxu0 0
    %2438 = vmatpush1.bf16.msra.mxu0 %v2422
    %2439 = vmatprep.subr.bf16.mxu0 0
    %2440 = vmatpush1.bf16.msra.mxu0 %v2423
    %2441 = vmatprep.subr.bf16.mxu0 0
    %2442 = vmatpush1.bf16.msra.mxu0 %v2424
    %2443 = vmatprep.subr.bf16.mxu0 0
    %2444 = vmatpush1.bf16.msra.mxu0 %v2425
    %2445 = vmatprep.subr.bf16.mxu0 0
    %2446 = vmatpush1.bf16.msra.mxu0 %v2426
    %2447 = vmatprep.subr.bf16.mxu0 0
    %2448 = vmatpush1.bf16.msra.mxu0 %v2427
    %2449 = vmatprep.subr.bf16.mxu0 0
    %2450 = vmatpush1.bf16.msra.mxu0 0
    %2451 = vmatprep.subr.bf16.mxu0 0
    %2452 = vmatpush1.bf16.msra.mxu0 0
    %2453 = vmatprep.subr.bf16.mxu0 0
    %2454 = vmatpush1.bf16.msra.mxu0 0
    %2455 = vmatprep.subr.bf16.mxu0 0
    %2456 = vmatpush1.bf16.msra.mxu0 0
    %2457 = vmatprep.subr.bf16.mxu0 0
    %2458 = vmatpush1.bf16.msra.mxu0 0
    %2459 = vmatprep.subr.bf16.mxu0 0
    %2460 = vmatpush1.bf16.msra.mxu0 0
    %2461 = vmatprep.subr.bf16.mxu0 0
    %2462 = vmatpush1.bf16.msra.mxu0 0
    %2463 = vmatprep.subr.bf16.mxu0 0
    %2464 = vmatpush1.bf16.msra.mxu0 0
    %2465 = vmatprep.subr.bf16.mxu0 0
    %2466 = vmatpush1.bf16.msra.mxu0 0
    %2467 = vmatprep.subr.bf16.mxu0 0
    %2468 = vmatpush1.bf16.msra.mxu0 0
    %2469 = vmatprep.mubr.bf16.mxu0 0
    %2470 = vmatmul.mubr.bf16.gmra.mrb[0].mxu0 %v2435
    %v2471 = vpop.f32.mrb[0].mxu0
    %v2472 = vadd.f32 0.0, %v2471
    %v2473 = vpop.f32.mrb[0].mxu0
    %v2474 = vpop.f32.mrb[0].mxu0
    %v2475 = vadd.f32 0.0, %v2474
    %v2476 = vpop.f32.mrb[0].mxu0
    %2477 = vdwg.mxu0
    %v2478 = vadd.f32 %v2383, %v2472
    %v2479 = vadd.f32 %v2383, %v2475
    %v2480 = vld [vmem:[#allocation4] sm:$0x7e]
    %s2481 = scalar_lea.vmem %s3, 336
    %v2482 = vld [vmem:[%s2481] sm:$0xf]
    %v2483 = vld [vmem:[%s2481 + $0x4] sm:$0xf]
    %v2484 = vld [vmem:[%s2481 + $0x8] sm:$0xf]
    %v2485 = vld [vmem:[%s2481 + $0xc] sm:$0xf]
    %v2486 = vld [vmem:[%s2481 + $0x10] sm:$0xf]
    %v2487 = vld [vmem:[%s2481 + $0x14] sm:$0xf]
    %v2488 = vld [vmem:[%s2481 + $0x18] sm:$0xf]
    %v2489 = vld [vmem:[%s2481 + $0x1c] sm:$0xf]
    %v2490 = vld [vmem:[%s2481 + $0x20] sm:$0xf]
    %v2491 = vld [vmem:[%s2481 + $0x24] sm:$0xf]
    %v2492 = vld [vmem:[%s2481 + $0x28] sm:$0xf]
    %v2493 = vld [vmem:[%s2481 + $0x2c] sm:$0xf]
    %v2495 = vrot.slane %v2480, 1
    %v2508 = vunpack.c.l.b16 %v2482
    %v2509 = vunpack.c.l.b16 %v2483
    %v2510 = vunpack.c.l.b16 %v2484
    %v2511 = vunpack.c.l.b16 %v2485
    %v2512 = vunpack.c.l.b16 %v2486
    %v2513 = vunpack.c.l.b16 %v2487
    %v2514 = vunpack.c.l.b16 %v2488
    %v2515 = vunpack.c.l.b16 %v2489
    %v2516 = vunpack.c.l.b16 %v2490
    %v2517 = vunpack.c.l.b16 %v2491
    %v2518 = vunpack.c.l.b16 %v2492
    %v2519 = vunpack.c.l.b16 %v2493
    %v2520 = vpack.c.b16 %v2509, %v2508
    %v2521 = vpack.c.b16 %v2511, %v2510
    %v2522 = vpack.c.b16 %v2513, %v2512
    %v2523 = vpack.c.b16 %v2515, %v2514
    %v2524 = vpack.c.b16 %v2517, %v2516
    %v2525 = vpack.c.b16 %v2519, %v2518
    %v2533 = vsel %vm1505, %v2495, 0
    %2535 = vmatprep.subr.bf16.mxu0 0
    %2536 = vmatpush1.bf16.msra.mxu0 %v2520
    %2537 = vmatprep.subr.bf16.mxu0 0
    %2538 = vmatpush1.bf16.msra.mxu0 %v2521
    %2539 = vmatprep.subr.bf16.mxu0 0
    %2540 = vmatpush1.bf16.msra.mxu0 %v2522
    %2541 = vmatprep.subr.bf16.mxu0 0
    %2542 = vmatpush1.bf16.msra.mxu0 %v2523
    %2543 = vmatprep.subr.bf16.mxu0 0
    %2544 = vmatpush1.bf16.msra.mxu0 %v2524
    %2545 = vmatprep.subr.bf16.mxu0 0
    %2546 = vmatpush1.bf16.msra.mxu0 %v2525
    %2547 = vmatprep.subr.bf16.mxu0 0
    %2548 = vmatpush1.bf16.msra.mxu0 0
    %2549 = vmatprep.subr.bf16.mxu0 0
    %2550 = vmatpush1.bf16.msra.mxu0 0
    %2551 = vmatprep.subr.bf16.mxu0 0
    %2552 = vmatpush1.bf16.msra.mxu0 0
    %2553 = vmatprep.subr.bf16.mxu0 0
    %2554 = vmatpush1.bf16.msra.mxu0 0
    %2555 = vmatprep.subr.bf16.mxu0 0
    %2556 = vmatpush1.bf16.msra.mxu0 0
    %2557 = vmatprep.subr.bf16.mxu0 0
    %2558 = vmatpush1.bf16.msra.mxu0 0
    %2559 = vmatprep.subr.bf16.mxu0 0
    %2560 = vmatpush1.bf16.msra.mxu0 0
    %2561 = vmatprep.subr.bf16.mxu0 0
    %2562 = vmatpush1.bf16.msra.mxu0 0
    %2563 = vmatprep.subr.bf16.mxu0 0
    %2564 = vmatpush1.bf16.msra.mxu0 0
    %2565 = vmatprep.subr.bf16.mxu0 0
    %2566 = vmatpush1.bf16.msra.mxu0 0
    %2567 = vmatprep.mubr.bf16.mxu0 0
    %2568 = vmatmul.mubr.bf16.gmra.mrb[0].mxu0 %v2533
    %v2569 = vpop.f32.mrb[0].mxu0
    %v2570 = vadd.f32 0.0, %v2569
    %v2571 = vpop.f32.mrb[0].mxu0
    %v2572 = vpop.f32.mrb[0].mxu0
    %v2573 = vadd.f32 0.0, %v2572
    %v2574 = vpop.f32.mrb[0].mxu0
    %2575 = vdwg.mxu0
    %v2576 = vadd.f32 %v2478, %v2570
    %v2577 = vadd.f32 %v2479, %v2573
    %v2578 = vld [vmem:[#allocation4] sm:$0xfc]
    %s2579 = scalar_lea.vmem %s3, 384
    %v2580 = vld [vmem:[%s2579] sm:$0xf]
    %v2581 = vld [vmem:[%s2579 + $0x4] sm:$0xf]
    %v2582 = vld [vmem:[%s2579 + $0x8] sm:$0xf]
    %v2583 = vld [vmem:[%s2579 + $0xc] sm:$0xf]
    %v2584 = vld [vmem:[%s2579 + $0x10] sm:$0xf]
    %v2585 = vld [vmem:[%s2579 + $0x14] sm:$0xf]
    %v2586 = vld [vmem:[%s2579 + $0x18] sm:$0xf]
    %v2587 = vld [vmem:[%s2579 + $0x1c] sm:$0xf]
    %v2588 = vld [vmem:[%s2579 + $0x20] sm:$0xf]
    %v2589 = vld [vmem:[%s2579 + $0x24] sm:$0xf]
    %v2590 = vld [vmem:[%s2579 + $0x28] sm:$0xf]
    %v2591 = vld [vmem:[%s2579 + $0x2c] sm:$0xf]
    %v2593 = vrot.slane %v2578, 2
    %v2606 = vunpack.c.l.b16 %v2580
    %v2607 = vunpack.c.l.b16 %v2581
    %v2608 = vunpack.c.l.b16 %v2582
    %v2609 = vunpack.c.l.b16 %v2583
    %v2610 = vunpack.c.l.b16 %v2584
    %v2611 = vunpack.c.l.b16 %v2585
    %v2612 = vunpack.c.l.b16 %v2586
    %v2613 = vunpack.c.l.b16 %v2587
    %v2614 = vunpack.c.l.b16 %v2588
    %v2615 = vunpack.c.l.b16 %v2589
    %v2616 = vunpack.c.l.b16 %v2590
    %v2617 = vunpack.c.l.b16 %v2591
    %v2618 = vpack.c.b16 %v2607, %v2606
    %v2619 = vpack.c.b16 %v2609, %v2608
    %v2620 = vpack.c.b16 %v2611, %v2610
    %v2621 = vpack.c.b16 %v2613, %v2612
    %v2622 = vpack.c.b16 %v2615, %v2614
    %v2623 = vpack.c.b16 %v2617, %v2616
    %v2631 = vsel %vm1505, %v2593, 0
    %2633 = vmatprep.subr.bf16.mxu0 0
    %2634 = vmatpush1.bf16.msra.mxu0 %v2618
    %2635 = vmatprep.subr.bf16.mxu0 0
    %2636 = vmatpush1.bf16.msra.mxu0 %v2619
    %2637 = vmatprep.subr.bf16.mxu0 0
    %2638 = vmatpush1.bf16.msra.mxu0 %v2620
    %2639 = vmatprep.subr.bf16.mxu0 0
    %2640 = vmatpush1.bf16.msra.mxu0 %v2621
    %2641 = vmatprep.subr.bf16.mxu0 0
    %2642 = vmatpush1.bf16.msra.mxu0 %v2622
    %2643 = vmatprep.subr.bf16.mxu0 0
    %2644 = vmatpush1.bf16.msra.mxu0 %v2623
    %2645 = vmatprep.subr.bf16.mxu0 0
    %2646 = vmatpush1.bf16.msra.mxu0 0
    %2647 = vmatprep.subr.bf16.mxu0 0
    %2648 = vmatpush1.bf16.msra.mxu0 0
    %2649 = vmatprep.subr.bf16.mxu0 0
    %2650 = vmatpush1.bf16.msra.mxu0 0
    %2651 = vmatprep.subr.bf16.mxu0 0
    %2652 = vmatpush1.bf16.msra.mxu0 0
    %2653 = vmatprep.subr.bf16.mxu0 0
    %2654 = vmatpush1.bf16.msra.mxu0 0
    %2655 = vmatprep.subr.bf16.mxu0 0
    %2656 = vmatpush1.bf16.msra.mxu0 0
    %2657 = vmatprep.subr.bf16.mxu0 0
    %2658 = vmatpush1.bf16.msra.mxu0 0
    %2659 = vmatprep.subr.bf16.mxu0 0
    %2660 = vmatpush1.bf16.msra.mxu0 0
    %2661 = vmatprep.subr.bf16.mxu0 0
    %2662 = vmatpush1.bf16.msra.mxu0 0
    %2663 = vmatprep.subr.bf16.mxu0 0
    %2664 = vmatpush1.bf16.msra.mxu0 0
    %2665 = vmatprep.mubr.bf16.mxu0 0
    %2666 = vmatmul.mubr.bf16.gmra.mrb[0].mxu0 %v2631
    %v2667 = vpop.f32.mrb[0].mxu0
    %v2668 = vadd.f32 0.0, %v2667
    %v2669 = vpop.f32.mrb[0].mxu0
    %v2670 = vpop.f32.mrb[0].mxu0
    %v2671 = vadd.f32 0.0, %v2670
    %v2672 = vpop.f32.mrb[0].mxu0
    %2673 = vdwg.mxu0
    %v2674 = vadd.f32 %v2576, %v2668
    %v2675 = vadd.f32 %v2577, %v2671
    %v2676 = vmax.f32 %v2674, 0.0
    %v2677 = vmax.f32 %v2675, 0.0
    %v2680 = vrot.slane %v2676, 6
    %v2681 = vrot.slane %v2677, 6
    %v2682 = vsel %vm97, %v2680, %v2681
    %v2685 = vsel %vm97, 0.0, %v2680
    %v2686 = vsel %vm1502, %v2682, 0.0
    %v2687 = vpack.c.bf16 %v2686, %v2685
    %2688 = vst.msk [vmem:[#allocation5] sm:$0xff] %vm1505, %v2687
    %v2689 = vld [vmem:[%s7 + $0x5] ss:$0 sm:$0xff]
    %v2690 = vld [vmem:[#allocation5] sm:$0x3f]
    %s2691 = scalar_lea.vmem %s3, 432
    %v2692 = vld [vmem:[%s2691] sm:$0xf]
    %v2693 = vld [vmem:[%s2691 + $0x4] sm:$0xf]
    %v2694 = vld [vmem:[%s2691 + $0x8] sm:$0xf]
    %v2695 = vld [vmem:[%s2691 + $0xc] sm:$0xf]
    %v2696 = vld [vmem:[%s2691 + $0x10] sm:$0xf]
    %v2697 = vld [vmem:[%s2691 + $0x14] sm:$0xf]
    %v2698 = vld [vmem:[%s2691 + $0x18] sm:$0xf]
    %v2699 = vld [vmem:[%s2691 + $0x1c] sm:$0xf]
    %v2700 = vld [vmem:[%s2691 + $0x20] sm:$0xf]
    %v2701 = vld [vmem:[%s2691 + $0x24] sm:$0xf]
    %v2702 = vld [vmem:[%s2691 + $0x28] sm:$0xf]
    %v2703 = vld [vmem:[%s2691 + $0x2c] sm:$0xf]
    %v2716 = vunpack.c.l.b16 %v2692
    %v2717 = vunpack.c.l.b16 %v2693
    %v2718 = vunpack.c.l.b16 %v2694
    %v2719 = vunpack.c.l.b16 %v2695
    %v2720 = vunpack.c.l.b16 %v2696
    %v2721 = vunpack.c.l.b16 %v2697
    %v2722 = vunpack.c.l.b16 %v2698
    %v2723 = vunpack.c.l.b16 %v2699
    %v2724 = vunpack.c.l.b16 %v2700
    %v2725 = vunpack.c.l.b16 %v2701
    %v2726 = vunpack.c.l.b16 %v2702
    %v2727 = vunpack.c.l.b16 %v2703
    %v2728 = vpack.c.b16 %v2717, %v2716
    %v2729 = vpack.c.b16 %v2719, %v2718
    %v2730 = vpack.c.b16 %v2721, %v2720
    %v2731 = vpack.c.b16 %v2723, %v2722
    %v2732 = vpack.c.b16 %v2725, %v2724
    %v2733 = vpack.c.b16 %v2727, %v2726
    %v2741 = vsel %vm1505, %v2690, 0
    %2743 = vmatprep.subr.bf16.mxu0 0
    %2744 = vmatpush1.bf16.msra.mxu0 %v2728
    %2745 = vmatprep.subr.bf16.mxu0 0
    %2746 = vmatpush1.bf16.msra.mxu0 %v2729
    %2747 = vmatprep.subr.bf16.mxu0 0
    %2748 = vmatpush1.bf16.msra.mxu0 %v2730
    %2749 = vmatprep.subr.bf16.mxu0 0
    %2750 = vmatpush1.bf16.msra.mxu0 %v2731
    %2751 = vmatprep.subr.bf16.mxu0 0
    %2752 = vmatpush1.bf16.msra.mxu0 %v2732
    %2753 = vmatprep.subr.bf16.mxu0 0
    %2754 = vmatpush1.bf16.msra.mxu0 %v2733
    %2755 = vmatprep.subr.bf16.mxu0 0
    %2756 = vmatpush1.bf16.msra.mxu0 0
    %2757 = vmatprep.subr.bf16.mxu0 0
    %2758 = vmatpush1.bf16.msra.mxu0 0
    %2759 = vmatprep.subr.bf16.mxu0 0
    %2760 = vmatpush1.bf16.msra.mxu0 0
    %2761 = vmatprep.subr.bf16.mxu0 0
    %2762 = vmatpush1.bf16.msra.mxu0 0
    %2763 = vmatprep.subr.bf16.mxu0 0
    %2764 = vmatpush1.bf16.msra.mxu0 0
    %2765 = vmatprep.subr.bf16.mxu0 0
    %2766 = vmatpush1.bf16.msra.mxu0 0
    %2767 = vmatprep.subr.bf16.mxu0 0
    %2768 = vmatpush1.bf16.msra.mxu0 0
    %2769 = vmatprep.subr.bf16.mxu0 0
    %2770 = vmatpush1.bf16.msra.mxu0 0
    %2771 = vmatprep.subr.bf16.mxu0 0
    %2772 = vmatpush1.bf16.msra.mxu0 0
    %2773 = vmatprep.subr.bf16.mxu0 0
    %2774 = vmatpush1.bf16.msra.mxu0 0
    %2775 = vmatprep.mubr.bf16.mxu0 0
    %2776 = vmatmul.mubr.bf16.gmra.mrb[0].mxu0 %v2741
    %v2777 = vpop.f32.mrb[0].mxu0
    %v2778 = vadd.f32 0.0, %v2777
    %v2779 = vpop.f32.mrb[0].mxu0
    %v2780 = vpop.f32.mrb[0].mxu0
    %v2781 = vadd.f32 0.0, %v2780
    %v2782 = vpop.f32.mrb[0].mxu0
    %2783 = vdwg.mxu0
    %v2784 = vadd.f32 %v2689, %v2778
    %v2785 = vadd.f32 %v2689, %v2781
    %v2786 = vld [vmem:[#allocation5] sm:$0x7e]
    %s2787 = scalar_lea.vmem %s3, 480
    %v2788 = vld [vmem:[%s2787] sm:$0xf]
    %v2789 = vld [vmem:[%s2787 + $0x4] sm:$0xf]
    %v2790 = vld [vmem:[%s2787 + $0x8] sm:$0xf]
    %v2791 = vld [vmem:[%s2787 + $0xc] sm:$0xf]
    %v2792 = vld [vmem:[%s2787 + $0x10] sm:$0xf]
    %v2793 = vld [vmem:[%s2787 + $0x14] sm:$0xf]
    %v2794 = vld [vmem:[%s2787 + $0x18] sm:$0xf]
    %v2795 = vld [vmem:[%s2787 + $0x1c] sm:$0xf]
    %v2796 = vld [vmem:[%s2787 + $0x20] sm:$0xf]
    %v2797 = vld [vmem:[%s2787 + $0x24] sm:$0xf]
    %v2798 = vld [vmem:[%s2787 + $0x28] sm:$0xf]
    %v2799 = vld [vmem:[%s2787 + $0x2c] sm:$0xf]
    %v2801 = vrot.slane %v2786, 1
    %v2814 = vunpack.c.l.b16 %v2788
    %v2815 = vunpack.c.l.b16 %v2789
    %v2816 = vunpack.c.l.b16 %v2790
    %v2817 = vunpack.c.l.b16 %v2791
    %v2818 = vunpack.c.l.b16 %v2792
    %v2819 = vunpack.c.l.b16 %v2793
    %v2820 = vunpack.c.l.b16 %v2794
    %v2821 = vunpack.c.l.b16 %v2795
    %v2822 = vunpack.c.l.b16 %v2796
    %v2823 = vunpack.c.l.b16 %v2797
    %v2824 = vunpack.c.l.b16 %v2798
    %v2825 = vunpack.c.l.b16 %v2799
    %v2826 = vpack.c.b16 %v2815, %v2814
    %v2827 = vpack.c.b16 %v2817, %v2816
    %v2828 = vpack.c.b16 %v2819, %v2818
    %v2829 = vpack.c.b16 %v2821, %v2820
    %v2830 = vpack.c.b16 %v2823, %v2822
    %v2831 = vpack.c.b16 %v2825, %v2824
    %v2839 = vsel %vm1505, %v2801, 0
    %2841 = vmatprep.subr.bf16.mxu0 0
    %2842 = vmatpush1.bf16.msra.mxu0 %v2826
    %2843 = vmatprep.subr.bf16.mxu0 0
    %2844 = vmatpush1.bf16.msra.mxu0 %v2827
    %2845 = vmatprep.subr.bf16.mxu0 0
    %2846 = vmatpush1.bf16.msra.mxu0 %v2828
    %2847 = vmatprep.subr.bf16.mxu0 0
    %2848 = vmatpush1.bf16.msra.mxu0 %v2829
    %2849 = vmatprep.subr.bf16.mxu0 0
    %2850 = vmatpush1.bf16.msra.mxu0 %v2830
    %2851 = vmatprep.subr.bf16.mxu0 0
    %2852 = vmatpush1.bf16.msra.mxu0 %v2831
    %2853 = vmatprep.subr.bf16.mxu0 0
    %2854 = vmatpush1.bf16.msra.mxu0 0
    %2855 = vmatprep.subr.bf16.mxu0 0
    %2856 = vmatpush1.bf16.msra.mxu0 0
    %2857 = vmatprep.subr.bf16.mxu0 0
    %2858 = vmatpush1.bf16.msra.mxu0 0
    %2859 = vmatprep.subr.bf16.mxu0 0
    %2860 = vmatpush1.bf16.msra.mxu0 0
    %2861 = vmatprep.subr.bf16.mxu0 0
    %2862 = vmatpush1.bf16.msra.mxu0 0
    %2863 = vmatprep.subr.bf16.mxu0 0
    %2864 = vmatpush1.bf16.msra.mxu0 0
    %2865 = vmatprep.subr.bf16.mxu0 0
    %2866 = vmatpush1.bf16.msra.mxu0 0
    %2867 = vmatprep.subr.bf16.mxu0 0
    %2868 = vmatpush1.bf16.msra.mxu0 0
    %2869 = vmatprep.subr.bf16.mxu0 0
    %2870 = vmatpush1.bf16.msra.mxu0 0
    %2871 = vmatprep.subr.bf16.mxu0 0
    %2872 = vmatpush1.bf16.msra.mxu0 0
    %2873 = vmatprep.mubr.bf16.mxu0 0
    %2874 = vmatmul.mubr.bf16.gmra.mrb[0].mxu0 %v2839
    %v2875 = vpop.f32.mrb[0].mxu0
    %v2876 = vadd.f32 0.0, %v2875
    %v2877 = vpop.f32.mrb[0].mxu0
    %v2878 = vpop.f32.mrb[0].mxu0
    %v2879 = vadd.f32 0.0, %v2878
    %v2880 = vpop.f32.mrb[0].mxu0
    %2881 = vdwg.mxu0
    %v2882 = vadd.f32 %v2784, %v2876
    %v2883 = vadd.f32 %v2785, %v2879
    %v2884 = vld [vmem:[#allocation5] sm:$0xfc]
    %s2885 = scalar_lea.vmem %s3, 528
    %v2886 = vld [vmem:[%s2885] sm:$0xf]
    %v2887 = vld [vmem:[%s2885 + $0x4] sm:$0xf]
    %v2888 = vld [vmem:[%s2885 + $0x8] sm:$0xf]
    %v2889 = vld [vmem:[%s2885 + $0xc] sm:$0xf]
    %v2890 = vld [vmem:[%s2885 + $0x10] sm:$0xf]
    %v2891 = vld [vmem:[%s2885 + $0x14] sm:$0xf]
    %v2892 = vld [vmem:[%s2885 + $0x18] sm:$0xf]
    %v2893 = vld [vmem:[%s2885 + $0x1c] sm:$0xf]
    %v2894 = vld [vmem:[%s2885 + $0x20] sm:$0xf]
    %v2895 = vld [vmem:[%s2885 + $0x24] sm:$0xf]
    %v2896 = vld [vmem:[%s2885 + $0x28] sm:$0xf]
    %v2897 = vld [vmem:[%s2885 + $0x2c] sm:$0xf]
    %v2899 = vrot.slane %v2884, 2
    %v2912 = vunpack.c.l.b16 %v2886
    %v2913 = vunpack.c.l.b16 %v2887
    %v2914 = vunpack.c.l.b16 %v2888
    %v2915 = vunpack.c.l.b16 %v2889
    %v2916 = vunpack.c.l.b16 %v2890
    %v2917 = vunpack.c.l.b16 %v2891
    %v2918 = vunpack.c.l.b16 %v2892
    %v2919 = vunpack.c.l.b16 %v2893
    %v2920 = vunpack.c.l.b16 %v2894
    %v2921 = vunpack.c.l.b16 %v2895
    %v2922 = vunpack.c.l.b16 %v2896
    %v2923 = vunpack.c.l.b16 %v2897
    %v2924 = vpack.c.b16 %v2913, %v2912
    %v2925 = vpack.c.b16 %v2915, %v2914
    %v2926 = vpack.c.b16 %v2917, %v2916
    %v2927 = vpack.c.b16 %v2919, %v2918
    %v2928 = vpack.c.b16 %v2921, %v2920
    %v2929 = vpack.c.b16 %v2923, %v2922
    %v2937 = vsel %vm1505, %v2899, 0
    %2939 = vmatprep.subr.bf16.mxu0 0
    %2940 = vmatpush1.bf16.msra.mxu0 %v2924
    %2941 = vmatprep.subr.bf16.mxu0 0
    %2942 = vmatpush1.bf16.msra.mxu0 %v2925
    %2943 = vmatprep.subr.bf16.mxu0 0
    %2944 = vmatpush1.bf16.msra.mxu0 %v2926
    %2945 = vmatprep.subr.bf16.mxu0 0
    %2946 = vmatpush1.bf16.msra.mxu0 %v2927
    %2947 = vmatprep.subr.bf16.mxu0 0
    %2948 = vmatpush1.bf16.msra.mxu0 %v2928
    %2949 = vmatprep.subr.bf16.mxu0 0
    %2950 = vmatpush1.bf16.msra.mxu0 %v2929
    %2951 = vmatprep.subr.bf16.mxu0 0
    %2952 = vmatpush1.bf16.msra.mxu0 0
    %2953 = vmatprep.subr.bf16.mxu0 0
    %2954 = vmatpush1.bf16.msra.mxu0 0
    %2955 = vmatprep.subr.bf16.mxu0 0
    %2956 = vmatpush1.bf16.msra.mxu0 0
    %2957 = vmatprep.subr.bf16.mxu0 0
    %2958 = vmatpush1.bf16.msra.mxu0 0
    %2959 = vmatprep.subr.bf16.mxu0 0
    %2960 = vmatpush1.bf16.msra.mxu0 0
    %2961 = vmatprep.subr.bf16.mxu0 0
    %2962 = vmatpush1.bf16.msra.mxu0 0
    %2963 = vmatprep.subr.bf16.mxu0 0
    %2964 = vmatpush1.bf16.msra.mxu0 0
    %2965 = vmatprep.subr.bf16.mxu0 0
    %2966 = vmatpush1.bf16.msra.mxu0 0
    %2967 = vmatprep.subr.bf16.mxu0 0
    %2968 = vmatpush1.bf16.msra.mxu0 0
    %2969 = vmatprep.subr.bf16.mxu0 0
    %2970 = vmatpush1.bf16.msra.mxu0 0
    %2971 = vmatprep.mubr.bf16.mxu0 0
    %2972 = vmatmul.mubr.bf16.gmra.mrb[0].mxu0 %v2937
    %v2973 = vpop.f32.mrb[0].mxu0
    %v2974 = vadd.f32 0.0, %v2973
    %v2975 = vpop.f32.mrb[0].mxu0
    %v2976 = vpop.f32.mrb[0].mxu0
    %v2977 = vadd.f32 0.0, %v2976
    %v2978 = vpop.f32.mrb[0].mxu0
    %2979 = vdwg.mxu0
    %v2980 = vadd.f32 %v2882, %v2974
    %v2981 = vadd.f32 %v2883, %v2977
    %v2982 = vmax.f32 %v2980, 0.0
    %v2983 = vmax.f32 %v2981, 0.0
    %v2984 = vsel %vm1505, %v2982, 0.0
    %v2985 = vsel %vm1507, %v2983, 0.0
    %v2986 = vadd.f32 %v2984, %v2985
    %v2987 = vrot.slane %v2986, 4
    %v2988 = vadd.f32 %v2986, %v2987
    %v2989 = vrot.slane %v2988, 2
    %v2990 = vadd.f32 %v2988, %v2989
    %v2991 = vrot.slane %v2990, 1
    %v2992 = vadd.f32 %v2990, %v2991
    %2994 = vrot.lane.b32.xlu0 %v2992, 112
    %v2995 = vpop.permute.xlu0 %2994
    %v2997 = vadd.f32 %v2992, %v2995
    %2998 = vrot.lane.b32.xlu0 %v2992, 96
    %v2999 = vpop.permute.xlu0 %2998
    %v3001 = vadd.f32 %v2997, %v2999
    %3002 = vrot.lane.b32.xlu0 %v2992, 80
    %v3003 = vpop.permute.xlu0 %3002
    %v3005 = vadd.f32 %v3001, %v3003
    %3006 = vrot.lane.b32.xlu0 %v2992, 64
    %v3007 = vpop.permute.xlu0 %3006
    %v3009 = vadd.f32 %v3005, %v3007
    %3010 = vrot.lane.b32.xlu0 %v2992, 48
    %v3011 = vpop.permute.xlu0 %3010
    %v3013 = vadd.f32 %v3009, %v3011
    %v3014 = vmul.f32 %v3013, 0.013888889
    %3016 = vrot.lane.b32.xlu0 %v3014, 16
    %v3017 = vpop.permute.xlu0 %3016
    %3019 = vrot.lane.b32.xlu0 %v3014, 32
    %v3020 = vpop.permute.xlu0 %3019
    %3022 = vrot.lane.b32.xlu0 %v3014, 48
    %v3023 = vpop.permute.xlu0 %3022
    %3025 = vrot.lane.b32.xlu0 %v3014, 64
    %v3026 = vpop.permute.xlu0 %3025
    %3028 = vrot.lane.b32.xlu0 %v3014, 80
    %v3029 = vpop.permute.xlu0 %3028
    %v3031 = vsel %vm1554, %v3014, %v3017
    %v3032 = vsel %vm1556, %v3031, %v3020
    %v3033 = vsel %vm1558, %v3032, %v3023
    %v3034 = vsel %vm815, %v3033, %v3026
    %v3035 = vsel %vm1561, %v3034, %v3029
    %v3036 = vlaneseq
    %v3037 = vshrl.u32 %v3036, 7
    %v3038 = vsub.s32 0, %v3037
    %v3039 = vrot.slane %v3035, %v3038
    %v3040 = vsub.f32 %v2982, %v3039
    %v3041 = vsub.f32 %v2983, %v3039
    %v3042 = vmul.f32 %v3040, %v3040
    %v3043 = vmul.f32 %v3041, %v3041
    %v3044 = vsel %vm1505, %v3042, 0.0
    %v3045 = vsel %vm1507, %v3043, 0.0
    %v3046 = vadd.f32 %v3044, %v3045
    %v3047 = vrot.slane %v3046, 4
    %v3048 = vadd.f32 %v3046, %v3047
    %v3049 = vrot.slane %v3048, 2
    %v3050 = vadd.f32 %v3048, %v3049
    %v3051 = vrot.slane %v3050, 1
    %v3052 = vadd.f32 %v3050, %v3051
    %3054 = vrot.lane.b32.xlu0 %v3052, 112
    %v3055 = vpop.permute.xlu0 %3054
    %v3057 = vadd.f32 %v3052, %v3055
    %3058 = vrot.lane.b32.xlu0 %v3052, 96
    %v3059 = vpop.permute.xlu0 %3058
    %v3061 = vadd.f32 %v3057, %v3059
    %3062 = vrot.lane.b32.xlu0 %v3052, 80
    %v3063 = vpop.permute.xlu0 %3062
    %v3065 = vadd.f32 %v3061, %v3063
    %3066 = vrot.lane.b32.xlu0 %v3052, 64
    %v3067 = vpop.permute.xlu0 %3066
    %v3069 = vadd.f32 %v3065, %v3067
    %3070 = vrot.lane.b32.xlu0 %v3052, 48
    %v3071 = vpop.permute.xlu0 %3070
    %v3073 = vadd.f32 %v3069, %v3071
    %v3074 = vmul.f32 %v3073, 0.013888889
    %3076 = vrot.lane.b32.xlu0 %v3074, 16
    %v3077 = vpop.permute.xlu0 %3076
    %3079 = vrot.lane.b32.xlu0 %v3074, 32
    %v3080 = vpop.permute.xlu0 %3079
    %3082 = vrot.lane.b32.xlu0 %v3074, 48
    %v3083 = vpop.permute.xlu0 %3082
    %3085 = vrot.lane.b32.xlu0 %v3074, 64
    %v3086 = vpop.permute.xlu0 %3085
    %3088 = vrot.lane.b32.xlu0 %v3074, 80
    %v3089 = vpop.permute.xlu0 %3088
    %v3091 = vsel %vm1554, %v3074, %v3077
    %v3092 = vsel %vm1556, %v3091, %v3080
    %v3093 = vsel %vm1558, %v3092, %v3083
    %v3094 = vsel %vm815, %v3093, %v3086
    %v3095 = vsel %vm1561, %v3094, %v3089
    %v3096 = vadd.f32 %v3095, 1e-05
    %v3097 = vrsqrt.pop %v3096
    %v3098 = vld [vmem:[%s7 + $0x12] ss:$0 sm:$0xff]
    %v3099 = vmul.f32 %v3097, %v3098
    %v3100 = vlaneseq
    %v3101 = vshrl.u32 %v3100, 7
    %v3102 = vsub.s32 0, %v3101
    %v3103 = vrot.slane %v3099, %v3102
    %v3104 = vmul.f32 %v3040, %v3103
    %v3105 = vmul.f32 %v3041, %v3103
    %v3106 = vld [vmem:[%s7 + $0x13] ss:$0 sm:$0xff]
    %v3107 = vadd.f32 %v3104, %v3106
    %v3108 = vadd.f32 %v3105, %v3106
    %v3111 = vrot.slane %v3107, 6
    %v3112 = vrot.slane %v3108, 6
    %v3113 = vsel %vm97, %v3111, %v3112
    %v3116 = vsel %vm97, 0.0, %v3111
    %v3117 = vsel %vm1502, %v3113, 0.0
    %v3118 = vpack.c.bf16 %v3117, %v3116
    %3119 = vst.msk [vmem:[#allocation4] sm:$0xff] %vm1505, %v3118
    %v3120 = vld [vmem:[%s7 + $0x14] ss:$0 sm:$0xff]
    %v3121 = vld [vmem:[#allocation4] sm:$0x2]
    %v3122 = vld [vmem:[%s5] sm:$0xf]
    %v3123 = vld [vmem:[%s5 + $0x4] sm:$0xf]
    %v3124 = vld [vmem:[%s5 + $0x8] sm:$0xf]
    %v3125 = vld [vmem:[%s5 + $0xc] sm:$0xf]
    %v3126 = vld [vmem:[%s5 + $0x10] sm:$0xf]
    %v3127 = vld [vmem:[%s5 + $0x14] sm:$0xf]
    %v3128 = vld [vmem:[%s5 + $0x18] sm:$0xf]
    %v3129 = vld [vmem:[%s5 + $0x1c] sm:$0xf]
    %v3130 = vld [vmem:[%s5 + $0x20] sm:$0xf]
    %v3131 = vld [vmem:[%s5 + $0x24] sm:$0xf]
    %v3132 = vld [vmem:[%s5 + $0x28] sm:$0xf]
    %v3133 = vld [vmem:[%s5 + $0x2c] sm:$0xf]
    %v3135 = vrot.slane %v3121, 1
    %v3148 = vunpack.c.l.b16 %v3122
    %v3149 = vunpack.c.l.b16 %v3123
    %v3150 = vunpack.c.l.b16 %v3124
    %v3151 = vunpack.c.l.b16 %v3125
    %v3152 = vunpack.c.l.b16 %v3126
    %v3153 = vunpack.c.l.b16 %v3127
    %v3154 = vunpack.c.l.b16 %v3128
    %v3155 = vunpack.c.l.b16 %v3129
    %v3156 = vunpack.c.l.b16 %v3130
    %v3157 = vunpack.c.l.b16 %v3131
    %v3158 = vunpack.c.l.b16 %v3132
    %v3159 = vunpack.c.l.b16 %v3133
    %v3160 = vpack.c.b16 %v3149, %v3148
    %v3161 = vpack.c.b16 %v3151, %v3150
    %v3162 = vpack.c.b16 %v3153, %v3152
    %v3163 = vpack.c.b16 %v3155, %v3154
    %v3164 = vpack.c.b16 %v3157, %v3156
    %v3165 = vpack.c.b16 %v3159, %v3158
    %v3173 = vsel %vm1505, %v3135, 0
    %3175 = vmatprep.subr.bf16.mxu0 0
    %3176 = vmatpush1.bf16.msra.mxu0 %v3160
    %3177 = vmatprep.subr.bf16.mxu0 0
    %3178 = vmatpush1.bf16.msra.mxu0 %v3161
    %3179 = vmatprep.subr.bf16.mxu0 0
    %3180 = vmatpush1.bf16.msra.mxu0 %v3162
    %3181 = vmatprep.subr.bf16.mxu0 0
    %3182 = vmatpush1.bf16.msra.mxu0 %v3163
    %3183 = vmatprep.subr.bf16.mxu0 0
    %3184 = vmatpush1.bf16.msra.mxu0 %v3164
    %3185 = vmatprep.subr.bf16.mxu0 0
    %3186 = vmatpush1.bf16.msra.mxu0 %v3165
    %3187 = vmatprep.subr.bf16.mxu0 0
    %3188 = vmatpush1.bf16.msra.mxu0 0
    %3189 = vmatprep.subr.bf16.mxu0 0
    %3190 = vmatpush1.bf16.msra.mxu0 0
    %3191 = vmatprep.subr.bf16.mxu0 0
    %3192 = vmatpush1.bf16.msra.mxu0 0
    %3193 = vmatprep.subr.bf16.mxu0 0
    %3194 = vmatpush1.bf16.msra.mxu0 0
    %3195 = vmatprep.subr.bf16.mxu0 0
    %3196 = vmatpush1.bf16.msra.mxu0 0
    %3197 = vmatprep.subr.bf16.mxu0 0
    %3198 = vmatpush1.bf16.msra.mxu0 0
    %3199 = vmatprep.subr.bf16.mxu0 0
    %3200 = vmatpush1.bf16.msra.mxu0 0
    %3201 = vmatprep.subr.bf16.mxu0 0
    %3202 = vmatpush1.bf16.msra.mxu0 0
    %3203 = vmatprep.subr.bf16.mxu0 0
    %3204 = vmatpush1.bf16.msra.mxu0 0
    %3205 = vmatprep.subr.bf16.mxu0 0
    %3206 = vmatpush1.bf16.msra.mxu0 0
    %3207 = vmatprep.mubr.bf16.mxu0 0
    %3208 = vmatmul.mubr.bf16.gmra.mrb[0].mxu0 %v3173
    %v3209 = vpop.f32.mrb[0].mxu0
    %v3210 = vadd.f32 0.0, %v3209
    %v3211 = vpop.f32.mrb[0].mxu0
    %v3212 = vpop.f32.mrb[0].mxu0
    %v3213 = vpop.f32.mrb[0].mxu0
    %3214 = vdwg.mxu0
    %v3215 = vadd.f32 %v3120, %v3210
    %v3216 = vld [vmem:[#allocation4] sm:$0x4]
    %s3217 = scalar_lea.vmem %s5, 48
    %v3218 = vld [vmem:[%s3217] sm:$0xf]
    %v3219 = vld [vmem:[%s3217 + $0x4] sm:$0xf]
    %v3220 = vld [vmem:[%s3217 + $0x8] sm:$0xf]
    %v3221 = vld [vmem:[%s3217 + $0xc] sm:$0xf]
    %v3222 = vld [vmem:[%s3217 + $0x10] sm:$0xf]
    %v3223 = vld [vmem:[%s3217 + $0x14] sm:$0xf]
    %v3224 = vld [vmem:[%s3217 + $0x18] sm:$0xf]
    %v3225 = vld [vmem:[%s3217 + $0x1c] sm:$0xf]
    %v3226 = vld [vmem:[%s3217 + $0x20] sm:$0xf]
    %v3227 = vld [vmem:[%s3217 + $0x24] sm:$0xf]
    %v3228 = vld [vmem:[%s3217 + $0x28] sm:$0xf]
    %v3229 = vld [vmem:[%s3217 + $0x2c] sm:$0xf]
    %v3231 = vrot.slane %v3216, 2
    %v3244 = vunpack.c.l.b16 %v3218
    %v3245 = vunpack.c.l.b16 %v3219
    %v3246 = vunpack.c.l.b16 %v3220
    %v3247 = vunpack.c.l.b16 %v3221
    %v3248 = vunpack.c.l.b16 %v3222
    %v3249 = vunpack.c.l.b16 %v3223
    %v3250 = vunpack.c.l.b16 %v3224
    %v3251 = vunpack.c.l.b16 %v3225
    %v3252 = vunpack.c.l.b16 %v3226
    %v3253 = vunpack.c.l.b16 %v3227
    %v3254 = vunpack.c.l.b16 %v3228
    %v3255 = vunpack.c.l.b16 %v3229
    %v3256 = vpack.c.b16 %v3245, %v3244
    %v3257 = vpack.c.b16 %v3247, %v3246
    %v3258 = vpack.c.b16 %v3249, %v3248
    %v3259 = vpack.c.b16 %v3251, %v3250
    %v3260 = vpack.c.b16 %v3253, %v3252
    %v3261 = vpack.c.b16 %v3255, %v3254
    %v3269 = vsel %vm1505, %v3231, 0
    %3271 = vmatprep.subr.bf16.mxu0 0
    %3272 = vmatpush1.bf16.msra.mxu0 %v3256
    %3273 = vmatprep.subr.bf16.mxu0 0
    %3274 = vmatpush1.bf16.msra.mxu0 %v3257
    %3275 = vmatprep.subr.bf16.mxu0 0
    %3276 = vmatpush1.bf16.msra.mxu0 %v3258
    %3277 = vmatprep.subr.bf16.mxu0 0
    %3278 = vmatpush1.bf16.msra.mxu0 %v3259
    %3279 = vmatprep.subr.bf16.mxu0 0
    %3280 = vmatpush1.bf16.msra.mxu0 %v3260
    %3281 = vmatprep.subr.bf16.mxu0 0
    %3282 = vmatpush1.bf16.msra.mxu0 %v3261
    %3283 = vmatprep.subr.bf16.mxu0 0
    %3284 = vmatpush1.bf16.msra.mxu0 0
    %3285 = vmatprep.subr.bf16.mxu0 0
    %3286 = vmatpush1.bf16.msra.mxu0 0
    %3287 = vmatprep.subr.bf16.mxu0 0
    %3288 = vmatpush1.bf16.msra.mxu0 0
    %3289 = vmatprep.subr.bf16.mxu0 0
    %3290 = vmatpush1.bf16.msra.mxu0 0
    %3291 = vmatprep.subr.bf16.mxu0 0
    %3292 = vmatpush1.bf16.msra.mxu0 0
    %3293 = vmatprep.subr.bf16.mxu0 0
    %3294 = vmatpush1.bf16.msra.mxu0 0
    %3295 = vmatprep.subr.bf16.mxu0 0
    %3296 = vmatpush1.bf16.msra.mxu0 0
    %3297 = vmatprep.subr.bf16.mxu0 0
    %3298 = vmatpush1.bf16.msra.mxu0 0
    %3299 = vmatprep.subr.bf16.mxu0 0
    %3300 = vmatpush1.bf16.msra.mxu0 0
    %3301 = vmatprep.subr.bf16.mxu0 0
    %3302 = vmatpush1.bf16.msra.mxu0 0
    %3303 = vmatprep.mubr.bf16.mxu0 0
    %3304 = vmatmul.mubr.bf16.gmra.mrb[0].mxu0 %v3269
    %v3305 = vpop.f32.mrb[0].mxu0
    %v3306 = vadd.f32 0.0, %v3305
    %v3307 = vpop.f32.mrb[0].mxu0
    %v3308 = vpop.f32.mrb[0].mxu0
    %v3309 = vpop.f32.mrb[0].mxu0
    %3310 = vdwg.mxu0
    %v3311 = vadd.f32 %v3215, %v3306
    %v3312 = vld [vmem:[#allocation4] sm:$0x8]
    %s3313 = scalar_lea.vmem %s5, 96
    %v3314 = vld [vmem:[%s3313] sm:$0xf]
    %v3315 = vld [vmem:[%s3313 + $0x4] sm:$0xf]
    %v3316 = vld [vmem:[%s3313 + $0x8] sm:$0xf]
    %v3317 = vld [vmem:[%s3313 + $0xc] sm:$0xf]
    %v3318 = vld [vmem:[%s3313 + $0x10] sm:$0xf]
    %v3319 = vld [vmem:[%s3313 + $0x14] sm:$0xf]
    %v3320 = vld [vmem:[%s3313 + $0x18] sm:$0xf]
    %v3321 = vld [vmem:[%s3313 + $0x1c] sm:$0xf]
    %v3322 = vld [vmem:[%s3313 + $0x20] sm:$0xf]
    %v3323 = vld [vmem:[%s3313 + $0x24] sm:$0xf]
    %v3324 = vld [vmem:[%s3313 + $0x28] sm:$0xf]
    %v3325 = vld [vmem:[%s3313 + $0x2c] sm:$0xf]
    %v3327 = vrot.slane %v3312, 3
    %v3340 = vunpack.c.l.b16 %v3314
    %v3341 = vunpack.c.l.b16 %v3315
    %v3342 = vunpack.c.l.b16 %v3316
    %v3343 = vunpack.c.l.b16 %v3317
    %v3344 = vunpack.c.l.b16 %v3318
    %v3345 = vunpack.c.l.b16 %v3319
    %v3346 = vunpack.c.l.b16 %v3320
    %v3347 = vunpack.c.l.b16 %v3321
    %v3348 = vunpack.c.l.b16 %v3322
    %v3349 = vunpack.c.l.b16 %v3323
    %v3350 = vunpack.c.l.b16 %v3324
    %v3351 = vunpack.c.l.b16 %v3325
    %v3352 = vpack.c.b16 %v3341, %v3340
    %v3353 = vpack.c.b16 %v3343, %v3342
    %v3354 = vpack.c.b16 %v3345, %v3344
    %v3355 = vpack.c.b16 %v3347, %v3346
    %v3356 = vpack.c.b16 %v3349, %v3348
    %v3357 = vpack.c.b16 %v3351, %v3350
    %v3365 = vsel %vm1505, %v3327, 0
    %3367 = vmatprep.subr.bf16.mxu0 0
    %3368 = vmatpush1.bf16.msra.mxu0 %v3352
    %3369 = vmatprep.subr.bf16.mxu0 0
    %3370 = vmatpush1.bf16.msra.mxu0 %v3353
    %3371 = vmatprep.subr.bf16.mxu0 0
    %3372 = vmatpush1.bf16.msra.mxu0 %v3354
    %3373 = vmatprep.subr.bf16.mxu0 0
    %3374 = vmatpush1.bf16.msra.mxu0 %v3355
    %3375 = vmatprep.subr.bf16.mxu0 0
    %3376 = vmatpush1.bf16.msra.mxu0 %v3356
    %3377 = vmatprep.subr.bf16.mxu0 0
    %3378 = vmatpush1.bf16.msra.mxu0 %v3357
    %3379 = vmatprep.subr.bf16.mxu0 0
    %3380 = vmatpush1.bf16.msra.mxu0 0
    %3381 = vmatprep.subr.bf16.mxu0 0
    %3382 = vmatpush1.bf16.msra.mxu0 0
    %3383 = vmatprep.subr.bf16.mxu0 0
    %3384 = vmatpush1.bf16.msra.mxu0 0
    %3385 = vmatprep.subr.bf16.mxu0 0
    %3386 = vmatpush1.bf16.msra.mxu0 0
    %3387 = vmatprep.subr.bf16.mxu0 0
    %3388 = vmatpush1.bf16.msra.mxu0 0
    %3389 = vmatprep.subr.bf16.mxu0 0
    %3390 = vmatpush1.bf16.msra.mxu0 0
    %3391 = vmatprep.subr.bf16.mxu0 0
    %3392 = vmatpush1.bf16.msra.mxu0 0
    %3393 = vmatprep.subr.bf16.mxu0 0
    %3394 = vmatpush1.bf16.msra.mxu0 0
    %3395 = vmatprep.subr.bf16.mxu0 0
    %3396 = vmatpush1.bf16.msra.mxu0 0
    %3397 = vmatprep.subr.bf16.mxu0 0
    %3398 = vmatpush1.bf16.msra.mxu0 0
    %3399 = vmatprep.mubr.bf16.mxu0 0
    %3400 = vmatmul.mubr.bf16.gmra.mrb[0].mxu0 %v3365
    %v3401 = vpop.f32.mrb[0].mxu0
    %v3402 = vadd.f32 0.0, %v3401
    %v3403 = vpop.f32.mrb[0].mxu0
    %v3404 = vpop.f32.mrb[0].mxu0
    %v3405 = vpop.f32.mrb[0].mxu0
    %3406 = vdwg.mxu0
    %v3407 = vadd.f32 %v3311, %v3402
    %v3408 = vld [vmem:[#allocation4] sm:$0x10]
    %s3409 = scalar_lea.vmem %s5, 144
    %v3410 = vld [vmem:[%s3409] sm:$0xf]
    %v3411 = vld [vmem:[%s3409 + $0x4] sm:$0xf]
    %v3412 = vld [vmem:[%s3409 + $0x8] sm:$0xf]
    %v3413 = vld [vmem:[%s3409 + $0xc] sm:$0xf]
    %v3414 = vld [vmem:[%s3409 + $0x10] sm:$0xf]
    %v3415 = vld [vmem:[%s3409 + $0x14] sm:$0xf]
    %v3416 = vld [vmem:[%s3409 + $0x18] sm:$0xf]
    %v3417 = vld [vmem:[%s3409 + $0x1c] sm:$0xf]
    %v3418 = vld [vmem:[%s3409 + $0x20] sm:$0xf]
    %v3419 = vld [vmem:[%s3409 + $0x24] sm:$0xf]
    %v3420 = vld [vmem:[%s3409 + $0x28] sm:$0xf]
    %v3421 = vld [vmem:[%s3409 + $0x2c] sm:$0xf]
    %v3423 = vrot.slane %v3408, 4
    %v3436 = vunpack.c.l.b16 %v3410
    %v3437 = vunpack.c.l.b16 %v3411
    %v3438 = vunpack.c.l.b16 %v3412
    %v3439 = vunpack.c.l.b16 %v3413
    %v3440 = vunpack.c.l.b16 %v3414
    %v3441 = vunpack.c.l.b16 %v3415
    %v3442 = vunpack.c.l.b16 %v3416
    %v3443 = vunpack.c.l.b16 %v3417
    %v3444 = vunpack.c.l.b16 %v3418
    %v3445 = vunpack.c.l.b16 %v3419
    %v3446 = vunpack.c.l.b16 %v3420
    %v3447 = vunpack.c.l.b16 %v3421
    %v3448 = vpack.c.b16 %v3437, %v3436
    %v3449 = vpack.c.b16 %v3439, %v3438
    %v3450 = vpack.c.b16 %v3441, %v3440
    %v3451 = vpack.c.b16 %v3443, %v3442
    %v3452 = vpack.c.b16 %v3445, %v3444
    %v3453 = vpack.c.b16 %v3447, %v3446
    %v3461 = vsel %vm1505, %v3423, 0
    %3463 = vmatprep.subr.bf16.mxu0 0
    %3464 = vmatpush1.bf16.msra.mxu0 %v3448
    %3465 = vmatprep.subr.bf16.mxu0 0
    %3466 = vmatpush1.bf16.msra.mxu0 %v3449
    %3467 = vmatprep.subr.bf16.mxu0 0
    %3468 = vmatpush1.bf16.msra.mxu0 %v3450
    %3469 = vmatprep.subr.bf16.mxu0 0
    %3470 = vmatpush1.bf16.msra.mxu0 %v3451
    %3471 = vmatprep.subr.bf16.mxu0 0
    %3472 = vmatpush1.bf16.msra.mxu0 %v3452
    %3473 = vmatprep.subr.bf16.mxu0 0
    %3474 = vmatpush1.bf16.msra.mxu0 %v3453
    %3475 = vmatprep.subr.bf16.mxu0 0
    %3476 = vmatpush1.bf16.msra.mxu0 0
    %3477 = vmatprep.subr.bf16.mxu0 0
    %3478 = vmatpush1.bf16.msra.mxu0 0
    %3479 = vmatprep.subr.bf16.mxu0 0
    %3480 = vmatpush1.bf16.msra.mxu0 0
    %3481 = vmatprep.subr.bf16.mxu0 0
    %3482 = vmatpush1.bf16.msra.mxu0 0
    %3483 = vmatprep.subr.bf16.mxu0 0
    %3484 = vmatpush1.bf16.msra.mxu0 0
    %3485 = vmatprep.subr.bf16.mxu0 0
    %3486 = vmatpush1.bf16.msra.mxu0 0
    %3487 = vmatprep.subr.bf16.mxu0 0
    %3488 = vmatpush1.bf16.msra.mxu0 0
    %3489 = vmatprep.subr.bf16.mxu0 0
    %3490 = vmatpush1.bf16.msra.mxu0 0
    %3491 = vmatprep.subr.bf16.mxu0 0
    %3492 = vmatpush1.bf16.msra.mxu0 0
    %3493 = vmatprep.subr.bf16.mxu0 0
    %3494 = vmatpush1.bf16.msra.mxu0 0
    %3495 = vmatprep.mubr.bf16.mxu0 0
    %3496 = vmatmul.mubr.bf16.gmra.mrb[0].mxu0 %v3461
    %v3497 = vpop.f32.mrb[0].mxu0
    %v3498 = vadd.f32 0.0, %v3497
    %v3499 = vpop.f32.mrb[0].mxu0
    %v3500 = vpop.f32.mrb[0].mxu0
    %v3501 = vpop.f32.mrb[0].mxu0
    %3502 = vdwg.mxu0
    %v3503 = vadd.f32 %v3407, %v3498
    %v3504 = vld [vmem:[#allocation4] sm:$0x20]
    %s3505 = scalar_lea.vmem %s5, 192
    %v3506 = vld [vmem:[%s3505] sm:$0xf]
    %v3507 = vld [vmem:[%s3505 + $0x4] sm:$0xf]
    %v3508 = vld [vmem:[%s3505 + $0x8] sm:$0xf]
    %v3509 = vld [vmem:[%s3505 + $0xc] sm:$0xf]
    %v3510 = vld [vmem:[%s3505 + $0x10] sm:$0xf]
    %v3511 = vld [vmem:[%s3505 + $0x14] sm:$0xf]
    %v3512 = vld [vmem:[%s3505 + $0x18] sm:$0xf]
    %v3513 = vld [vmem:[%s3505 + $0x1c] sm:$0xf]
    %v3514 = vld [vmem:[%s3505 + $0x20] sm:$0xf]
    %v3515 = vld [vmem:[%s3505 + $0x24] sm:$0xf]
    %v3516 = vld [vmem:[%s3505 + $0x28] sm:$0xf]
    %v3517 = vld [vmem:[%s3505 + $0x2c] sm:$0xf]
    %v3519 = vrot.slane %v3504, 5
    %v3532 = vunpack.c.l.b16 %v3506
    %v3533 = vunpack.c.l.b16 %v3507
    %v3534 = vunpack.c.l.b16 %v3508
    %v3535 = vunpack.c.l.b16 %v3509
    %v3536 = vunpack.c.l.b16 %v3510
    %v3537 = vunpack.c.l.b16 %v3511
    %v3538 = vunpack.c.l.b16 %v3512
    %v3539 = vunpack.c.l.b16 %v3513
    %v3540 = vunpack.c.l.b16 %v3514
    %v3541 = vunpack.c.l.b16 %v3515
    %v3542 = vunpack.c.l.b16 %v3516
    %v3543 = vunpack.c.l.b16 %v3517
    %v3544 = vpack.c.b16 %v3533, %v3532
    %v3545 = vpack.c.b16 %v3535, %v3534
    %v3546 = vpack.c.b16 %v3537, %v3536
    %v3547 = vpack.c.b16 %v3539, %v3538
    %v3548 = vpack.c.b16 %v3541, %v3540
    %v3549 = vpack.c.b16 %v3543, %v3542
    %v3557 = vsel %vm1505, %v3519, 0
    %3559 = vmatprep.subr.bf16.mxu0 0
    %3560 = vmatpush1.bf16.msra.mxu0 %v3544
    %3561 = vmatprep.subr.bf16.mxu0 0
    %3562 = vmatpush1.bf16.msra.mxu0 %v3545
    %3563 = vmatprep.subr.bf16.mxu0 0
    %3564 = vmatpush1.bf16.msra.mxu0 %v3546
    %3565 = vmatprep.subr.bf16.mxu0 0
    %3566 = vmatpush1.bf16.msra.mxu0 %v3547
    %3567 = vmatprep.subr.bf16.mxu0 0
    %3568 = vmatpush1.bf16.msra.mxu0 %v3548
    %3569 = vmatprep.subr.bf16.mxu0 0
    %3570 = vmatpush1.bf16.msra.mxu0 %v3549
    %3571 = vmatprep.subr.bf16.mxu0 0
    %3572 = vmatpush1.bf16.msra.mxu0 0
    %3573 = vmatprep.subr.bf16.mxu0 0
    %3574 = vmatpush1.bf16.msra.mxu0 0
    %3575 = vmatprep.subr.bf16.mxu0 0
    %3576 = vmatpush1.bf16.msra.mxu0 0
    %3577 = vmatprep.subr.bf16.mxu0 0
    %3578 = vmatpush1.bf16.msra.mxu0 0
    %3579 = vmatprep.subr.bf16.mxu0 0
    %3580 = vmatpush1.bf16.msra.mxu0 0
    %3581 = vmatprep.subr.bf16.mxu0 0
    %3582 = vmatpush1.bf16.msra.mxu0 0
    %3583 = vmatprep.subr.bf16.mxu0 0
    %3584 = vmatpush1.bf16.msra.mxu0 0
    %3585 = vmatprep.subr.bf16.mxu0 0
    %3586 = vmatpush1.bf16.msra.mxu0 0
    %3587 = vmatprep.subr.bf16.mxu0 0
    %3588 = vmatpush1.bf16.msra.mxu0 0
    %3589 = vmatprep.subr.bf16.mxu0 0
    %3590 = vmatpush1.bf16.msra.mxu0 0
    %3591 = vmatprep.mubr.bf16.mxu0 0
    %3592 = vmatmul.mubr.bf16.gmra.mrb[0].mxu0 %v3557
    %v3593 = vpop.f32.mrb[0].mxu0
    %v3594 = vadd.f32 0.0, %v3593
    %v3595 = vpop.f32.mrb[0].mxu0
    %v3596 = vpop.f32.mrb[0].mxu0
    %v3597 = vpop.f32.mrb[0].mxu0
    %3598 = vdwg.mxu0
    %v3599 = vadd.f32 %v3503, %v3594
    %v3600 = vld [vmem:[#allocation4] sm:$0x40]
    %s3601 = scalar_lea.vmem %s5, 240
    %v3602 = vld [vmem:[%s3601] sm:$0xf]
    %v3603 = vld [vmem:[%s3601 + $0x4] sm:$0xf]
    %v3604 = vld [vmem:[%s3601 + $0x8] sm:$0xf]
    %v3605 = vld [vmem:[%s3601 + $0xc] sm:$0xf]
    %v3606 = vld [vmem:[%s3601 + $0x10] sm:$0xf]
    %v3607 = vld [vmem:[%s3601 + $0x14] sm:$0xf]
    %v3608 = vld [vmem:[%s3601 + $0x18] sm:$0xf]
    %v3609 = vld [vmem:[%s3601 + $0x1c] sm:$0xf]
    %v3610 = vld [vmem:[%s3601 + $0x20] sm:$0xf]
    %v3611 = vld [vmem:[%s3601 + $0x24] sm:$0xf]
    %v3612 = vld [vmem:[%s3601 + $0x28] sm:$0xf]
    %v3613 = vld [vmem:[%s3601 + $0x2c] sm:$0xf]
    %v3615 = vrot.slane %v3600, 6
    %v3628 = vunpack.c.l.b16 %v3602
    %v3629 = vunpack.c.l.b16 %v3603
    %v3630 = vunpack.c.l.b16 %v3604
    %v3631 = vunpack.c.l.b16 %v3605
    %v3632 = vunpack.c.l.b16 %v3606
    %v3633 = vunpack.c.l.b16 %v3607
    %v3634 = vunpack.c.l.b16 %v3608
    %v3635 = vunpack.c.l.b16 %v3609
    %v3636 = vunpack.c.l.b16 %v3610
    %v3637 = vunpack.c.l.b16 %v3611
    %v3638 = vunpack.c.l.b16 %v3612
    %v3639 = vunpack.c.l.b16 %v3613
    %v3640 = vpack.c.b16 %v3629, %v3628
    %v3641 = vpack.c.b16 %v3631, %v3630
    %v3642 = vpack.c.b16 %v3633, %v3632
    %v3643 = vpack.c.b16 %v3635, %v3634
    %v3644 = vpack.c.b16 %v3637, %v3636
    %v3645 = vpack.c.b16 %v3639, %v3638
    %v3653 = vsel %vm1505, %v3615, 0
    %3655 = vmatprep.subr.bf16.mxu0 0
    %3656 = vmatpush1.bf16.msra.mxu0 %v3640
    %3657 = vmatprep.subr.bf16.mxu0 0
    %3658 = vmatpush1.bf16.msra.mxu0 %v3641
    %3659 = vmatprep.subr.bf16.mxu0 0
    %3660 = vmatpush1.bf16.msra.mxu0 %v3642
    %3661 = vmatprep.subr.bf16.mxu0 0
    %3662 = vmatpush1.bf16.msra.mxu0 %v3643
    %3663 = vmatprep.subr.bf16.mxu0 0
    %3664 = vmatpush1.bf16.msra.mxu0 %v3644
    %3665 = vmatprep.subr.bf16.mxu0 0
    %3666 = vmatpush1.bf16.msra.mxu0 %v3645
    %3667 = vmatprep.subr.bf16.mxu0 0
    %3668 = vmatpush1.bf16.msra.mxu0 0
    %3669 = vmatprep.subr.bf16.mxu0 0
    %3670 = vmatpush1.bf16.msra.mxu0 0
    %3671 = vmatprep.subr.bf16.mxu0 0
    %3672 = vmatpush1.bf16.msra.mxu0 0
    %3673 = vmatprep.subr.bf16.mxu0 0
    %3674 = vmatpush1.bf16.msra.mxu0 0
    %3675 = vmatprep.subr.bf16.mxu0 0
    %3676 = vmatpush1.bf16.msra.mxu0 0
    %3677 = vmatprep.subr.bf16.mxu0 0
    %3678 = vmatpush1.bf16.msra.mxu0 0
    %3679 = vmatprep.subr.bf16.mxu0 0
    %3680 = vmatpush1.bf16.msra.mxu0 0
    %3681 = vmatprep.subr.bf16.mxu0 0
    %3682 = vmatpush1.bf16.msra.mxu0 0
    %3683 = vmatprep.subr.bf16.mxu0 0
    %3684 = vmatpush1.bf16.msra.mxu0 0
    %3685 = vmatprep.subr.bf16.mxu0 0
    %3686 = vmatpush1.bf16.msra.mxu0 0
    %3687 = vmatprep.mubr.bf16.mxu0 0
    %3688 = vmatmul.mubr.bf16.gmra.mrb[0].mxu0 %v3653
    %v3689 = vpop.f32.mrb[0].mxu0
    %v3690 = vadd.f32 0.0, %v3689
    %v3691 = vpop.f32.mrb[0].mxu0
    %v3692 = vpop.f32.mrb[0].mxu0
    %v3693 = vpop.f32.mrb[0].mxu0
    %3694 = vdwg.mxu0
    %v3695 = vadd.f32 %v3599, %v3690
    %v3696 = vmax.f32 %v3695, 0.0
    %v3697 = vpack.c.bf16 %v3696, %v3696
    %v3698 = vld [vmem:[%s6] sm:$0xf]
    %v3699 = vld [vmem:[%s6 + $0x4] sm:$0xf]
    %v3700 = vld [vmem:[%s6 + $0x8] sm:$0xf]
    %v3701 = vld [vmem:[%s6 + $0xc] sm:$0xf]
    %v3702 = vld [vmem:[%s6 + $0x10] sm:$0xf]
    %v3703 = vld [vmem:[%s6 + $0x14] sm:$0xf]
    %v3704 = vld [vmem:[%s6 + $0x18] sm:$0xf]
    %v3705 = vld [vmem:[%s6 + $0x1c] sm:$0xf]
    %v3706 = vld [vmem:[%s7 + $0x15] ss:$0 sm:$0xff]
    %v3715 = vunpack.c.l.b16 %v3698
    %v3716 = vunpack.c.l.b16 %v3699
    %v3717 = vunpack.c.l.b16 %v3700
    %v3718 = vunpack.c.l.b16 %v3701
    %v3719 = vunpack.c.l.b16 %v3702
    %v3720 = vunpack.c.l.b16 %v3703
    %v3721 = vunpack.c.l.b16 %v3704
    %v3722 = vunpack.c.l.b16 %v3705
    %v3723 = vpack.c.b16 %v3716, %v3715
    %v3724 = vpack.c.b16 %v3718, %v3717
    %v3725 = vpack.c.b16 %v3720, %v3719
    %v3726 = vpack.c.b16 %v3722, %v3721
    %v3732 = vsel %vm815, %v3697, 0
    %3734 = vmatprep.subr.bf16.mxu0 0
    %3735 = vmatpush1.bf16.msra.mxu0 %v3723
    %3736 = vmatprep.subr.bf16.mxu0 0
    %3737 = vmatpush1.bf16.msra.mxu0 %v3724
    %3738 = vmatprep.subr.bf16.mxu0 0
    %3739 = vmatpush1.bf16.msra.mxu0 %v3725
    %3740 = vmatprep.subr.bf16.mxu0 0
    %3741 = vmatpush1.bf16.msra.mxu0 %v3726
    %3742 = vmatprep.subr.bf16.mxu0 0
    %3743 = vmatpush1.bf16.msra.mxu0 0
    %3744 = vmatprep.subr.bf16.mxu0 0
    %3745 = vmatpush1.bf16.msra.mxu0 0
    %3746 = vmatprep.subr.bf16.mxu0 0
    %3747 = vmatpush1.bf16.msra.mxu0 0
    %3748 = vmatprep.subr.bf16.mxu0 0
    %3749 = vmatpush1.bf16.msra.mxu0 0
    %3750 = vmatprep.subr.bf16.mxu0 0
    %3751 = vmatpush1.bf16.msra.mxu0 0
    %3752 = vmatprep.subr.bf16.mxu0 0
    %3753 = vmatpush1.bf16.msra.mxu0 0
    %3754 = vmatprep.subr.bf16.mxu0 0
    %3755 = vmatpush1.bf16.msra.mxu0 0
    %3756 = vmatprep.subr.bf16.mxu0 0
    %3757 = vmatpush1.bf16.msra.mxu0 0
    %3758 = vmatprep.subr.bf16.mxu0 0
    %3759 = vmatpush1.bf16.msra.mxu0 0
    %3760 = vmatprep.subr.bf16.mxu0 0
    %3761 = vmatpush1.bf16.msra.mxu0 0
    %3762 = vmatprep.subr.bf16.mxu0 0
    %3763 = vmatpush1.bf16.msra.mxu0 0
    %3764 = vmatprep.subr.bf16.mxu0 0
    %3765 = vmatpush1.bf16.msra.mxu0 0
    %3766 = vmatprep.mubr.bf16.mxu0 0
    %3767 = vmatmul.mubr.bf16.gmra.mrb[0].mxu0 %v3732
    %v3768 = vpop.f32.mrb[0].mxu0
    %v3769 = vadd.f32 %v3706, %v3768
    %v3770 = vpop.f32.mrb[0].mxu0
    %v3771 = vpop.f32.mrb[0].mxu0
    %v3772 = vpop.f32.mrb[0].mxu0
    %3773 = vdwg.mxu0
    %vm3774 = vcmask 9216
    %3775 = vst.msk [vmem:[#allocation6] sm:$0x3] %vm3774, %v3769
    // Predicated region
    $region34: #{deepnet_forward.1} parent=1 // pred_check
      _
    $region35: #{deepnet_forward.1} parent=1 // pred_check_branch
      %3777 = sbr.rel (0) target = $region37
    $region36: #{deepnet_forward.1} parent=1 // pred_region
      %s3779 = ssub.s32 32, 32
      %3780 = vsyncadd [#allocation7], %s3779
      %s3782 = sshll.u32 [#allocation6], 4
      %s3783 = int_to_ptr.vmem [resolvable:$true] %s3782
      %3785 = dma.vmem_to_hbm [thread:$0]  %s3783, 32, %s8, [#allocation7]
    $region37: #{deepnet_forward.1} parent=1 // pred_fallthru
      _
    // Predicated region
    $region38: #{deepnet_forward.1} parent=1 // pred_check
      _
    $region39: #{deepnet_forward.1} parent=1 // pred_check_branch
      %3787 = sbr.rel (0) target = $region41
    $region40: #{deepnet_forward.1} parent=1 // pred_region
      %3788 = dma.done [#allocation7], 32
    $region41: #{deepnet_forward.1} parent=1 // pred_fallthru
      _
    %3789 = vsyncpa [#allocation7], 1

</llo_original>
